<compile_context>
chip_gen: v6e
topology: v6e:2x2x1
jax: 0.10.0
libtpu: 0.0.40
codegen_flags: <defaults>
</compile_context>

<pallas_src>
import functools

import numpy as np
import jax
import jax.numpy as jnp
from jax.experimental import pallas as pl
from jax.experimental.pallas import tpu as pltpu


# ----------------------------------------------------------------------------
# Deterministic parameter construction (librosa-style Slaney mel filterbank,
# Hann window, DFT matrices) — pure numpy, no file I/O.
# ----------------------------------------------------------------------------
def _hz_to_mel(freqs):
    freqs = np.asarray(freqs, dtype=np.float64)
    f_min, f_sp = 0.0, 200.0 / 3
    mels = (freqs - f_min) / f_sp
    min_log_hz = 1000.0
    min_log_mel = (min_log_hz - f_min) / f_sp
    logstep = np.log(6.4) / 27.0
    mels = np.where(
        freqs >= min_log_hz,
        min_log_mel + np.log(np.maximum(freqs, min_log_hz) / min_log_hz) / logstep,
        mels,
    )
    return mels


def _mel_to_hz(mels):
    mels = np.asarray(mels, dtype=np.float64)
    f_min, f_sp = 0.0, 200.0 / 3
    freqs = f_min + f_sp * mels
    min_log_hz = 1000.0
    min_log_mel = (min_log_hz - f_min) / f_sp
    logstep = np.log(6.4) / 27.0
    freqs = np.where(
        mels >= min_log_mel,
        min_log_hz * np.exp(logstep * (mels - min_log_mel)),
        freqs,
    )
    return freqs


def librosa_mel_fn(sr, n_fft, n_mels, fmin, fmax):
    """Slaney-normalized mel filterbank, equivalent to librosa.filters.mel."""
    if fmax is None:
        fmax = float(sr) / 2
    n_freq = 1 + n_fft // 2
    fftfreqs = np.linspace(0.0, float(sr) / 2, n_freq)
    mel_f = _mel_to_hz(np.linspace(_hz_to_mel(fmin), _hz_to_mel(fmax), n_mels + 2))
    fdiff = np.diff(mel_f)
    ramps = np.subtract.outer(mel_f, fftfreqs)
    weights = np.zeros((n_mels, n_freq), dtype=np.float64)
    for i in range(n_mels):
        lower = -ramps[i] / fdiff[i]
        upper = ramps[i + 2] / fdiff[i + 1]
        weights[i] = np.maximum(0.0, np.minimum(lower, upper))
    enorm = 2.0 / (mel_f[2 : n_mels + 2] - mel_f[:n_mels])
    weights *= enorm[:, None]
    return weights.astype(np.float32)


def hann_window(win_length):
    # torch.hann_window(periodic=True) == 0.5 - 0.5*cos(2*pi*n/N)
    n = np.arange(win_length, dtype=np.float64)
    return (0.5 - 0.5 * np.cos(2.0 * np.pi * n / win_length)).astype(np.float32)


def dft_matrices(n_fft):
    """cos/sin matrices of shape (n_fft, n_fft//2+1) for the one-sided DFT."""
    n_freq = n_fft // 2 + 1
    n = np.arange(n_fft, dtype=np.float64)[:, None]
    k = np.arange(n_freq, dtype=np.float64)[None, :]
    ang = 2.0 * np.pi * n * k / n_fft
    return np.cos(ang).astype(np.float32), np.sin(ang).astype(np.float32)


def _round_up(x, m):
    return ((x + m - 1) // m) * m


# ----------------------------------------------------------------------------
# Pallas kernel: one (TILE_M, n_fft) frame tile -> (TILE_M, n_mel_pad) log-mel
# ----------------------------------------------------------------------------
def _audio2mel_kernel(frames_ref, csw_ref, melT_ref, out_ref, *, n_freq_k):
    # frames_ref: (TILE_M, n_fft)        bf16
    # csw_ref:    (n_fft, 2*K)           bf16   (window-folded [cos | sin])
    # melT_ref:   (K, n_mel_pad)         bf16
    # out_ref:    (TILE_M, n_mel_pad)    f32
    ri = jnp.dot(frames_ref[...], csw_ref[...],
                 preferred_element_type=jnp.float32)          # (TM, 2K) f32
    sq = ri * ri
    mag = jnp.sqrt(sq[:, :n_freq_k] + sq[:, n_freq_k:])       # (TM, K)  f32
    mel = jnp.dot(mag.astype(jnp.bfloat16), melT_ref[...],
                  preferred_element_type=jnp.float32)         # (TM, n_mel_pad)
    out_ref[...] = jnp.log10(jnp.maximum(mel, 1e-5))


class Audio2MelPallas:
    def __init__(self, n_fft=1024, hop_length=256, win_length=1024,
                 sampling_rate=24000, n_mel_channels=80, mel_fmin=0.0,
                 mel_fmax=None, tile_m=256):
        assert win_length == n_fft, "kernel assumes win_length == n_fft (as in defaults)"
        self.n_fft = n_fft
        self.hop_length = hop_length
        self.win_length = win_length
        self.sampling_rate = sampling_rate
        self.n_mel_channels = n_mel_channels
        self.mel_fmin = mel_fmin
        self.mel_fmax = mel_fmax
        self.tile_m = tile_m

        n_freq_full = n_fft // 2 + 1
        cos_full, sin_full = dft_matrices(n_fft)                       # (n_fft, n_freq_full)
        mel_full = librosa_mel_fn(sampling_rate, n_fft, n_mel_channels,
                                  mel_fmin, mel_fmax)                  # (n_mel, n_freq_full)

        # Truncate (or zero-pad) the frequency axis to a lane-aligned K that
        # covers every bin with nonzero mel weight. For the default
        # mel_fmax=None the Nyquist bin has exactly zero weight -> K = 512,
        # which is lossless and drops the ragged 513th column.
        nz = np.nonzero(mel_full.sum(axis=0) > 0.0)[0]
        last = int(nz[-1]) if nz.size else 0
        K = _round_up(last + 1, 128)
        self.n_freq_k = K

        def fit_cols(a, k):
            out = np.zeros((a.shape[0], k), dtype=np.float32)
            c = min(k, a.shape[1])
            out[:, :c] = a[:, :c]
            return out

        # Fold the Hann window into the DFT weights and concatenate cos|sin.
        win = hann_window(win_length)                                  # (n_fft,)
        cos_w = win[:, None] * fit_cols(cos_full, K)
        sin_w = win[:, None] * fit_cols(sin_full, K)
        csw = np.concatenate([cos_w, sin_w], axis=1)                   # (n_fft, 2K)
        self.csw = jnp.asarray(csw, dtype=jnp.bfloat16)

        # Mel projection, transposed and zero-padded to a 128-lane output.
        n_mel_pad = _round_up(n_mel_channels, 128)
        self.n_mel_pad = n_mel_pad
        melT = np.zeros((K, n_mel_pad), dtype=np.float32)
        melT[:, :n_mel_channels] = fit_cols(mel_full, K).T
        self.melT = jnp.asarray(melT, dtype=jnp.bfloat16)

    def __call__(self, audio):
        # audio: (B, 1, T) float32, matching the PyTorch module's NCW input.
        n_fft, hop = self.n_fft, self.hop_length
        p = (n_fft - hop) // 2
        a = jnp.pad(audio, ((0, 0), (0, 0), (p, p)), mode="reflect")[:, 0, :]  # (B, T+2p)
        B, T_p = a.shape
        n_frames = 1 + (T_p - n_fft) // hop

        # Framing (wrapper-side gather), in bf16 to halve the duplicated
        # frame-stream HBM traffic. The window itself is folded into csw.
        # TODO(synk): for very long audio, build frame tiles in-kernel from
        # overlapping pl.ds slices of a contiguous audio chunk instead of
        # materializing the 4x-duplicated gather in HBM.
        idx = jnp.arange(n_frames)[:, None] * hop + jnp.arange(n_fft)[None, :]
        frames = jnp.take(a.astype(jnp.bfloat16), idx, axis=1)         # (B, nF, n_fft)

        # Flatten (B, n_frames) -> M and pad to a multiple of the M tile.
        M = B * n_frames
        frames = frames.reshape(M, n_fft)
        tile_m = min(self.tile_m, _round_up(M, 8))
        Mp = _round_up(M, tile_m)
        if Mp != M:
            frames = jnp.pad(frames, ((0, Mp - M), (0, 0)))

        K = self.n_freq_k
        n_mel_pad = self.n_mel_pad

        out = pl.pallas_call(
            functools.partial(_audio2mel_kernel, n_freq_k=K),
            out_shape=jax.ShapeDtypeStruct((Mp, n_mel_pad), jnp.float32),
            grid_spec=pltpu.PrefetchScalarGridSpec(
                num_scalar_prefetch=0,
                grid=(Mp // tile_m,),
                in_specs=[
                    pl.BlockSpec((tile_m, n_fft), lambda m: (m, 0)),
                    pl.BlockSpec((n_fft, 2 * K), lambda m: (0, 0)),
                    pl.BlockSpec((K, n_mel_pad), lambda m: (0, 0)),
                ],
                out_specs=pl.BlockSpec((tile_m, n_mel_pad), lambda m: (m, 0)),
            ),
            compiler_params=pltpu.CompilerParams(
                dimension_semantics=("parallel",),
            ),
        )(frames, self.csw, self.melT)

        # Drop padded rows / mel lanes, restore torch layout (B, n_mel, n_frames).
        out = out[:M, :self.n_mel_channels].reshape(B, n_frames, self.n_mel_channels)
        return jnp.transpose(out, (0, 2, 1))


# ----------------------------------------------------------------------------
# Pure-JAX full-precision reference (full 513-bin DFT, f32 HIGHEST) for checks.
# ----------------------------------------------------------------------------
def reference_audio2mel(m: Audio2MelPallas, audio):
    n_fft, hop = m.n_fft, m.hop_length
    p = (n_fft - hop) // 2
    a = jnp.pad(audio, ((0, 0), (0, 0), (p, p)), mode="reflect")[:, 0, :]
    T_p = a.shape[1]
    n_frames = 1 + (T_p - n_fft) // hop
    idx = jnp.arange(n_frames)[:, None] * hop + jnp.arange(n_fft)[None, :]
    win = jnp.asarray(hann_window(m.win_length))
    cos_m, sin_m = dft_matrices(n_fft)
    mel_b = jnp.asarray(librosa_mel_fn(m.sampling_rate, n_fft, m.n_mel_channels,
                                       m.mel_fmin, m.mel_fmax))
    frames = jnp.take(a, idx, axis=1) * win[None, None, :]
    real = jnp.einsum("bfn,nk->bfk", frames, jnp.asarray(cos_m),
                      precision=jax.lax.Precision.HIGHEST)
    imag = jnp.einsum("bfn,nk->bfk", frames, jnp.asarray(sin_m),
                      precision=jax.lax.Precision.HIGHEST)
    mag = jnp.sqrt(real * real + imag * imag)
    mel = jnp.einsum("bfk,mk->bmf", mag, mel_b,
                     precision=jax.lax.Precision.HIGHEST)
    return jnp.log10(jnp.maximum(mel, 1e-5))


if __name__ == "__main__":
    B, T = 2, 3072   # padded length 3840 -> 12 STFT frames per batch, M = 24
    key = jax.random.PRNGKey(0)
    audio = jax.random.normal(key, (B, 1, T), dtype=jnp.float32) * 0.1

    # tile_m=16 keeps the grid multi-step (and exercises the M padding path)
    # at this tiny test size; real workloads use the default tile_m=256.
    model = Audio2MelPallas(tile_m=16)
    out = jax.block_until_ready(model(audio))

    p = (model.n_fft - model.hop_length) // 2
    n_frames = 1 + (T + 2 * p - model.n_fft) // model.hop_length
    assert out.shape == (B, model.n_mel_channels, n_frames), out.shape

    ref = jax.block_until_ready(reference_audio2mel(model, audio))
    # bf16 matmul operands with f32 accumulation sit well inside this band.
    np.testing.assert_allclose(np.asarray(out), np.asarray(ref), rtol=2e-2, atol=3e-2)

    print("KERNEL_OK")
</pallas_src>

<mosaic_0001>
module attributes {stable_mosaic.version = 11 : i64} {
  func.func @_audio2mel_kernel(%arg0: i32, %arg1: memref<16x1024xbf16, #tpu.memory_space<vmem>>, %arg2: memref<1024x1024xbf16, #tpu.memory_space<vmem>>, %arg3: memref<512x128xbf16, #tpu.memory_space<vmem>>, %arg4: memref<16x128xf32, #tpu.memory_space<vmem>>) attributes {dimension_semantics = [#tpu.dimension_semantics<parallel>], iteration_bounds = array<i64: 2>, scalar_prefetch = 0 : i64, scratch_operands = 0 : i64, tpu.core_type = #tpu.core_type<tc>, window_params = [{transform_indices = @transform_0, window_bounds = array<i64: 16, 1024>}, {pipeline_mode = #tpu.pipeline_mode<synchronous>, transform_indices = @transform_1, window_bounds = array<i64: 1024, 1024>}, {pipeline_mode = #tpu.pipeline_mode<synchronous>, transform_indices = @transform_2, window_bounds = array<i64: 512, 128>}, {transform_indices = @transform_3, window_bounds = array<i64: 16, 128>}]} {
    %c0 = arith.constant 0 : index
    %c0_0 = arith.constant 0 : index
    %0 = vector.load %arg1[%c0, %c0_0] : memref<16x1024xbf16, #tpu.memory_space<vmem>>, vector<16x1024xbf16>
    %c0_1 = arith.constant 0 : index
    %c0_2 = arith.constant 0 : index
    %1 = vector.load %arg2[%c0_1, %c0_2] : memref<1024x1024xbf16, #tpu.memory_space<vmem>>, vector<1024x1024xbf16>
    %cst = arith.constant dense<0.000000e+00> : vector<16x1024xf32>
    %2 = tpu.matmul %0, %1, %cst {dimension_numbers = #tpu.dot_dimension_numbers<[1], [0], [0], [1], [0, 0, 1, 1], [], []>} : vector<16x1024xbf16>, vector<1024x1024xbf16>, vector<16x1024xf32> -> vector<16x1024xf32>
    %3 = arith.mulf %2, %2 : vector<16x1024xf32>
    %4 = vector.extract_strided_slice %3 {offsets = [0, 0], sizes = [16, 512], strides = [1, 1]} : vector<16x1024xf32> to vector<16x512xf32>
    %5 = vector.extract_strided_slice %3 {offsets = [0, 512], sizes = [16, 512], strides = [1, 1]} : vector<16x1024xf32> to vector<16x512xf32>
    %6 = arith.addf %4, %5 : vector<16x512xf32>
    %7 = math.sqrt %6 : vector<16x512xf32>
    %8 = arith.truncf %7 : vector<16x512xf32> to vector<16x512xbf16>
    %c0_3 = arith.constant 0 : index
    %c0_4 = arith.constant 0 : index
    %9 = vector.load %arg3[%c0_3, %c0_4] : memref<512x128xbf16, #tpu.memory_space<vmem>>, vector<512x128xbf16>
    %cst_5 = arith.constant dense<0.000000e+00> : vector<16x128xf32>
    %10 = tpu.matmul %8, %9, %cst_5 {dimension_numbers = #tpu.dot_dimension_numbers<[1], [0], [0], [1], [0, 0, 1, 1], [], []>} : vector<16x512xbf16>, vector<512x128xbf16>, vector<16x128xf32> -> vector<16x128xf32>
    %cst_6 = arith.constant 9.99999974E-6 : f32
    %11 = vector.broadcast %cst_6 : f32 to vector<16x128xf32>
    %12 = arith.maximumf %10, %11 : vector<16x128xf32>
    %13 = math.log %12 : vector<16x128xf32>
    %cst_7 = arith.constant 0.434294492 : f32
    %14 = vector.broadcast %cst_7 : f32 to vector<16x128xf32>
    %15 = arith.mulf %13, %14 : vector<16x128xf32>
    %c0_8 = arith.constant 0 : index
    %c0_9 = arith.constant 0 : index
    %16 = vector.load %arg4[%c0_8, %c0_9] : memref<16x128xf32, #tpu.memory_space<vmem>>, vector<16x128xf32>
    tpu.vector_store %arg4[%c0_8, %c0_9], %15 {strides = array<i32>} : memref<16x128xf32, #tpu.memory_space<vmem>>, vector<16x128xf32>,
    return
  }
  func.func @transform_0(%arg0: i32) -> (i32, i32) {
    %c0_i32 = arith.constant 0 : i32
    %c0_i32_0 = arith.constant 0 : i32
    return %arg0, %c0_i32 : i32, i32
  }
  func.func @transform_1(%arg0: i32) -> (i32, i32) {
    %c0_i32 = arith.constant 0 : i32
    %c0_i32_0 = arith.constant 0 : i32
    %c0_i32_1 = arith.constant 0 : i32
    return %c0_i32, %c0_i32_0 : i32, i32
  }
  func.func @transform_2(%arg0: i32) -> (i32, i32) {
    %c0_i32 = arith.constant 0 : i32
    %c0_i32_0 = arith.constant 0 : i32
    %c0_i32_1 = arith.constant 0 : i32
    return %c0_i32, %c0_i32_0 : i32, i32
  }
  func.func @transform_3(%arg0: i32) -> (i32, i32) {
    %c0_i32 = arith.constant 0 : i32
    %c0_i32_0 = arith.constant 0 : i32
    return %arg0, %c0_i32 : i32, i32
  }
}

</mosaic_0001>

<llo_original>
// kernel: tpu_custom_call.1
$region0: #{tpu_custom_call.1}
  #allocation0 [shape = 'u32[]', space=smem, size = 0x4, offset = 0x4, fixed_abs, tag = 'smem constant byte address 0x4 - core index']
  #allocation1 [shape = 'u32[144,128]{1,0:T(1,128)}', space=vmem, size = 0x12000, scoped, tag = 'internal scratch']
  %s0 = inlined_call_operand.hbm [shape: bf16[32,1024], index: 0, kind: input, shape index: {}]
  %s1 = inlined_call_operand.hbm [shape: bf16[1024,1024], index: 1, kind: input, shape index: {}]
  %s2 = inlined_call_operand.hbm [shape: bf16[512,128], index: 2, kind: input, shape index: {}]
  %s3 = inlined_call_operand.hbm [shape: f32[32,128], index: 3, kind: output, shape index: {}]
  %s4 = sld [smem:[#allocation0]]
  $region57: #{tpu_custom_call.1} parent=0
    _
  %s6 = ssub.s32 1, %s4
  %s7 = scalar_select 0, %s6, %s4
  $region1: #{tpu_custom_call.1} parent=0
    #allocation2 [shape = 'u8[65536]{0}', space=vmem, size = 0x10000, scoped, tag = 'input window, operand 0']
    #allocation3 [shape = 's32[2]{0}', space=sflag, size = 0x8, scoped, tag = 'scoped memory for tpu_custom_call.1']
    #allocation4 [shape = 's32[2]{0}', space=sflag, size = 0x8, scoped, tag = 'scoped memory for tpu_custom_call.1']
    #allocation5 [shape = 'u8[2097152]{0}', space=vmem, size = 0x200000, scoped, tag = 'input window, operand 1, single buffered']
    #allocation6 [shape = 's32[1]{0}', space=sflag, size = 0x4, scoped, tag = 'scoped memory for tpu_custom_call.1']
    #allocation7 [shape = 'u8[131072]{0}', space=vmem, size = 0x20000, scoped, tag = 'input window, operand 2, single buffered']
    #allocation8 [shape = 'u8[16384]{0}', space=vmem, size = 0x4000, scoped, tag = 'output window, operand 0']
    %8 = vsyncpa [#allocation3], 0
    %s9 = scalar_lea.sflag [#allocation3], 1
    %10 = vsyncpa %s9, 0
    %11 = vsyncpa [#allocation6], 0
    %12 = vsyncpa [#allocation4], 0
    %s13 = scalar_lea.sflag [#allocation4], 1
    %14 = vsyncpa %s13, 0
    loop: start=0, step=1, limit=4
    $region2: #{tpu_custom_call.1} parent=1 // loop_pre_header
      _
    $region3: #{tpu_custom_call.1} parent=1 // loop_header
      %s16 = sphi 0, %s20
      %p17 = scmp.ge.s32.totalorder %s16, 4
      %s26 = sphi 0, %s28
      %s29 = sphi 0, %s26
      %s30 = sphi 0, %s29
      %s46 = sphi 0, %s30
      %s50 = sphi 0, %s50
      %s52 = sphi 0, %s50
      %s53 = sphi 0, %s52
      %s67 = sphi 0, %s53
      %s71 = sphi 0, %s71
      %s73 = sphi 0, %s71
      %s74 = sphi 0, %s73
      %s88 = sphi 0, %s74
      %s94 = sphi 0, %s96
      %s97 = sphi 0, %s94
      %s98 = sphi 0, %s97
      %s114 = sphi 0, %s98
    $region4: #{tpu_custom_call.1} parent=1 // loop_header_branch
      %19 = sbr.rel (%p17) target = $region8
    $region5: #{tpu_custom_call.1} parent=1 // loop_body
      %s21 = ssub.s32 %s16, 1
      %s22 = ssub.s32 %s16, 2
      %s23 = sadd.s32 %s16, 1
      %s24 = ssub.s32 %s16, %s23
      %p25 = scmp.eq.s32.totalorder %s24, 0
      %s27 = sadd.s32 %s26, 1
      %s28 = scalar_select %p25, %s26, %s27
      %p31 = pneg %p25
      %p32 = scmp.eq.s32.totalorder %s16, 1
      %p33 = por %p31, %p32
      %p34 = scmp.ne.s32.totalorder %s26, %s29
      %p35 = scmp.eq.s32.totalorder %s16, 0
      %p36 = por %p34, %p35
      %p37 = scmp.ne.s32.totalorder %s26, %s29
      %p38 = scmp.eq.s32.totalorder %s21, 1
      %p39 = por %p37, %p38
      %p40 = scmp.ne.s32.totalorder %s29, %s30
      %p41 = scmp.eq.s32.totalorder %s21, 0
      %p42 = por %p40, %p41
      %p43 = scmp.ne.s32.totalorder %s29, %s30
      %p44 = scmp.eq.s32.totalorder %s22, 1
      %p45 = por %p43, %p44
      %p47 = scmp.ne.s32.totalorder %s30, %s46
      %p48 = scmp.eq.s32.totalorder %s22, 0
      %p49 = por %p47, %p48
      %s51 = sadd.s32 %s50, 1
      %p54 = scmp.eq.s32.totalorder %s16, 1
      %p55 = scmp.ne.s32.totalorder %s50, %s52
      %p56 = scmp.eq.s32.totalorder %s16, 0
      %p57 = por %p55, %p56
      %p58 = scmp.ne.s32.totalorder %s50, %s52
      %p59 = scmp.eq.s32.totalorder %s21, 1
      %p60 = por %p58, %p59
      %p61 = scmp.ne.s32.totalorder %s52, %s53
      %p62 = scmp.eq.s32.totalorder %s21, 0
      %p63 = por %p61, %p62
      %p64 = scmp.ne.s32.totalorder %s52, %s53
      %p65 = scmp.eq.s32.totalorder %s22, 1
      %p66 = por %p64, %p65
      %p68 = scmp.ne.s32.totalorder %s53, %s67
      %p69 = scmp.eq.s32.totalorder %s22, 0
      %p70 = por %p68, %p69
      %s72 = sadd.s32 %s71, 1
      %p75 = scmp.eq.s32.totalorder %s16, 1
      %p76 = scmp.ne.s32.totalorder %s71, %s73
      %p77 = scmp.eq.s32.totalorder %s16, 0
      %p78 = por %p76, %p77
      %p79 = scmp.ne.s32.totalorder %s71, %s73
      %p80 = scmp.eq.s32.totalorder %s21, 1
      %p81 = por %p79, %p80
      %p82 = scmp.ne.s32.totalorder %s73, %s74
      %p83 = scmp.eq.s32.totalorder %s21, 0
      %p84 = por %p82, %p83
      %p85 = scmp.ne.s32.totalorder %s73, %s74
      %p86 = scmp.eq.s32.totalorder %s22, 1
      %p87 = por %p85, %p86
      %p89 = scmp.ne.s32.totalorder %s74, %s88
      %p90 = scmp.eq.s32.totalorder %s22, 0
      %p91 = por %p89, %p90
      %s92 = ssub.s32 %s16, %s23
      %p93 = scmp.eq.s32.totalorder %s92, 0
      %s95 = sadd.s32 %s94, 1
      %s96 = scalar_select %p93, %s94, %s95
      %p99 = pneg %p93
      %p100 = scmp.eq.s32.totalorder %s16, 1
      %p101 = por %p99, %p100
      %p102 = scmp.ne.s32.totalorder %s94, %s97
      %p103 = scmp.eq.s32.totalorder %s16, 0
      %p104 = por %p102, %p103
      %p105 = scmp.ne.s32.totalorder %s94, %s97
      %p106 = scmp.eq.s32.totalorder %s21, 1
      %p107 = por %p105, %p106
      %p108 = scmp.ne.s32.totalorder %s97, %s98
      %p109 = scmp.eq.s32.totalorder %s21, 0
      %p110 = por %p108, %p109
      %p111 = scmp.ne.s32.totalorder %s97, %s98
      %p112 = scmp.eq.s32.totalorder %s22, 1
      %p113 = por %p111, %p112
      %p115 = scmp.ne.s32.totalorder %s98, %s114
      %p116 = scmp.eq.s32.totalorder %s22, 0
      %p117 = por %p115, %p116
      %p118 = scmp.le.s32.totalorder 1, %s16
      %p119 = scmp.lt.s32.totalorder %s16, 3
      %p120 = pnand %p118, %p119
      %p121 = pneg %p120
      // Predicated region
      $region9: #{tpu_custom_call.1} parent=5 // pred_check
        _
      $region10: #{tpu_custom_call.1} parent=5 // pred_check_branch
        %123 = sbr.rel (%p120) target = $region12
      $region11: #{tpu_custom_call.1} parent=5 // pred_region
        %s124 = ssub.s32 %s16, 1
        // Predicated region
        $region13: #{tpu_custom_call.1} parent=11 // pred_check
          %p125 = pneg %p63
        $region14: #{tpu_custom_call.1} parent=11 // pred_check_branch
          %127 = sbr.rel (%p125) target = $region16
        $region15: #{tpu_custom_call.1} parent=11 // pred_region
          %s129 = ssub.s32 65536, 65536
          %130 = vsyncadd [#allocation6], %s129
          %s131 = sshll.u32 [#allocation5], 4
          %s132 = int_to_ptr.vmem [resolvable:$true] %s131
          %137 = dma.hbm_to_vmem [thread:$0]  %s1, 65536, %s132, [#allocation6], 512, 512, 32
        $region16: #{tpu_custom_call.1} parent=11 // pred_fallthru
          _
        // Predicated region
        $region17: #{tpu_custom_call.1} parent=11 // pred_check
          %p138 = pneg %p84
        $region18: #{tpu_custom_call.1} parent=11 // pred_check_branch
          %140 = sbr.rel (%p138) target = $region20
        $region19: #{tpu_custom_call.1} parent=11 // pred_region
          %s142 = ssub.s32 4096, 4096
          %143 = vsyncadd [#allocation6], %s142
          %s144 = sshll.u32 [#allocation7], 4
          %s145 = int_to_ptr.vmem [resolvable:$true] %s144
          %150 = dma.hbm_to_vmem [thread:$0]  %s2, 4096, %s145, [#allocation6], 64, 64, 4
        $region20: #{tpu_custom_call.1} parent=11 // pred_fallthru
          _
      $region12: #{tpu_custom_call.1} parent=5 // pred_fallthru
        _
      %p151 = scmp.lt.s32.totalorder %s16, 2
      // Predicated region
      $region21: #{tpu_custom_call.1} parent=5 // pred_check
        %p152 = pneg %p151
      $region22: #{tpu_custom_call.1} parent=5 // pred_check_branch
        %154 = sbr.rel (%p152) target = $region24
      $region23: #{tpu_custom_call.1} parent=5 // pred_region
        // Predicated region
        $region25: #{tpu_custom_call.1} parent=23 // pred_check
          %p155 = pneg %p36
        $region26: #{tpu_custom_call.1} parent=23 // pred_check_branch
          %157 = sbr.rel (%p155) target = $region28
        $region27: #{tpu_custom_call.1} parent=23 // pred_region
          %s158 = sand.u32 %s26, 1
          %s159 = scalar_lea.sflag [#allocation3], %s158
          %s160 = sand.u32 %s26, 1
          %s161 = smul.addr %s160, 64
          %s162 = scalar_lea.vmem [#allocation2], %s161
          %s163 = smul.u32 2, %s16
          %s165 = ssub.s32 1024, 1024
          %166 = vsyncadd %s159, %s165
          %s167 = smul.addr %s163, 8
          %s168 = smul.addr %s167, 64
          %s169 = scalar_lea.hbm %s0, %s168
          %s170 = sshll.u32 %s162, 4
          %s171 = int_to_ptr.vmem [resolvable:$true] %s170
          %176 = dma.hbm_to_vmem [thread:$0]  %s169, 1024, %s171, %s159, 512, 512, 32
        $region28: #{tpu_custom_call.1} parent=23 // pred_fallthru
          _
      $region24: #{tpu_custom_call.1} parent=5 // pred_fallthru
        _
      %p177 = scmp.le.s32.totalorder 1, %s16
      %p178 = scmp.lt.s32.totalorder %s16, 3
      %p179 = pnand %p177, %p178
      %p180 = pneg %p179
      // Predicated region
      $region29: #{tpu_custom_call.1} parent=5 // pred_check
        _
      $region30: #{tpu_custom_call.1} parent=5 // pred_check_branch
        %182 = sbr.rel (%p179) target = $region32
      $region31: #{tpu_custom_call.1} parent=5 // pred_region
        %s183 = ssub.s32 %s16, 1
        %s184 = sand.u32 %s29, 1
        %s185 = scalar_lea.sflag [#allocation3], %s184
        %s186 = sand.u32 %s29, 1
        %s187 = smul.addr %s186, 64
        %s188 = scalar_lea.vmem [#allocation2], %s187
        // Predicated region
        $region33: #{tpu_custom_call.1} parent=31 // pred_check
          %p189 = pneg %p42
        $region34: #{tpu_custom_call.1} parent=31 // pred_check_branch
          %191 = sbr.rel (%p189) target = $region36
        $region35: #{tpu_custom_call.1} parent=31 // pred_region
          %192 = dma.done %s185, 1024
        $region36: #{tpu_custom_call.1} parent=31 // pred_fallthru
          _
        // Predicated region
        $region37: #{tpu_custom_call.1} parent=31 // pred_check
          %p193 = pneg %p63
        $region38: #{tpu_custom_call.1} parent=31 // pred_check_branch
          %195 = sbr.rel (%p193) target = $region40
        $region39: #{tpu_custom_call.1} parent=31 // pred_region
          %196 = dma.done [#allocation6], 65536
        $region40: #{tpu_custom_call.1} parent=31 // pred_fallthru
          _
        // Predicated region
        $region41: #{tpu_custom_call.1} parent=31 // pred_check
          %p197 = pneg %p84
        $region42: #{tpu_custom_call.1} parent=31 // pred_check_branch
          %199 = sbr.rel (%p197) target = $region44
        $region43: #{tpu_custom_call.1} parent=31 // pred_region
          %200 = dma.done [#allocation6], 4096
        $region44: #{tpu_custom_call.1} parent=31 // pred_fallthru
          _
        %s201 = sand.u32 %s29, 1
        %s202 = scalar_lea.sflag [#allocation3], %s201
        %s203 = sand.u32 %s29, 1
        %s204 = smul.addr %s203, 64
        %s205 = scalar_lea.vmem [#allocation2], %s204
        %p206 = pneg %p42
        %p207 = pneg %p39
        %p208 = pneg %p63
        %p209 = pneg %p60
        %p210 = pneg %p84
        %p211 = pneg %p81
        %p212 = pneg %p110
        %p213 = pneg %p107
        %s214 = sand.u32 %s97, 1
        %s215 = scalar_lea.sflag [#allocation4], %s214
        %s216 = sand.u32 %s97, 1
        %s217 = smul.addr %s216, 16
        %s218 = scalar_lea.vmem [#allocation8], %s217
        %s219 = smul.u32 2, %s21
        %s220 = smul.u32 2, %s21
        %v222 = vld [vmem:[%s188] sm:$0xff]
        %v223 = vld [vmem:[%s188 + $0x8] sm:$0xff]
        %v224 = vld [vmem:[%s188 + $0x10] sm:$0xff]
        %v225 = vld [vmem:[%s188 + $0x18] sm:$0xff]
        %v226 = vld [vmem:[%s188 + $0x20] sm:$0xff]
        %v227 = vld [vmem:[%s188 + $0x28] sm:$0xff]
        %v228 = vld [vmem:[%s188 + $0x30] sm:$0xff]
        %v229 = vld [vmem:[%s188 + $0x38] sm:$0xff]
        %v230 = vld [vmem:[#allocation5] sm:$0xff]
        %v231 = vld [vmem:[#allocation5 + $0x8] sm:$0xff]
        %v232 = vld [vmem:[#allocation5 + $0x10] sm:$0xff]
        %v233 = vld [vmem:[#allocation5 + $0x18] sm:$0xff]
        %v234 = vld [vmem:[#allocation5 + $0x20] sm:$0xff]
        %v235 = vld [vmem:[#allocation5 + $0x28] sm:$0xff]
        %v236 = vld [vmem:[#allocation5 + $0x30] sm:$0xff]
        %v237 = vld [vmem:[#allocation5 + $0x38] sm:$0xff]
        %v238 = vld [vmem:[#allocation5 + $0x40] sm:$0xff]
        %v239 = vld [vmem:[#allocation5 + $0x48] sm:$0xff]
        %v240 = vld [vmem:[#allocation5 + $0x50] sm:$0xff]
        %v241 = vld [vmem:[#allocation5 + $0x58] sm:$0xff]
        %v242 = vld [vmem:[#allocation5 + $0x60] sm:$0xff]
        %v243 = vld [vmem:[#allocation5 + $0x68] sm:$0xff]
        %v244 = vld [vmem:[#allocation5 + $0x70] sm:$0xff]
        %v245 = vld [vmem:[#allocation5 + $0x78] sm:$0xff]
        %v246 = vld [vmem:[#allocation5 + $0x80] sm:$0xff]
        %v247 = vld [vmem:[#allocation5 + $0x88] sm:$0xff]
        %v248 = vld [vmem:[#allocation5 + $0x90] sm:$0xff]
        %v249 = vld [vmem:[#allocation5 + $0x98] sm:$0xff]
        %v250 = vld [vmem:[#allocation5 + $0xa0] sm:$0xff]
        %v251 = vld [vmem:[#allocation5 + $0xa8] sm:$0xff]
        %v252 = vld [vmem:[#allocation5 + $0xb0] sm:$0xff]
        %v253 = vld [vmem:[#allocation5 + $0xb8] sm:$0xff]
        %v254 = vld [vmem:[#allocation5 + $0xc0] sm:$0xff]
        %v255 = vld [vmem:[#allocation5 + $0xc8] sm:$0xff]
        %v256 = vld [vmem:[#allocation5 + $0xd0] sm:$0xff]
        %v257 = vld [vmem:[#allocation5 + $0xd8] sm:$0xff]
        %v258 = vld [vmem:[#allocation5 + $0xe0] sm:$0xff]
        %v259 = vld [vmem:[#allocation5 + $0xe8] sm:$0xff]
        %v260 = vld [vmem:[#allocation5 + $0xf0] sm:$0xff]
        %v261 = vld [vmem:[#allocation5 + $0xf8] sm:$0xff]
        %v262 = vld [vmem:[#allocation5 + $0x100] sm:$0xff]
        %v263 = vld [vmem:[#allocation5 + $0x108] sm:$0xff]
        %v264 = vld [vmem:[#allocation5 + $0x110] sm:$0xff]
        %v265 = vld [vmem:[#allocation5 + $0x118] sm:$0xff]
        %v266 = vld [vmem:[#allocation5 + $0x120] sm:$0xff]
        %v267 = vld [vmem:[#allocation5 + $0x128] sm:$0xff]
        %v268 = vld [vmem:[#allocation5 + $0x130] sm:$0xff]
        %v269 = vld [vmem:[#allocation5 + $0x138] sm:$0xff]
        %v270 = vld [vmem:[#allocation5 + $0x140] sm:$0xff]
        %v271 = vld [vmem:[#allocation5 + $0x148] sm:$0xff]
        %v272 = vld [vmem:[#allocation5 + $0x150] sm:$0xff]
        %v273 = vld [vmem:[#allocation5 + $0x158] sm:$0xff]
        %v274 = vld [vmem:[#allocation5 + $0x160] sm:$0xff]
        %v275 = vld [vmem:[#allocation5 + $0x168] sm:$0xff]
        %v276 = vld [vmem:[#allocation5 + $0x170] sm:$0xff]
        %v277 = vld [vmem:[#allocation5 + $0x178] sm:$0xff]
        %v278 = vld [vmem:[#allocation5 + $0x180] sm:$0xff]
        %v279 = vld [vmem:[#allocation5 + $0x188] sm:$0xff]
        %v280 = vld [vmem:[#allocation5 + $0x190] sm:$0xff]
        %v281 = vld [vmem:[#allocation5 + $0x198] sm:$0xff]
        %v282 = vld [vmem:[#allocation5 + $0x1a0] sm:$0xff]
        %v283 = vld [vmem:[#allocation5 + $0x1a8] sm:$0xff]
        %v284 = vld [vmem:[#allocation5 + $0x1b0] sm:$0xff]
        %v285 = vld [vmem:[#allocation5 + $0x1b8] sm:$0xff]
        %v286 = vld [vmem:[#allocation5 + $0x1c0] sm:$0xff]
        %v287 = vld [vmem:[#allocation5 + $0x1c8] sm:$0xff]
        %v288 = vld [vmem:[#allocation5 + $0x1d0] sm:$0xff]
        %v289 = vld [vmem:[#allocation5 + $0x1d8] sm:$0xff]
        %v290 = vld [vmem:[#allocation5 + $0x1e0] sm:$0xff]
        %v291 = vld [vmem:[#allocation5 + $0x1e8] sm:$0xff]
        %v292 = vld [vmem:[#allocation5 + $0x1f0] sm:$0xff]
        %v293 = vld [vmem:[#allocation5 + $0x1f8] sm:$0xff]
        %v294 = vld [vmem:[#allocation5 + $0x200] sm:$0xff]
        %v295 = vld [vmem:[#allocation5 + $0x208] sm:$0xff]
        %v296 = vld [vmem:[#allocation5 + $0x210] sm:$0xff]
        %v297 = vld [vmem:[#allocation5 + $0x218] sm:$0xff]
        %v298 = vld [vmem:[#allocation5 + $0x220] sm:$0xff]
        %v299 = vld [vmem:[#allocation5 + $0x228] sm:$0xff]
        %v300 = vld [vmem:[#allocation5 + $0x230] sm:$0xff]
        %v301 = vld [vmem:[#allocation5 + $0x238] sm:$0xff]
        %v302 = vld [vmem:[#allocation5 + $0x240] sm:$0xff]
        %v303 = vld [vmem:[#allocation5 + $0x248] sm:$0xff]
        %v304 = vld [vmem:[#allocation5 + $0x250] sm:$0xff]
        %v305 = vld [vmem:[#allocation5 + $0x258] sm:$0xff]
        %v306 = vld [vmem:[#allocation5 + $0x260] sm:$0xff]
        %v307 = vld [vmem:[#allocation5 + $0x268] sm:$0xff]
        %v308 = vld [vmem:[#allocation5 + $0x270] sm:$0xff]
        %v309 = vld [vmem:[#allocation5 + $0x278] sm:$0xff]
        %v310 = vld [vmem:[#allocation5 + $0x280] sm:$0xff]
        %v311 = vld [vmem:[#allocation5 + $0x288] sm:$0xff]
        %v312 = vld [vmem:[#allocation5 + $0x290] sm:$0xff]
        %v313 = vld [vmem:[#allocation5 + $0x298] sm:$0xff]
        %v314 = vld [vmem:[#allocation5 + $0x2a0] sm:$0xff]
        %v315 = vld [vmem:[#allocation5 + $0x2a8] sm:$0xff]
        %v316 = vld [vmem:[#allocation5 + $0x2b0] sm:$0xff]
        %v317 = vld [vmem:[#allocation5 + $0x2b8] sm:$0xff]
        %v318 = vld [vmem:[#allocation5 + $0x2c0] sm:$0xff]
        %v319 = vld [vmem:[#allocation5 + $0x2c8] sm:$0xff]
        %v320 = vld [vmem:[#allocation5 + $0x2d0] sm:$0xff]
        %v321 = vld [vmem:[#allocation5 + $0x2d8] sm:$0xff]
        %v322 = vld [vmem:[#allocation5 + $0x2e0] sm:$0xff]
        %v323 = vld [vmem:[#allocation5 + $0x2e8] sm:$0xff]
        %v324 = vld [vmem:[#allocation5 + $0x2f0] sm:$0xff]
        %v325 = vld [vmem:[#allocation5 + $0x2f8] sm:$0xff]
        %v326 = vld [vmem:[#allocation5 + $0x300] sm:$0xff]
        %v327 = vld [vmem:[#allocation5 + $0x308] sm:$0xff]
        %v328 = vld [vmem:[#allocation5 + $0x310] sm:$0xff]
        %v329 = vld [vmem:[#allocation5 + $0x318] sm:$0xff]
        %v330 = vld [vmem:[#allocation5 + $0x320] sm:$0xff]
        %v331 = vld [vmem:[#allocation5 + $0x328] sm:$0xff]
        %v332 = vld [vmem:[#allocation5 + $0x330] sm:$0xff]
        %v333 = vld [vmem:[#allocation5 + $0x338] sm:$0xff]
        %v334 = vld [vmem:[#allocation5 + $0x340] sm:$0xff]
        %v335 = vld [vmem:[#allocation5 + $0x348] sm:$0xff]
        %v336 = vld [vmem:[#allocation5 + $0x350] sm:$0xff]
        %v337 = vld [vmem:[#allocation5 + $0x358] sm:$0xff]
        %v338 = vld [vmem:[#allocation5 + $0x360] sm:$0xff]
        %v339 = vld [vmem:[#allocation5 + $0x368] sm:$0xff]
        %v340 = vld [vmem:[#allocation5 + $0x370] sm:$0xff]
        %v341 = vld [vmem:[#allocation5 + $0x378] sm:$0xff]
        %v342 = vld [vmem:[#allocation5 + $0x380] sm:$0xff]
        %v343 = vld [vmem:[#allocation5 + $0x388] sm:$0xff]
        %v344 = vld [vmem:[#allocation5 + $0x390] sm:$0xff]
        %v345 = vld [vmem:[#allocation5 + $0x398] sm:$0xff]
        %v346 = vld [vmem:[#allocation5 + $0x3a0] sm:$0xff]
        %v347 = vld [vmem:[#allocation5 + $0x3a8] sm:$0xff]
        %v348 = vld [vmem:[#allocation5 + $0x3b0] sm:$0xff]
        %v349 = vld [vmem:[#allocation5 + $0x3b8] sm:$0xff]
        %v350 = vld [vmem:[#allocation5 + $0x3c0] sm:$0xff]
        %v351 = vld [vmem:[#allocation5 + $0x3c8] sm:$0xff]
        %v352 = vld [vmem:[#allocation5 + $0x3d0] sm:$0xff]
        %v353 = vld [vmem:[#allocation5 + $0x3d8] sm:$0xff]
        %v354 = vld [vmem:[#allocation5 + $0x3e0] sm:$0xff]
        %v355 = vld [vmem:[#allocation5 + $0x3e8] sm:$0xff]
        %v356 = vld [vmem:[#allocation5 + $0x3f0] sm:$0xff]
        %v357 = vld [vmem:[#allocation5 + $0x3f8] sm:$0xff]
        %v358 = vld [vmem:[#allocation5 + $0x400] sm:$0xff]
        %v359 = vld [vmem:[#allocation5 + $0x408] sm:$0xff]
        %v360 = vld [vmem:[#allocation5 + $0x410] sm:$0xff]
        %v361 = vld [vmem:[#allocation5 + $0x418] sm:$0xff]
        %v362 = vld [vmem:[#allocation5 + $0x420] sm:$0xff]
        %v363 = vld [vmem:[#allocation5 + $0x428] sm:$0xff]
        %v364 = vld [vmem:[#allocation5 + $0x430] sm:$0xff]
        %v365 = vld [vmem:[#allocation5 + $0x438] sm:$0xff]
        %v366 = vld [vmem:[#allocation5 + $0x440] sm:$0xff]
        %v367 = vld [vmem:[#allocation5 + $0x448] sm:$0xff]
        %v368 = vld [vmem:[#allocation5 + $0x450] sm:$0xff]
        %v369 = vld [vmem:[#allocation5 + $0x458] sm:$0xff]
        %v370 = vld [vmem:[#allocation5 + $0x460] sm:$0xff]
        %v371 = vld [vmem:[#allocation5 + $0x468] sm:$0xff]
        %v372 = vld [vmem:[#allocation5 + $0x470] sm:$0xff]
        %v373 = vld [vmem:[#allocation5 + $0x478] sm:$0xff]
        %v374 = vld [vmem:[#allocation5 + $0x480] sm:$0xff]
        %v375 = vld [vmem:[#allocation5 + $0x488] sm:$0xff]
        %v376 = vld [vmem:[#allocation5 + $0x490] sm:$0xff]
        %v377 = vld [vmem:[#allocation5 + $0x498] sm:$0xff]
        %v378 = vld [vmem:[#allocation5 + $0x4a0] sm:$0xff]
        %v379 = vld [vmem:[#allocation5 + $0x4a8] sm:$0xff]
        %v380 = vld [vmem:[#allocation5 + $0x4b0] sm:$0xff]
        %v381 = vld [vmem:[#allocation5 + $0x4b8] sm:$0xff]
        %v382 = vld [vmem:[#allocation5 + $0x4c0] sm:$0xff]
        %v383 = vld [vmem:[#allocation5 + $0x4c8] sm:$0xff]
        %v384 = vld [vmem:[#allocation5 + $0x4d0] sm:$0xff]
        %v385 = vld [vmem:[#allocation5 + $0x4d8] sm:$0xff]
        %v386 = vld [vmem:[#allocation5 + $0x4e0] sm:$0xff]
        %v387 = vld [vmem:[#allocation5 + $0x4e8] sm:$0xff]
        %v388 = vld [vmem:[#allocation5 + $0x4f0] sm:$0xff]
        %v389 = vld [vmem:[#allocation5 + $0x4f8] sm:$0xff]
        %v390 = vld [vmem:[#allocation5 + $0x500] sm:$0xff]
        %v391 = vld [vmem:[#allocation5 + $0x508] sm:$0xff]
        %v392 = vld [vmem:[#allocation5 + $0x510] sm:$0xff]
        %v393 = vld [vmem:[#allocation5 + $0x518] sm:$0xff]
        %v394 = vld [vmem:[#allocation5 + $0x520] sm:$0xff]
        %v395 = vld [vmem:[#allocation5 + $0x528] sm:$0xff]
        %v396 = vld [vmem:[#allocation5 + $0x530] sm:$0xff]
        %v397 = vld [vmem:[#allocation5 + $0x538] sm:$0xff]
        %v398 = vld [vmem:[#allocation5 + $0x540] sm:$0xff]
        %v399 = vld [vmem:[#allocation5 + $0x548] sm:$0xff]
        %v400 = vld [vmem:[#allocation5 + $0x550] sm:$0xff]
        %v401 = vld [vmem:[#allocation5 + $0x558] sm:$0xff]
        %v402 = vld [vmem:[#allocation5 + $0x560] sm:$0xff]
        %v403 = vld [vmem:[#allocation5 + $0x568] sm:$0xff]
        %v404 = vld [vmem:[#allocation5 + $0x570] sm:$0xff]
        %v405 = vld [vmem:[#allocation5 + $0x578] sm:$0xff]
        %v406 = vld [vmem:[#allocation5 + $0x580] sm:$0xff]
        %v407 = vld [vmem:[#allocation5 + $0x588] sm:$0xff]
        %v408 = vld [vmem:[#allocation5 + $0x590] sm:$0xff]
        %v409 = vld [vmem:[#allocation5 + $0x598] sm:$0xff]
        %v410 = vld [vmem:[#allocation5 + $0x5a0] sm:$0xff]
        %v411 = vld [vmem:[#allocation5 + $0x5a8] sm:$0xff]
        %v412 = vld [vmem:[#allocation5 + $0x5b0] sm:$0xff]
        %v413 = vld [vmem:[#allocation5 + $0x5b8] sm:$0xff]
        %v414 = vld [vmem:[#allocation5 + $0x5c0] sm:$0xff]
        %v415 = vld [vmem:[#allocation5 + $0x5c8] sm:$0xff]
        %v416 = vld [vmem:[#allocation5 + $0x5d0] sm:$0xff]
        %v417 = vld [vmem:[#allocation5 + $0x5d8] sm:$0xff]
        %v418 = vld [vmem:[#allocation5 + $0x5e0] sm:$0xff]
        %v419 = vld [vmem:[#allocation5 + $0x5e8] sm:$0xff]
        %v420 = vld [vmem:[#allocation5 + $0x5f0] sm:$0xff]
        %v421 = vld [vmem:[#allocation5 + $0x5f8] sm:$0xff]
        %v422 = vld [vmem:[#allocation5 + $0x600] sm:$0xff]
        %v423 = vld [vmem:[#allocation5 + $0x608] sm:$0xff]
        %v424 = vld [vmem:[#allocation5 + $0x610] sm:$0xff]
        %v425 = vld [vmem:[#allocation5 + $0x618] sm:$0xff]
        %v426 = vld [vmem:[#allocation5 + $0x620] sm:$0xff]
        %v427 = vld [vmem:[#allocation5 + $0x628] sm:$0xff]
        %v428 = vld [vmem:[#allocation5 + $0x630] sm:$0xff]
        %v429 = vld [vmem:[#allocation5 + $0x638] sm:$0xff]
        %v430 = vld [vmem:[#allocation5 + $0x640] sm:$0xff]
        %v431 = vld [vmem:[#allocation5 + $0x648] sm:$0xff]
        %v432 = vld [vmem:[#allocation5 + $0x650] sm:$0xff]
        %v433 = vld [vmem:[#allocation5 + $0x658] sm:$0xff]
        %v434 = vld [vmem:[#allocation5 + $0x660] sm:$0xff]
        %v435 = vld [vmem:[#allocation5 + $0x668] sm:$0xff]
        %v436 = vld [vmem:[#allocation5 + $0x670] sm:$0xff]
        %v437 = vld [vmem:[#allocation5 + $0x678] sm:$0xff]
        %v438 = vld [vmem:[#allocation5 + $0x680] sm:$0xff]
        %v439 = vld [vmem:[#allocation5 + $0x688] sm:$0xff]
        %v440 = vld [vmem:[#allocation5 + $0x690] sm:$0xff]
        %v441 = vld [vmem:[#allocation5 + $0x698] sm:$0xff]
        %v442 = vld [vmem:[#allocation5 + $0x6a0] sm:$0xff]
        %v443 = vld [vmem:[#allocation5 + $0x6a8] sm:$0xff]
        %v444 = vld [vmem:[#allocation5 + $0x6b0] sm:$0xff]
        %v445 = vld [vmem:[#allocation5 + $0x6b8] sm:$0xff]
        %v446 = vld [vmem:[#allocation5 + $0x6c0] sm:$0xff]
        %v447 = vld [vmem:[#allocation5 + $0x6c8] sm:$0xff]
        %v448 = vld [vmem:[#allocation5 + $0x6d0] sm:$0xff]
        %v449 = vld [vmem:[#allocation5 + $0x6d8] sm:$0xff]
        %v450 = vld [vmem:[#allocation5 + $0x6e0] sm:$0xff]
        %v451 = vld [vmem:[#allocation5 + $0x6e8] sm:$0xff]
        %v452 = vld [vmem:[#allocation5 + $0x6f0] sm:$0xff]
        %v453 = vld [vmem:[#allocation5 + $0x6f8] sm:$0xff]
        %v454 = vld [vmem:[#allocation5 + $0x700] sm:$0xff]
        %v455 = vld [vmem:[#allocation5 + $0x708] sm:$0xff]
        %v456 = vld [vmem:[#allocation5 + $0x710] sm:$0xff]
        %v457 = vld [vmem:[#allocation5 + $0x718] sm:$0xff]
        %v458 = vld [vmem:[#allocation5 + $0x720] sm:$0xff]
        %v459 = vld [vmem:[#allocation5 + $0x728] sm:$0xff]
        %v460 = vld [vmem:[#allocation5 + $0x730] sm:$0xff]
        %v461 = vld [vmem:[#allocation5 + $0x738] sm:$0xff]
        %v462 = vld [vmem:[#allocation5 + $0x740] sm:$0xff]
        %v463 = vld [vmem:[#allocation5 + $0x748] sm:$0xff]
        %v464 = vld [vmem:[#allocation5 + $0x750] sm:$0xff]
        %v465 = vld [vmem:[#allocation5 + $0x758] sm:$0xff]
        %v466 = vld [vmem:[#allocation5 + $0x760] sm:$0xff]
        %v467 = vld [vmem:[#allocation5 + $0x768] sm:$0xff]
        %v468 = vld [vmem:[#allocation5 + $0x770] sm:$0xff]
        %v469 = vld [vmem:[#allocation5 + $0x778] sm:$0xff]
        %v470 = vld [vmem:[#allocation5 + $0x780] sm:$0xff]
        %v471 = vld [vmem:[#allocation5 + $0x788] sm:$0xff]
        %v472 = vld [vmem:[#allocation5 + $0x790] sm:$0xff]
        %v473 = vld [vmem:[#allocation5 + $0x798] sm:$0xff]
        %v474 = vld [vmem:[#allocation5 + $0x7a0] sm:$0xff]
        %v475 = vld [vmem:[#allocation5 + $0x7a8] sm:$0xff]
        %v476 = vld [vmem:[#allocation5 + $0x7b0] sm:$0xff]
        %v477 = vld [vmem:[#allocation5 + $0x7b8] sm:$0xff]
        %v478 = vld [vmem:[#allocation5 + $0x7c0] sm:$0xff]
        %v479 = vld [vmem:[#allocation5 + $0x7c8] sm:$0xff]
        %v480 = vld [vmem:[#allocation5 + $0x7d0] sm:$0xff]
        %v481 = vld [vmem:[#allocation5 + $0x7d8] sm:$0xff]
        %v482 = vld [vmem:[#allocation5 + $0x7e0] sm:$0xff]
        %v483 = vld [vmem:[#allocation5 + $0x7e8] sm:$0xff]
        %v484 = vld [vmem:[#allocation5 + $0x7f0] sm:$0xff]
        %v485 = vld [vmem:[#allocation5 + $0x7f8] sm:$0xff]
        %v486 = vld [vmem:[#allocation5 + $0x800] sm:$0xff]
        %v487 = vld [vmem:[#allocation5 + $0x808] sm:$0xff]
        %v488 = vld [vmem:[#allocation5 + $0x810] sm:$0xff]
        %v489 = vld [vmem:[#allocation5 + $0x818] sm:$0xff]
        %v490 = vld [vmem:[#allocation5 + $0x820] sm:$0xff]
        %v491 = vld [vmem:[#allocation5 + $0x828] sm:$0xff]
        %v492 = vld [vmem:[#allocation5 + $0x830] sm:$0xff]
        %v493 = vld [vmem:[#allocation5 + $0x838] sm:$0xff]
        %v494 = vld [vmem:[#allocation5 + $0x840] sm:$0xff]
        %v495 = vld [vmem:[#allocation5 + $0x848] sm:$0xff]
        %v496 = vld [vmem:[#allocation5 + $0x850] sm:$0xff]
        %v497 = vld [vmem:[#allocation5 + $0x858] sm:$0xff]
        %v498 = vld [vmem:[#allocation5 + $0x860] sm:$0xff]
        %v499 = vld [vmem:[#allocation5 + $0x868] sm:$0xff]
        %v500 = vld [vmem:[#allocation5 + $0x870] sm:$0xff]
        %v501 = vld [vmem:[#allocation5 + $0x878] sm:$0xff]
        %v502 = vld [vmem:[#allocation5 + $0x880] sm:$0xff]
        %v503 = vld [vmem:[#allocation5 + $0x888] sm:$0xff]
        %v504 = vld [vmem:[#allocation5 + $0x890] sm:$0xff]
        %v505 = vld [vmem:[#allocation5 + $0x898] sm:$0xff]
        %v506 = vld [vmem:[#allocation5 + $0x8a0] sm:$0xff]
        %v507 = vld [vmem:[#allocation5 + $0x8a8] sm:$0xff]
        %v508 = vld [vmem:[#allocation5 + $0x8b0] sm:$0xff]
        %v509 = vld [vmem:[#allocation5 + $0x8b8] sm:$0xff]
        %v510 = vld [vmem:[#allocation5 + $0x8c0] sm:$0xff]
        %v511 = vld [vmem:[#allocation5 + $0x8c8] sm:$0xff]
        %v512 = vld [vmem:[#allocation5 + $0x8d0] sm:$0xff]
        %v513 = vld [vmem:[#allocation5 + $0x8d8] sm:$0xff]
        %v514 = vld [vmem:[#allocation5 + $0x8e0] sm:$0xff]
        %v515 = vld [vmem:[#allocation5 + $0x8e8] sm:$0xff]
        %v516 = vld [vmem:[#allocation5 + $0x8f0] sm:$0xff]
        %v517 = vld [vmem:[#allocation5 + $0x8f8] sm:$0xff]
        %v518 = vld [vmem:[#allocation5 + $0x900] sm:$0xff]
        %v519 = vld [vmem:[#allocation5 + $0x908] sm:$0xff]
        %v520 = vld [vmem:[#allocation5 + $0x910] sm:$0xff]
        %v521 = vld [vmem:[#allocation5 + $0x918] sm:$0xff]
        %v522 = vld [vmem:[#allocation5 + $0x920] sm:$0xff]
        %v523 = vld [vmem:[#allocation5 + $0x928] sm:$0xff]
        %v524 = vld [vmem:[#allocation5 + $0x930] sm:$0xff]
        %v525 = vld [vmem:[#allocation5 + $0x938] sm:$0xff]
        %v526 = vld [vmem:[#allocation5 + $0x940] sm:$0xff]
        %v527 = vld [vmem:[#allocation5 + $0x948] sm:$0xff]
        %v528 = vld [vmem:[#allocation5 + $0x950] sm:$0xff]
        %v529 = vld [vmem:[#allocation5 + $0x958] sm:$0xff]
        %v530 = vld [vmem:[#allocation5 + $0x960] sm:$0xff]
        %v531 = vld [vmem:[#allocation5 + $0x968] sm:$0xff]
        %v532 = vld [vmem:[#allocation5 + $0x970] sm:$0xff]
        %v533 = vld [vmem:[#allocation5 + $0x978] sm:$0xff]
        %v534 = vld [vmem:[#allocation5 + $0x980] sm:$0xff]
        %v535 = vld [vmem:[#allocation5 + $0x988] sm:$0xff]
        %v536 = vld [vmem:[#allocation5 + $0x990] sm:$0xff]
        %v537 = vld [vmem:[#allocation5 + $0x998] sm:$0xff]
        %v538 = vld [vmem:[#allocation5 + $0x9a0] sm:$0xff]
        %v539 = vld [vmem:[#allocation5 + $0x9a8] sm:$0xff]
        %v540 = vld [vmem:[#allocation5 + $0x9b0] sm:$0xff]
        %v541 = vld [vmem:[#allocation5 + $0x9b8] sm:$0xff]
        %v542 = vld [vmem:[#allocation5 + $0x9c0] sm:$0xff]
        %v543 = vld [vmem:[#allocation5 + $0x9c8] sm:$0xff]
        %v544 = vld [vmem:[#allocation5 + $0x9d0] sm:$0xff]
        %v545 = vld [vmem:[#allocation5 + $0x9d8] sm:$0xff]
        %v546 = vld [vmem:[#allocation5 + $0x9e0] sm:$0xff]
        %v547 = vld [vmem:[#allocation5 + $0x9e8] sm:$0xff]
        %v548 = vld [vmem:[#allocation5 + $0x9f0] sm:$0xff]
        %v549 = vld [vmem:[#allocation5 + $0x9f8] sm:$0xff]
        %v550 = vld [vmem:[#allocation5 + $0xa00] sm:$0xff]
        %v551 = vld [vmem:[#allocation5 + $0xa08] sm:$0xff]
        %v552 = vld [vmem:[#allocation5 + $0xa10] sm:$0xff]
        %v553 = vld [vmem:[#allocation5 + $0xa18] sm:$0xff]
        %v554 = vld [vmem:[#allocation5 + $0xa20] sm:$0xff]
        %v555 = vld [vmem:[#allocation5 + $0xa28] sm:$0xff]
        %v556 = vld [vmem:[#allocation5 + $0xa30] sm:$0xff]
        %v557 = vld [vmem:[#allocation5 + $0xa38] sm:$0xff]
        %v558 = vld [vmem:[#allocation5 + $0xa40] sm:$0xff]
        %v559 = vld [vmem:[#allocation5 + $0xa48] sm:$0xff]
        %v560 = vld [vmem:[#allocation5 + $0xa50] sm:$0xff]
        %v561 = vld [vmem:[#allocation5 + $0xa58] sm:$0xff]
        %v562 = vld [vmem:[#allocation5 + $0xa60] sm:$0xff]
        %v563 = vld [vmem:[#allocation5 + $0xa68] sm:$0xff]
        %v564 = vld [vmem:[#allocation5 + $0xa70] sm:$0xff]
        %v565 = vld [vmem:[#allocation5 + $0xa78] sm:$0xff]
        %v566 = vld [vmem:[#allocation5 + $0xa80] sm:$0xff]
        %v567 = vld [vmem:[#allocation5 + $0xa88] sm:$0xff]
        %v568 = vld [vmem:[#allocation5 + $0xa90] sm:$0xff]
        %v569 = vld [vmem:[#allocation5 + $0xa98] sm:$0xff]
        %v570 = vld [vmem:[#allocation5 + $0xaa0] sm:$0xff]
        %v571 = vld [vmem:[#allocation5 + $0xaa8] sm:$0xff]
        %v572 = vld [vmem:[#allocation5 + $0xab0] sm:$0xff]
        %v573 = vld [vmem:[#allocation5 + $0xab8] sm:$0xff]
        %v574 = vld [vmem:[#allocation5 + $0xac0] sm:$0xff]
        %v575 = vld [vmem:[#allocation5 + $0xac8] sm:$0xff]
        %v576 = vld [vmem:[#allocation5 + $0xad0] sm:$0xff]
        %v577 = vld [vmem:[#allocation5 + $0xad8] sm:$0xff]
        %v578 = vld [vmem:[#allocation5 + $0xae0] sm:$0xff]
        %v579 = vld [vmem:[#allocation5 + $0xae8] sm:$0xff]
        %v580 = vld [vmem:[#allocation5 + $0xaf0] sm:$0xff]
        %v581 = vld [vmem:[#allocation5 + $0xaf8] sm:$0xff]
        %v582 = vld [vmem:[#allocation5 + $0xb00] sm:$0xff]
        %v583 = vld [vmem:[#allocation5 + $0xb08] sm:$0xff]
        %v584 = vld [vmem:[#allocation5 + $0xb10] sm:$0xff]
        %v585 = vld [vmem:[#allocation5 + $0xb18] sm:$0xff]
        %v586 = vld [vmem:[#allocation5 + $0xb20] sm:$0xff]
        %v587 = vld [vmem:[#allocation5 + $0xb28] sm:$0xff]
        %v588 = vld [vmem:[#allocation5 + $0xb30] sm:$0xff]
        %v589 = vld [vmem:[#allocation5 + $0xb38] sm:$0xff]
        %v590 = vld [vmem:[#allocation5 + $0xb40] sm:$0xff]
        %v591 = vld [vmem:[#allocation5 + $0xb48] sm:$0xff]
        %v592 = vld [vmem:[#allocation5 + $0xb50] sm:$0xff]
        %v593 = vld [vmem:[#allocation5 + $0xb58] sm:$0xff]
        %v594 = vld [vmem:[#allocation5 + $0xb60] sm:$0xff]
        %v595 = vld [vmem:[#allocation5 + $0xb68] sm:$0xff]
        %v596 = vld [vmem:[#allocation5 + $0xb70] sm:$0xff]
        %v597 = vld [vmem:[#allocation5 + $0xb78] sm:$0xff]
        %v598 = vld [vmem:[#allocation5 + $0xb80] sm:$0xff]
        %v599 = vld [vmem:[#allocation5 + $0xb88] sm:$0xff]
        %v600 = vld [vmem:[#allocation5 + $0xb90] sm:$0xff]
        %v601 = vld [vmem:[#allocation5 + $0xb98] sm:$0xff]
        %v602 = vld [vmem:[#allocation5 + $0xba0] sm:$0xff]
        %v603 = vld [vmem:[#allocation5 + $0xba8] sm:$0xff]
        %v604 = vld [vmem:[#allocation5 + $0xbb0] sm:$0xff]
        %v605 = vld [vmem:[#allocation5 + $0xbb8] sm:$0xff]
        %v606 = vld [vmem:[#allocation5 + $0xbc0] sm:$0xff]
        %v607 = vld [vmem:[#allocation5 + $0xbc8] sm:$0xff]
        %v608 = vld [vmem:[#allocation5 + $0xbd0] sm:$0xff]
        %v609 = vld [vmem:[#allocation5 + $0xbd8] sm:$0xff]
        %v610 = vld [vmem:[#allocation5 + $0xbe0] sm:$0xff]
        %v611 = vld [vmem:[#allocation5 + $0xbe8] sm:$0xff]
        %v612 = vld [vmem:[#allocation5 + $0xbf0] sm:$0xff]
        %v613 = vld [vmem:[#allocation5 + $0xbf8] sm:$0xff]
        %v614 = vld [vmem:[#allocation5 + $0xc00] sm:$0xff]
        %v615 = vld [vmem:[#allocation5 + $0xc08] sm:$0xff]
        %v616 = vld [vmem:[#allocation5 + $0xc10] sm:$0xff]
        %v617 = vld [vmem:[#allocation5 + $0xc18] sm:$0xff]
        %v618 = vld [vmem:[#allocation5 + $0xc20] sm:$0xff]
        %v619 = vld [vmem:[#allocation5 + $0xc28] sm:$0xff]
        %v620 = vld [vmem:[#allocation5 + $0xc30] sm:$0xff]
        %v621 = vld [vmem:[#allocation5 + $0xc38] sm:$0xff]
        %v622 = vld [vmem:[#allocation5 + $0xc40] sm:$0xff]
        %v623 = vld [vmem:[#allocation5 + $0xc48] sm:$0xff]
        %v624 = vld [vmem:[#allocation5 + $0xc50] sm:$0xff]
        %v625 = vld [vmem:[#allocation5 + $0xc58] sm:$0xff]
        %v626 = vld [vmem:[#allocation5 + $0xc60] sm:$0xff]
        %v627 = vld [vmem:[#allocation5 + $0xc68] sm:$0xff]
        %v628 = vld [vmem:[#allocation5 + $0xc70] sm:$0xff]
        %v629 = vld [vmem:[#allocation5 + $0xc78] sm:$0xff]
        %v630 = vld [vmem:[#allocation5 + $0xc80] sm:$0xff]
        %v631 = vld [vmem:[#allocation5 + $0xc88] sm:$0xff]
        %v632 = vld [vmem:[#allocation5 + $0xc90] sm:$0xff]
        %v633 = vld [vmem:[#allocation5 + $0xc98] sm:$0xff]
        %v634 = vld [vmem:[#allocation5 + $0xca0] sm:$0xff]
        %v635 = vld [vmem:[#allocation5 + $0xca8] sm:$0xff]
        %v636 = vld [vmem:[#allocation5 + $0xcb0] sm:$0xff]
        %v637 = vld [vmem:[#allocation5 + $0xcb8] sm:$0xff]
        %v638 = vld [vmem:[#allocation5 + $0xcc0] sm:$0xff]
        %v639 = vld [vmem:[#allocation5 + $0xcc8] sm:$0xff]
        %v640 = vld [vmem:[#allocation5 + $0xcd0] sm:$0xff]
        %v641 = vld [vmem:[#allocation5 + $0xcd8] sm:$0xff]
        %v642 = vld [vmem:[#allocation5 + $0xce0] sm:$0xff]
        %v643 = vld [vmem:[#allocation5 + $0xce8] sm:$0xff]
        %v644 = vld [vmem:[#allocation5 + $0xcf0] sm:$0xff]
        %v645 = vld [vmem:[#allocation5 + $0xcf8] sm:$0xff]
        %v646 = vld [vmem:[#allocation5 + $0xd00] sm:$0xff]
        %v647 = vld [vmem:[#allocation5 + $0xd08] sm:$0xff]
        %v648 = vld [vmem:[#allocation5 + $0xd10] sm:$0xff]
        %v649 = vld [vmem:[#allocation5 + $0xd18] sm:$0xff]
        %v650 = vld [vmem:[#allocation5 + $0xd20] sm:$0xff]
        %v651 = vld [vmem:[#allocation5 + $0xd28] sm:$0xff]
        %v652 = vld [vmem:[#allocation5 + $0xd30] sm:$0xff]
        %v653 = vld [vmem:[#allocation5 + $0xd38] sm:$0xff]
        %v654 = vld [vmem:[#allocation5 + $0xd40] sm:$0xff]
        %v655 = vld [vmem:[#allocation5 + $0xd48] sm:$0xff]
        %v656 = vld [vmem:[#allocation5 + $0xd50] sm:$0xff]
        %v657 = vld [vmem:[#allocation5 + $0xd58] sm:$0xff]
        %v658 = vld [vmem:[#allocation5 + $0xd60] sm:$0xff]
        %v659 = vld [vmem:[#allocation5 + $0xd68] sm:$0xff]
        %v660 = vld [vmem:[#allocation5 + $0xd70] sm:$0xff]
        %v661 = vld [vmem:[#allocation5 + $0xd78] sm:$0xff]
        %v662 = vld [vmem:[#allocation5 + $0xd80] sm:$0xff]
        %v663 = vld [vmem:[#allocation5 + $0xd88] sm:$0xff]
        %v664 = vld [vmem:[#allocation5 + $0xd90] sm:$0xff]
        %v665 = vld [vmem:[#allocation5 + $0xd98] sm:$0xff]
        %v666 = vld [vmem:[#allocation5 + $0xda0] sm:$0xff]
        %v667 = vld [vmem:[#allocation5 + $0xda8] sm:$0xff]
        %v668 = vld [vmem:[#allocation5 + $0xdb0] sm:$0xff]
        %v669 = vld [vmem:[#allocation5 + $0xdb8] sm:$0xff]
        %v670 = vld [vmem:[#allocation5 + $0xdc0] sm:$0xff]
        %v671 = vld [vmem:[#allocation5 + $0xdc8] sm:$0xff]
        %v672 = vld [vmem:[#allocation5 + $0xdd0] sm:$0xff]
        %v673 = vld [vmem:[#allocation5 + $0xdd8] sm:$0xff]
        %v674 = vld [vmem:[#allocation5 + $0xde0] sm:$0xff]
        %v675 = vld [vmem:[#allocation5 + $0xde8] sm:$0xff]
        %v676 = vld [vmem:[#allocation5 + $0xdf0] sm:$0xff]
        %v677 = vld [vmem:[#allocation5 + $0xdf8] sm:$0xff]
        %v678 = vld [vmem:[#allocation5 + $0xe00] sm:$0xff]
        %v679 = vld [vmem:[#allocation5 + $0xe08] sm:$0xff]
        %v680 = vld [vmem:[#allocation5 + $0xe10] sm:$0xff]
        %v681 = vld [vmem:[#allocation5 + $0xe18] sm:$0xff]
        %v682 = vld [vmem:[#allocation5 + $0xe20] sm:$0xff]
        %v683 = vld [vmem:[#allocation5 + $0xe28] sm:$0xff]
        %v684 = vld [vmem:[#allocation5 + $0xe30] sm:$0xff]
        %v685 = vld [vmem:[#allocation5 + $0xe38] sm:$0xff]
        %v686 = vld [vmem:[#allocation5 + $0xe40] sm:$0xff]
        %v687 = vld [vmem:[#allocation5 + $0xe48] sm:$0xff]
        %v688 = vld [vmem:[#allocation5 + $0xe50] sm:$0xff]
        %v689 = vld [vmem:[#allocation5 + $0xe58] sm:$0xff]
        %v690 = vld [vmem:[#allocation5 + $0xe60] sm:$0xff]
        %v691 = vld [vmem:[#allocation5 + $0xe68] sm:$0xff]
        %v692 = vld [vmem:[#allocation5 + $0xe70] sm:$0xff]
        %v693 = vld [vmem:[#allocation5 + $0xe78] sm:$0xff]
        %v694 = vld [vmem:[#allocation5 + $0xe80] sm:$0xff]
        %v695 = vld [vmem:[#allocation5 + $0xe88] sm:$0xff]
        %v696 = vld [vmem:[#allocation5 + $0xe90] sm:$0xff]
        %v697 = vld [vmem:[#allocation5 + $0xe98] sm:$0xff]
        %v698 = vld [vmem:[#allocation5 + $0xea0] sm:$0xff]
        %v699 = vld [vmem:[#allocation5 + $0xea8] sm:$0xff]
        %v700 = vld [vmem:[#allocation5 + $0xeb0] sm:$0xff]
        %v701 = vld [vmem:[#allocation5 + $0xeb8] sm:$0xff]
        %v702 = vld [vmem:[#allocation5 + $0xec0] sm:$0xff]
        %v703 = vld [vmem:[#allocation5 + $0xec8] sm:$0xff]
        %v704 = vld [vmem:[#allocation5 + $0xed0] sm:$0xff]
        %v705 = vld [vmem:[#allocation5 + $0xed8] sm:$0xff]
        %v706 = vld [vmem:[#allocation5 + $0xee0] sm:$0xff]
        %v707 = vld [vmem:[#allocation5 + $0xee8] sm:$0xff]
        %v708 = vld [vmem:[#allocation5 + $0xef0] sm:$0xff]
        %v709 = vld [vmem:[#allocation5 + $0xef8] sm:$0xff]
        %v710 = vld [vmem:[#allocation5 + $0xf00] sm:$0xff]
        %v711 = vld [vmem:[#allocation5 + $0xf08] sm:$0xff]
        %v712 = vld [vmem:[#allocation5 + $0xf10] sm:$0xff]
        %v713 = vld [vmem:[#allocation5 + $0xf18] sm:$0xff]
        %v714 = vld [vmem:[#allocation5 + $0xf20] sm:$0xff]
        %v715 = vld [vmem:[#allocation5 + $0xf28] sm:$0xff]
        %v716 = vld [vmem:[#allocation5 + $0xf30] sm:$0xff]
        %v717 = vld [vmem:[#allocation5 + $0xf38] sm:$0xff]
        %v718 = vld [vmem:[#allocation5 + $0xf40] sm:$0xff]
        %v719 = vld [vmem:[#allocation5 + $0xf48] sm:$0xff]
        %v720 = vld [vmem:[#allocation5 + $0xf50] sm:$0xff]
        %v721 = vld [vmem:[#allocation5 + $0xf58] sm:$0xff]
        %v722 = vld [vmem:[#allocation5 + $0xf60] sm:$0xff]
        %v723 = vld [vmem:[#allocation5 + $0xf68] sm:$0xff]
        %v724 = vld [vmem:[#allocation5 + $0xf70] sm:$0xff]
        %v725 = vld [vmem:[#allocation5 + $0xf78] sm:$0xff]
        %v726 = vld [vmem:[#allocation5 + $0xf80] sm:$0xff]
        %v727 = vld [vmem:[#allocation5 + $0xf88] sm:$0xff]
        %v728 = vld [vmem:[#allocation5 + $0xf90] sm:$0xff]
        %v729 = vld [vmem:[#allocation5 + $0xf98] sm:$0xff]
        %v730 = vld [vmem:[#allocation5 + $0xfa0] sm:$0xff]
        %v731 = vld [vmem:[#allocation5 + $0xfa8] sm:$0xff]
        %v732 = vld [vmem:[#allocation5 + $0xfb0] sm:$0xff]
        %v733 = vld [vmem:[#allocation5 + $0xfb8] sm:$0xff]
        %v734 = vld [vmem:[#allocation5 + $0xfc0] sm:$0xff]
        %v735 = vld [vmem:[#allocation5 + $0xfc8] sm:$0xff]
        %v736 = vld [vmem:[#allocation5 + $0xfd0] sm:$0xff]
        %v737 = vld [vmem:[#allocation5 + $0xfd8] sm:$0xff]
        %v738 = vld [vmem:[#allocation5 + $0xfe0] sm:$0xff]
        %v739 = vld [vmem:[#allocation5 + $0xfe8] sm:$0xff]
        %v740 = vld [vmem:[#allocation5 + $0xff0] sm:$0xff]
        %v741 = vld [vmem:[#allocation5 + $0xff8] sm:$0xff]
        %v750 = vunpack.c.l.b16 %v222
        %v751 = vunpack.c.h.b16 %v222
        %v752 = vunpack.c.l.b16 %v223
        %v753 = vunpack.c.h.b16 %v223
        %v754 = vunpack.c.l.b16 %v224
        %v755 = vunpack.c.h.b16 %v224
        %v756 = vunpack.c.l.b16 %v225
        %v757 = vunpack.c.h.b16 %v225
        %v758 = vunpack.c.l.b16 %v226
        %v759 = vunpack.c.h.b16 %v226
        %v760 = vunpack.c.l.b16 %v227
        %v761 = vunpack.c.h.b16 %v227
        %v762 = vunpack.c.l.b16 %v228
        %v763 = vunpack.c.h.b16 %v228
        %v764 = vunpack.c.l.b16 %v229
        %v765 = vunpack.c.h.b16 %v229
        %v766 = vpack.c.b16 %v758, %v750
        %v767 = vpack.c.b16 %v759, %v751
        %v768 = vpack.c.b16 %v760, %v752
        %v769 = vpack.c.b16 %v761, %v753
        %v770 = vpack.c.b16 %v762, %v754
        %v771 = vpack.c.b16 %v763, %v755
        %v772 = vpack.c.b16 %v764, %v756
        %v773 = vpack.c.b16 %v765, %v757
        %v1294 = vunpack.c.l.b16 %v230
        %v1295 = vunpack.c.h.b16 %v230
        %v1296 = vunpack.c.l.b16 %v231
        %v1297 = vunpack.c.h.b16 %v231
        %v1298 = vunpack.c.l.b16 %v232
        %v1299 = vunpack.c.h.b16 %v232
        %v1300 = vunpack.c.l.b16 %v233
        %v1301 = vunpack.c.h.b16 %v233
        %v1302 = vunpack.c.l.b16 %v234
        %v1303 = vunpack.c.h.b16 %v234
        %v1304 = vunpack.c.l.b16 %v235
        %v1305 = vunpack.c.h.b16 %v235
        %v1306 = vunpack.c.l.b16 %v236
        %v1307 = vunpack.c.h.b16 %v236
        %v1308 = vunpack.c.l.b16 %v237
        %v1309 = vunpack.c.h.b16 %v237
        %v1310 = vunpack.c.l.b16 %v238
        %v1311 = vunpack.c.h.b16 %v238
        %v1312 = vunpack.c.l.b16 %v239
        %v1313 = vunpack.c.h.b16 %v239
        %v1314 = vunpack.c.l.b16 %v240
        %v1315 = vunpack.c.h.b16 %v240
        %v1316 = vunpack.c.l.b16 %v241
        %v1317 = vunpack.c.h.b16 %v241
        %v1318 = vunpack.c.l.b16 %v242
        %v1319 = vunpack.c.h.b16 %v242
        %v1320 = vunpack.c.l.b16 %v243
        %v1321 = vunpack.c.h.b16 %v243
        %v1322 = vunpack.c.l.b16 %v244
        %v1323 = vunpack.c.h.b16 %v244
        %v1324 = vunpack.c.l.b16 %v245
        %v1325 = vunpack.c.h.b16 %v245
        %v1326 = vunpack.c.l.b16 %v246
        %v1327 = vunpack.c.h.b16 %v246
        %v1328 = vunpack.c.l.b16 %v247
        %v1329 = vunpack.c.h.b16 %v247
        %v1330 = vunpack.c.l.b16 %v248
        %v1331 = vunpack.c.h.b16 %v248
        %v1332 = vunpack.c.l.b16 %v249
        %v1333 = vunpack.c.h.b16 %v249
        %v1334 = vunpack.c.l.b16 %v250
        %v1335 = vunpack.c.h.b16 %v250
        %v1336 = vunpack.c.l.b16 %v251
        %v1337 = vunpack.c.h.b16 %v251
        %v1338 = vunpack.c.l.b16 %v252
        %v1339 = vunpack.c.h.b16 %v252
        %v1340 = vunpack.c.l.b16 %v253
        %v1341 = vunpack.c.h.b16 %v253
        %v1342 = vunpack.c.l.b16 %v254
        %v1343 = vunpack.c.h.b16 %v254
        %v1344 = vunpack.c.l.b16 %v255
        %v1345 = vunpack.c.h.b16 %v255
        %v1346 = vunpack.c.l.b16 %v256
        %v1347 = vunpack.c.h.b16 %v256
        %v1348 = vunpack.c.l.b16 %v257
        %v1349 = vunpack.c.h.b16 %v257
        %v1350 = vunpack.c.l.b16 %v258
        %v1351 = vunpack.c.h.b16 %v258
        %v1352 = vunpack.c.l.b16 %v259
        %v1353 = vunpack.c.h.b16 %v259
        %v1354 = vunpack.c.l.b16 %v260
        %v1355 = vunpack.c.h.b16 %v260
        %v1356 = vunpack.c.l.b16 %v261
        %v1357 = vunpack.c.h.b16 %v261
        %v1358 = vunpack.c.l.b16 %v262
        %v1359 = vunpack.c.h.b16 %v262
        %v1360 = vunpack.c.l.b16 %v263
        %v1361 = vunpack.c.h.b16 %v263
        %v1362 = vunpack.c.l.b16 %v264
        %v1363 = vunpack.c.h.b16 %v264
        %v1364 = vunpack.c.l.b16 %v265
        %v1365 = vunpack.c.h.b16 %v265
        %v1366 = vunpack.c.l.b16 %v266
        %v1367 = vunpack.c.h.b16 %v266
        %v1368 = vunpack.c.l.b16 %v267
        %v1369 = vunpack.c.h.b16 %v267
        %v1370 = vunpack.c.l.b16 %v268
        %v1371 = vunpack.c.h.b16 %v268
        %v1372 = vunpack.c.l.b16 %v269
        %v1373 = vunpack.c.h.b16 %v269
        %v1374 = vunpack.c.l.b16 %v270
        %v1375 = vunpack.c.h.b16 %v270
        %v1376 = vunpack.c.l.b16 %v271
        %v1377 = vunpack.c.h.b16 %v271
        %v1378 = vunpack.c.l.b16 %v272
        %v1379 = vunpack.c.h.b16 %v272
        %v1380 = vunpack.c.l.b16 %v273
        %v1381 = vunpack.c.h.b16 %v273
        %v1382 = vunpack.c.l.b16 %v274
        %v1383 = vunpack.c.h.b16 %v274
        %v1384 = vunpack.c.l.b16 %v275
        %v1385 = vunpack.c.h.b16 %v275
        %v1386 = vunpack.c.l.b16 %v276
        %v1387 = vunpack.c.h.b16 %v276
        %v1388 = vunpack.c.l.b16 %v277
        %v1389 = vunpack.c.h.b16 %v277
        %v1390 = vunpack.c.l.b16 %v278
        %v1391 = vunpack.c.h.b16 %v278
        %v1392 = vunpack.c.l.b16 %v279
        %v1393 = vunpack.c.h.b16 %v279
        %v1394 = vunpack.c.l.b16 %v280
        %v1395 = vunpack.c.h.b16 %v280
        %v1396 = vunpack.c.l.b16 %v281
        %v1397 = vunpack.c.h.b16 %v281
        %v1398 = vunpack.c.l.b16 %v282
        %v1399 = vunpack.c.h.b16 %v282
        %v1400 = vunpack.c.l.b16 %v283
        %v1401 = vunpack.c.h.b16 %v283
        %v1402 = vunpack.c.l.b16 %v284
        %v1403 = vunpack.c.h.b16 %v284
        %v1404 = vunpack.c.l.b16 %v285
        %v1405 = vunpack.c.h.b16 %v285
        %v1406 = vunpack.c.l.b16 %v286
        %v1407 = vunpack.c.h.b16 %v286
        %v1408 = vunpack.c.l.b16 %v287
        %v1409 = vunpack.c.h.b16 %v287
        %v1410 = vunpack.c.l.b16 %v288
        %v1411 = vunpack.c.h.b16 %v288
        %v1412 = vunpack.c.l.b16 %v289
        %v1413 = vunpack.c.h.b16 %v289
        %v1414 = vunpack.c.l.b16 %v290
        %v1415 = vunpack.c.h.b16 %v290
        %v1416 = vunpack.c.l.b16 %v291
        %v1417 = vunpack.c.h.b16 %v291
        %v1418 = vunpack.c.l.b16 %v292
        %v1419 = vunpack.c.h.b16 %v292
        %v1420 = vunpack.c.l.b16 %v293
        %v1421 = vunpack.c.h.b16 %v293
        %v1422 = vunpack.c.l.b16 %v294
        %v1423 = vunpack.c.h.b16 %v294
        %v1424 = vunpack.c.l.b16 %v295
        %v1425 = vunpack.c.h.b16 %v295
        %v1426 = vunpack.c.l.b16 %v296
        %v1427 = vunpack.c.h.b16 %v296
        %v1428 = vunpack.c.l.b16 %v297
        %v1429 = vunpack.c.h.b16 %v297
        %v1430 = vunpack.c.l.b16 %v298
        %v1431 = vunpack.c.h.b16 %v298
        %v1432 = vunpack.c.l.b16 %v299
        %v1433 = vunpack.c.h.b16 %v299
        %v1434 = vunpack.c.l.b16 %v300
        %v1435 = vunpack.c.h.b16 %v300
        %v1436 = vunpack.c.l.b16 %v301
        %v1437 = vunpack.c.h.b16 %v301
        %v1438 = vunpack.c.l.b16 %v302
        %v1439 = vunpack.c.h.b16 %v302
        %v1440 = vunpack.c.l.b16 %v303
        %v1441 = vunpack.c.h.b16 %v303
        %v1442 = vunpack.c.l.b16 %v304
        %v1443 = vunpack.c.h.b16 %v304
        %v1444 = vunpack.c.l.b16 %v305
        %v1445 = vunpack.c.h.b16 %v305
        %v1446 = vunpack.c.l.b16 %v306
        %v1447 = vunpack.c.h.b16 %v306
        %v1448 = vunpack.c.l.b16 %v307
        %v1449 = vunpack.c.h.b16 %v307
        %v1450 = vunpack.c.l.b16 %v308
        %v1451 = vunpack.c.h.b16 %v308
        %v1452 = vunpack.c.l.b16 %v309
        %v1453 = vunpack.c.h.b16 %v309
        %v1454 = vunpack.c.l.b16 %v310
        %v1455 = vunpack.c.h.b16 %v310
        %v1456 = vunpack.c.l.b16 %v311
        %v1457 = vunpack.c.h.b16 %v311
        %v1458 = vunpack.c.l.b16 %v312
        %v1459 = vunpack.c.h.b16 %v312
        %v1460 = vunpack.c.l.b16 %v313
        %v1461 = vunpack.c.h.b16 %v313
        %v1462 = vunpack.c.l.b16 %v314
        %v1463 = vunpack.c.h.b16 %v314
        %v1464 = vunpack.c.l.b16 %v315
        %v1465 = vunpack.c.h.b16 %v315
        %v1466 = vunpack.c.l.b16 %v316
        %v1467 = vunpack.c.h.b16 %v316
        %v1468 = vunpack.c.l.b16 %v317
        %v1469 = vunpack.c.h.b16 %v317
        %v1470 = vunpack.c.l.b16 %v318
        %v1471 = vunpack.c.h.b16 %v318
        %v1472 = vunpack.c.l.b16 %v319
        %v1473 = vunpack.c.h.b16 %v319
        %v1474 = vunpack.c.l.b16 %v320
        %v1475 = vunpack.c.h.b16 %v320
        %v1476 = vunpack.c.l.b16 %v321
        %v1477 = vunpack.c.h.b16 %v321
        %v1478 = vunpack.c.l.b16 %v322
        %v1479 = vunpack.c.h.b16 %v322
        %v1480 = vunpack.c.l.b16 %v323
        %v1481 = vunpack.c.h.b16 %v323
        %v1482 = vunpack.c.l.b16 %v324
        %v1483 = vunpack.c.h.b16 %v324
        %v1484 = vunpack.c.l.b16 %v325
        %v1485 = vunpack.c.h.b16 %v325
        %v1486 = vunpack.c.l.b16 %v326
        %v1487 = vunpack.c.h.b16 %v326
        %v1488 = vunpack.c.l.b16 %v327
        %v1489 = vunpack.c.h.b16 %v327
        %v1490 = vunpack.c.l.b16 %v328
        %v1491 = vunpack.c.h.b16 %v328
        %v1492 = vunpack.c.l.b16 %v329
        %v1493 = vunpack.c.h.b16 %v329
        %v1494 = vunpack.c.l.b16 %v330
        %v1495 = vunpack.c.h.b16 %v330
        %v1496 = vunpack.c.l.b16 %v331
        %v1497 = vunpack.c.h.b16 %v331
        %v1498 = vunpack.c.l.b16 %v332
        %v1499 = vunpack.c.h.b16 %v332
        %v1500 = vunpack.c.l.b16 %v333
        %v1501 = vunpack.c.h.b16 %v333
        %v1502 = vunpack.c.l.b16 %v334
        %v1503 = vunpack.c.h.b16 %v334
        %v1504 = vunpack.c.l.b16 %v335
        %v1505 = vunpack.c.h.b16 %v335
        %v1506 = vunpack.c.l.b16 %v336
        %v1507 = vunpack.c.h.b16 %v336
        %v1508 = vunpack.c.l.b16 %v337
        %v1509 = vunpack.c.h.b16 %v337
        %v1510 = vunpack.c.l.b16 %v338
        %v1511 = vunpack.c.h.b16 %v338
        %v1512 = vunpack.c.l.b16 %v339
        %v1513 = vunpack.c.h.b16 %v339
        %v1514 = vunpack.c.l.b16 %v340
        %v1515 = vunpack.c.h.b16 %v340
        %v1516 = vunpack.c.l.b16 %v341
        %v1517 = vunpack.c.h.b16 %v341
        %v1518 = vunpack.c.l.b16 %v342
        %v1519 = vunpack.c.h.b16 %v342
        %v1520 = vunpack.c.l.b16 %v343
        %v1521 = vunpack.c.h.b16 %v343
        %v1522 = vunpack.c.l.b16 %v344
        %v1523 = vunpack.c.h.b16 %v344
        %v1524 = vunpack.c.l.b16 %v345
        %v1525 = vunpack.c.h.b16 %v345
        %v1526 = vunpack.c.l.b16 %v346
        %v1527 = vunpack.c.h.b16 %v346
        %v1528 = vunpack.c.l.b16 %v347
        %v1529 = vunpack.c.h.b16 %v347
        %v1530 = vunpack.c.l.b16 %v348
        %v1531 = vunpack.c.h.b16 %v348
        %v1532 = vunpack.c.l.b16 %v349
        %v1533 = vunpack.c.h.b16 %v349
        %v1534 = vunpack.c.l.b16 %v350
        %v1535 = vunpack.c.h.b16 %v350
        %v1536 = vunpack.c.l.b16 %v351
        %v1537 = vunpack.c.h.b16 %v351
        %v1538 = vunpack.c.l.b16 %v352
        %v1539 = vunpack.c.h.b16 %v352
        %v1540 = vunpack.c.l.b16 %v353
        %v1541 = vunpack.c.h.b16 %v353
        %v1542 = vunpack.c.l.b16 %v354
        %v1543 = vunpack.c.h.b16 %v354
        %v1544 = vunpack.c.l.b16 %v355
        %v1545 = vunpack.c.h.b16 %v355
        %v1546 = vunpack.c.l.b16 %v356
        %v1547 = vunpack.c.h.b16 %v356
        %v1548 = vunpack.c.l.b16 %v357
        %v1549 = vunpack.c.h.b16 %v357
        %v1550 = vunpack.c.l.b16 %v358
        %v1551 = vunpack.c.h.b16 %v358
        %v1552 = vunpack.c.l.b16 %v359
        %v1553 = vunpack.c.h.b16 %v359
        %v1554 = vunpack.c.l.b16 %v360
        %v1555 = vunpack.c.h.b16 %v360
        %v1556 = vunpack.c.l.b16 %v361
        %v1557 = vunpack.c.h.b16 %v361
        %v1558 = vunpack.c.l.b16 %v362
        %v1559 = vunpack.c.h.b16 %v362
        %v1560 = vunpack.c.l.b16 %v363
        %v1561 = vunpack.c.h.b16 %v363
        %v1562 = vunpack.c.l.b16 %v364
        %v1563 = vunpack.c.h.b16 %v364
        %v1564 = vunpack.c.l.b16 %v365
        %v1565 = vunpack.c.h.b16 %v365
        %v1566 = vunpack.c.l.b16 %v366
        %v1567 = vunpack.c.h.b16 %v366
        %v1568 = vunpack.c.l.b16 %v367
        %v1569 = vunpack.c.h.b16 %v367
        %v1570 = vunpack.c.l.b16 %v368
        %v1571 = vunpack.c.h.b16 %v368
        %v1572 = vunpack.c.l.b16 %v369
        %v1573 = vunpack.c.h.b16 %v369
        %v1574 = vunpack.c.l.b16 %v370
        %v1575 = vunpack.c.h.b16 %v370
        %v1576 = vunpack.c.l.b16 %v371
        %v1577 = vunpack.c.h.b16 %v371
        %v1578 = vunpack.c.l.b16 %v372
        %v1579 = vunpack.c.h.b16 %v372
        %v1580 = vunpack.c.l.b16 %v373
        %v1581 = vunpack.c.h.b16 %v373
        %v1582 = vunpack.c.l.b16 %v374
        %v1583 = vunpack.c.h.b16 %v374
        %v1584 = vunpack.c.l.b16 %v375
        %v1585 = vunpack.c.h.b16 %v375
        %v1586 = vunpack.c.l.b16 %v376
        %v1587 = vunpack.c.h.b16 %v376
        %v1588 = vunpack.c.l.b16 %v377
        %v1589 = vunpack.c.h.b16 %v377
        %v1590 = vunpack.c.l.b16 %v378
        %v1591 = vunpack.c.h.b16 %v378
        %v1592 = vunpack.c.l.b16 %v379
        %v1593 = vunpack.c.h.b16 %v379
        %v1594 = vunpack.c.l.b16 %v380
        %v1595 = vunpack.c.h.b16 %v380
        %v1596 = vunpack.c.l.b16 %v381
        %v1597 = vunpack.c.h.b16 %v381
        %v1598 = vunpack.c.l.b16 %v382
        %v1599 = vunpack.c.h.b16 %v382
        %v1600 = vunpack.c.l.b16 %v383
        %v1601 = vunpack.c.h.b16 %v383
        %v1602 = vunpack.c.l.b16 %v384
        %v1603 = vunpack.c.h.b16 %v384
        %v1604 = vunpack.c.l.b16 %v385
        %v1605 = vunpack.c.h.b16 %v385
        %v1606 = vunpack.c.l.b16 %v386
        %v1607 = vunpack.c.h.b16 %v386
        %v1608 = vunpack.c.l.b16 %v387
        %v1609 = vunpack.c.h.b16 %v387
        %v1610 = vunpack.c.l.b16 %v388
        %v1611 = vunpack.c.h.b16 %v388
        %v1612 = vunpack.c.l.b16 %v389
        %v1613 = vunpack.c.h.b16 %v389
        %v1614 = vunpack.c.l.b16 %v390
        %v1615 = vunpack.c.h.b16 %v390
        %v1616 = vunpack.c.l.b16 %v391
        %v1617 = vunpack.c.h.b16 %v391
        %v1618 = vunpack.c.l.b16 %v392
        %v1619 = vunpack.c.h.b16 %v392
        %v1620 = vunpack.c.l.b16 %v393
        %v1621 = vunpack.c.h.b16 %v393
        %v1622 = vunpack.c.l.b16 %v394
        %v1623 = vunpack.c.h.b16 %v394
        %v1624 = vunpack.c.l.b16 %v395
        %v1625 = vunpack.c.h.b16 %v395
        %v1626 = vunpack.c.l.b16 %v396
        %v1627 = vunpack.c.h.b16 %v396
        %v1628 = vunpack.c.l.b16 %v397
        %v1629 = vunpack.c.h.b16 %v397
        %v1630 = vunpack.c.l.b16 %v398
        %v1631 = vunpack.c.h.b16 %v398
        %v1632 = vunpack.c.l.b16 %v399
        %v1633 = vunpack.c.h.b16 %v399
        %v1634 = vunpack.c.l.b16 %v400
        %v1635 = vunpack.c.h.b16 %v400
        %v1636 = vunpack.c.l.b16 %v401
        %v1637 = vunpack.c.h.b16 %v401
        %v1638 = vunpack.c.l.b16 %v402
        %v1639 = vunpack.c.h.b16 %v402
        %v1640 = vunpack.c.l.b16 %v403
        %v1641 = vunpack.c.h.b16 %v403
        %v1642 = vunpack.c.l.b16 %v404
        %v1643 = vunpack.c.h.b16 %v404
        %v1644 = vunpack.c.l.b16 %v405
        %v1645 = vunpack.c.h.b16 %v405
        %v1646 = vunpack.c.l.b16 %v406
        %v1647 = vunpack.c.h.b16 %v406
        %v1648 = vunpack.c.l.b16 %v407
        %v1649 = vunpack.c.h.b16 %v407
        %v1650 = vunpack.c.l.b16 %v408
        %v1651 = vunpack.c.h.b16 %v408
        %v1652 = vunpack.c.l.b16 %v409
        %v1653 = vunpack.c.h.b16 %v409
        %v1654 = vunpack.c.l.b16 %v410
        %v1655 = vunpack.c.h.b16 %v410
        %v1656 = vunpack.c.l.b16 %v411
        %v1657 = vunpack.c.h.b16 %v411
        %v1658 = vunpack.c.l.b16 %v412
        %v1659 = vunpack.c.h.b16 %v412
        %v1660 = vunpack.c.l.b16 %v413
        %v1661 = vunpack.c.h.b16 %v413
        %v1662 = vunpack.c.l.b16 %v414
        %v1663 = vunpack.c.h.b16 %v414
        %v1664 = vunpack.c.l.b16 %v415
        %v1665 = vunpack.c.h.b16 %v415
        %v1666 = vunpack.c.l.b16 %v416
        %v1667 = vunpack.c.h.b16 %v416
        %v1668 = vunpack.c.l.b16 %v417
        %v1669 = vunpack.c.h.b16 %v417
        %v1670 = vunpack.c.l.b16 %v418
        %v1671 = vunpack.c.h.b16 %v418
        %v1672 = vunpack.c.l.b16 %v419
        %v1673 = vunpack.c.h.b16 %v419
        %v1674 = vunpack.c.l.b16 %v420
        %v1675 = vunpack.c.h.b16 %v420
        %v1676 = vunpack.c.l.b16 %v421
        %v1677 = vunpack.c.h.b16 %v421
        %v1678 = vunpack.c.l.b16 %v422
        %v1679 = vunpack.c.h.b16 %v422
        %v1680 = vunpack.c.l.b16 %v423
        %v1681 = vunpack.c.h.b16 %v423
        %v1682 = vunpack.c.l.b16 %v424
        %v1683 = vunpack.c.h.b16 %v424
        %v1684 = vunpack.c.l.b16 %v425
        %v1685 = vunpack.c.h.b16 %v425
        %v1686 = vunpack.c.l.b16 %v426
        %v1687 = vunpack.c.h.b16 %v426
        %v1688 = vunpack.c.l.b16 %v427
        %v1689 = vunpack.c.h.b16 %v427
        %v1690 = vunpack.c.l.b16 %v428
        %v1691 = vunpack.c.h.b16 %v428
        %v1692 = vunpack.c.l.b16 %v429
        %v1693 = vunpack.c.h.b16 %v429
        %v1694 = vunpack.c.l.b16 %v430
        %v1695 = vunpack.c.h.b16 %v430
        %v1696 = vunpack.c.l.b16 %v431
        %v1697 = vunpack.c.h.b16 %v431
        %v1698 = vunpack.c.l.b16 %v432
        %v1699 = vunpack.c.h.b16 %v432
        %v1700 = vunpack.c.l.b16 %v433
        %v1701 = vunpack.c.h.b16 %v433
        %v1702 = vunpack.c.l.b16 %v434
        %v1703 = vunpack.c.h.b16 %v434
        %v1704 = vunpack.c.l.b16 %v435
        %v1705 = vunpack.c.h.b16 %v435
        %v1706 = vunpack.c.l.b16 %v436
        %v1707 = vunpack.c.h.b16 %v436
        %v1708 = vunpack.c.l.b16 %v437
        %v1709 = vunpack.c.h.b16 %v437
        %v1710 = vunpack.c.l.b16 %v438
        %v1711 = vunpack.c.h.b16 %v438
        %v1712 = vunpack.c.l.b16 %v439
        %v1713 = vunpack.c.h.b16 %v439
        %v1714 = vunpack.c.l.b16 %v440
        %v1715 = vunpack.c.h.b16 %v440
        %v1716 = vunpack.c.l.b16 %v441
        %v1717 = vunpack.c.h.b16 %v441
        %v1718 = vunpack.c.l.b16 %v442
        %v1719 = vunpack.c.h.b16 %v442
        %v1720 = vunpack.c.l.b16 %v443
        %v1721 = vunpack.c.h.b16 %v443
        %v1722 = vunpack.c.l.b16 %v444
        %v1723 = vunpack.c.h.b16 %v444
        %v1724 = vunpack.c.l.b16 %v445
        %v1725 = vunpack.c.h.b16 %v445
        %v1726 = vunpack.c.l.b16 %v446
        %v1727 = vunpack.c.h.b16 %v446
        %v1728 = vunpack.c.l.b16 %v447
        %v1729 = vunpack.c.h.b16 %v447
        %v1730 = vunpack.c.l.b16 %v448
        %v1731 = vunpack.c.h.b16 %v448
        %v1732 = vunpack.c.l.b16 %v449
        %v1733 = vunpack.c.h.b16 %v449
        %v1734 = vunpack.c.l.b16 %v450
        %v1735 = vunpack.c.h.b16 %v450
        %v1736 = vunpack.c.l.b16 %v451
        %v1737 = vunpack.c.h.b16 %v451
        %v1738 = vunpack.c.l.b16 %v452
        %v1739 = vunpack.c.h.b16 %v452
        %v1740 = vunpack.c.l.b16 %v453
        %v1741 = vunpack.c.h.b16 %v453
        %v1742 = vunpack.c.l.b16 %v454
        %v1743 = vunpack.c.h.b16 %v454
        %v1744 = vunpack.c.l.b16 %v455
        %v1745 = vunpack.c.h.b16 %v455
        %v1746 = vunpack.c.l.b16 %v456
        %v1747 = vunpack.c.h.b16 %v456
        %v1748 = vunpack.c.l.b16 %v457
        %v1749 = vunpack.c.h.b16 %v457
        %v1750 = vunpack.c.l.b16 %v458
        %v1751 = vunpack.c.h.b16 %v458
        %v1752 = vunpack.c.l.b16 %v459
        %v1753 = vunpack.c.h.b16 %v459
        %v1754 = vunpack.c.l.b16 %v460
        %v1755 = vunpack.c.h.b16 %v460
        %v1756 = vunpack.c.l.b16 %v461
        %v1757 = vunpack.c.h.b16 %v461
        %v1758 = vunpack.c.l.b16 %v462
        %v1759 = vunpack.c.h.b16 %v462
        %v1760 = vunpack.c.l.b16 %v463
        %v1761 = vunpack.c.h.b16 %v463
        %v1762 = vunpack.c.l.b16 %v464
        %v1763 = vunpack.c.h.b16 %v464
        %v1764 = vunpack.c.l.b16 %v465
        %v1765 = vunpack.c.h.b16 %v465
        %v1766 = vunpack.c.l.b16 %v466
        %v1767 = vunpack.c.h.b16 %v466
        %v1768 = vunpack.c.l.b16 %v467
        %v1769 = vunpack.c.h.b16 %v467
        %v1770 = vunpack.c.l.b16 %v468
        %v1771 = vunpack.c.h.b16 %v468
        %v1772 = vunpack.c.l.b16 %v469
        %v1773 = vunpack.c.h.b16 %v469
        %v1774 = vunpack.c.l.b16 %v470
        %v1775 = vunpack.c.h.b16 %v470
        %v1776 = vunpack.c.l.b16 %v471
        %v1777 = vunpack.c.h.b16 %v471
        %v1778 = vunpack.c.l.b16 %v472
        %v1779 = vunpack.c.h.b16 %v472
        %v1780 = vunpack.c.l.b16 %v473
        %v1781 = vunpack.c.h.b16 %v473
        %v1782 = vunpack.c.l.b16 %v474
        %v1783 = vunpack.c.h.b16 %v474
        %v1784 = vunpack.c.l.b16 %v475
        %v1785 = vunpack.c.h.b16 %v475
        %v1786 = vunpack.c.l.b16 %v476
        %v1787 = vunpack.c.h.b16 %v476
        %v1788 = vunpack.c.l.b16 %v477
        %v1789 = vunpack.c.h.b16 %v477
        %v1790 = vunpack.c.l.b16 %v478
        %v1791 = vunpack.c.h.b16 %v478
        %v1792 = vunpack.c.l.b16 %v479
        %v1793 = vunpack.c.h.b16 %v479
        %v1794 = vunpack.c.l.b16 %v480
        %v1795 = vunpack.c.h.b16 %v480
        %v1796 = vunpack.c.l.b16 %v481
        %v1797 = vunpack.c.h.b16 %v481
        %v1798 = vunpack.c.l.b16 %v482
        %v1799 = vunpack.c.h.b16 %v482
        %v1800 = vunpack.c.l.b16 %v483
        %v1801 = vunpack.c.h.b16 %v483
        %v1802 = vunpack.c.l.b16 %v484
        %v1803 = vunpack.c.h.b16 %v484
        %v1804 = vunpack.c.l.b16 %v485
        %v1805 = vunpack.c.h.b16 %v485
        %v1806 = vunpack.c.l.b16 %v486
        %v1807 = vunpack.c.h.b16 %v486
        %v1808 = vunpack.c.l.b16 %v487
        %v1809 = vunpack.c.h.b16 %v487
        %v1810 = vunpack.c.l.b16 %v488
        %v1811 = vunpack.c.h.b16 %v488
        %v1812 = vunpack.c.l.b16 %v489
        %v1813 = vunpack.c.h.b16 %v489
        %v1814 = vunpack.c.l.b16 %v490
        %v1815 = vunpack.c.h.b16 %v490
        %v1816 = vunpack.c.l.b16 %v491
        %v1817 = vunpack.c.h.b16 %v491
        %v1818 = vunpack.c.l.b16 %v492
        %v1819 = vunpack.c.h.b16 %v492
        %v1820 = vunpack.c.l.b16 %v493
        %v1821 = vunpack.c.h.b16 %v493
        %v1822 = vunpack.c.l.b16 %v494
        %v1823 = vunpack.c.h.b16 %v494
        %v1824 = vunpack.c.l.b16 %v495
        %v1825 = vunpack.c.h.b16 %v495
        %v1826 = vunpack.c.l.b16 %v496
        %v1827 = vunpack.c.h.b16 %v496
        %v1828 = vunpack.c.l.b16 %v497
        %v1829 = vunpack.c.h.b16 %v497
        %v1830 = vunpack.c.l.b16 %v498
        %v1831 = vunpack.c.h.b16 %v498
        %v1832 = vunpack.c.l.b16 %v499
        %v1833 = vunpack.c.h.b16 %v499
        %v1834 = vunpack.c.l.b16 %v500
        %v1835 = vunpack.c.h.b16 %v500
        %v1836 = vunpack.c.l.b16 %v501
        %v1837 = vunpack.c.h.b16 %v501
        %v1838 = vunpack.c.l.b16 %v502
        %v1839 = vunpack.c.h.b16 %v502
        %v1840 = vunpack.c.l.b16 %v503
        %v1841 = vunpack.c.h.b16 %v503
        %v1842 = vunpack.c.l.b16 %v504
        %v1843 = vunpack.c.h.b16 %v504
        %v1844 = vunpack.c.l.b16 %v505
        %v1845 = vunpack.c.h.b16 %v505
        %v1846 = vunpack.c.l.b16 %v506
        %v1847 = vunpack.c.h.b16 %v506
        %v1848 = vunpack.c.l.b16 %v507
        %v1849 = vunpack.c.h.b16 %v507
        %v1850 = vunpack.c.l.b16 %v508
        %v1851 = vunpack.c.h.b16 %v508
        %v1852 = vunpack.c.l.b16 %v509
        %v1853 = vunpack.c.h.b16 %v509
        %v1854 = vunpack.c.l.b16 %v510
        %v1855 = vunpack.c.h.b16 %v510
        %v1856 = vunpack.c.l.b16 %v511
        %v1857 = vunpack.c.h.b16 %v511
        %v1858 = vunpack.c.l.b16 %v512
        %v1859 = vunpack.c.h.b16 %v512
        %v1860 = vunpack.c.l.b16 %v513
        %v1861 = vunpack.c.h.b16 %v513
        %v1862 = vunpack.c.l.b16 %v514
        %v1863 = vunpack.c.h.b16 %v514
        %v1864 = vunpack.c.l.b16 %v515
        %v1865 = vunpack.c.h.b16 %v515
        %v1866 = vunpack.c.l.b16 %v516
        %v1867 = vunpack.c.h.b16 %v516
        %v1868 = vunpack.c.l.b16 %v517
        %v1869 = vunpack.c.h.b16 %v517
        %v1870 = vunpack.c.l.b16 %v518
        %v1871 = vunpack.c.h.b16 %v518
        %v1872 = vunpack.c.l.b16 %v519
        %v1873 = vunpack.c.h.b16 %v519
        %v1874 = vunpack.c.l.b16 %v520
        %v1875 = vunpack.c.h.b16 %v520
        %v1876 = vunpack.c.l.b16 %v521
        %v1877 = vunpack.c.h.b16 %v521
        %v1878 = vunpack.c.l.b16 %v522
        %v1879 = vunpack.c.h.b16 %v522
        %v1880 = vunpack.c.l.b16 %v523
        %v1881 = vunpack.c.h.b16 %v523
        %v1882 = vunpack.c.l.b16 %v524
        %v1883 = vunpack.c.h.b16 %v524
        %v1884 = vunpack.c.l.b16 %v525
        %v1885 = vunpack.c.h.b16 %v525
        %v1886 = vunpack.c.l.b16 %v526
        %v1887 = vunpack.c.h.b16 %v526
        %v1888 = vunpack.c.l.b16 %v527
        %v1889 = vunpack.c.h.b16 %v527
        %v1890 = vunpack.c.l.b16 %v528
        %v1891 = vunpack.c.h.b16 %v528
        %v1892 = vunpack.c.l.b16 %v529
        %v1893 = vunpack.c.h.b16 %v529
        %v1894 = vunpack.c.l.b16 %v530
        %v1895 = vunpack.c.h.b16 %v530
        %v1896 = vunpack.c.l.b16 %v531
        %v1897 = vunpack.c.h.b16 %v531
        %v1898 = vunpack.c.l.b16 %v532
        %v1899 = vunpack.c.h.b16 %v532
        %v1900 = vunpack.c.l.b16 %v533
        %v1901 = vunpack.c.h.b16 %v533
        %v1902 = vunpack.c.l.b16 %v534
        %v1903 = vunpack.c.h.b16 %v534
        %v1904 = vunpack.c.l.b16 %v535
        %v1905 = vunpack.c.h.b16 %v535
        %v1906 = vunpack.c.l.b16 %v536
        %v1907 = vunpack.c.h.b16 %v536
        %v1908 = vunpack.c.l.b16 %v537
        %v1909 = vunpack.c.h.b16 %v537
        %v1910 = vunpack.c.l.b16 %v538
        %v1911 = vunpack.c.h.b16 %v538
        %v1912 = vunpack.c.l.b16 %v539
        %v1913 = vunpack.c.h.b16 %v539
        %v1914 = vunpack.c.l.b16 %v540
        %v1915 = vunpack.c.h.b16 %v540
        %v1916 = vunpack.c.l.b16 %v541
        %v1917 = vunpack.c.h.b16 %v541
        %v1918 = vunpack.c.l.b16 %v542
        %v1919 = vunpack.c.h.b16 %v542
        %v1920 = vunpack.c.l.b16 %v543
        %v1921 = vunpack.c.h.b16 %v543
        %v1922 = vunpack.c.l.b16 %v544
        %v1923 = vunpack.c.h.b16 %v544
        %v1924 = vunpack.c.l.b16 %v545
        %v1925 = vunpack.c.h.b16 %v545
        %v1926 = vunpack.c.l.b16 %v546
        %v1927 = vunpack.c.h.b16 %v546
        %v1928 = vunpack.c.l.b16 %v547
        %v1929 = vunpack.c.h.b16 %v547
        %v1930 = vunpack.c.l.b16 %v548
        %v1931 = vunpack.c.h.b16 %v548
        %v1932 = vunpack.c.l.b16 %v549
        %v1933 = vunpack.c.h.b16 %v549
        %v1934 = vunpack.c.l.b16 %v550
        %v1935 = vunpack.c.h.b16 %v550
        %v1936 = vunpack.c.l.b16 %v551
        %v1937 = vunpack.c.h.b16 %v551
        %v1938 = vunpack.c.l.b16 %v552
        %v1939 = vunpack.c.h.b16 %v552
        %v1940 = vunpack.c.l.b16 %v553
        %v1941 = vunpack.c.h.b16 %v553
        %v1942 = vunpack.c.l.b16 %v554
        %v1943 = vunpack.c.h.b16 %v554
        %v1944 = vunpack.c.l.b16 %v555
        %v1945 = vunpack.c.h.b16 %v555
        %v1946 = vunpack.c.l.b16 %v556
        %v1947 = vunpack.c.h.b16 %v556
        %v1948 = vunpack.c.l.b16 %v557
        %v1949 = vunpack.c.h.b16 %v557
        %v1950 = vunpack.c.l.b16 %v558
        %v1951 = vunpack.c.h.b16 %v558
        %v1952 = vunpack.c.l.b16 %v559
        %v1953 = vunpack.c.h.b16 %v559
        %v1954 = vunpack.c.l.b16 %v560
        %v1955 = vunpack.c.h.b16 %v560
        %v1956 = vunpack.c.l.b16 %v561
        %v1957 = vunpack.c.h.b16 %v561
        %v1958 = vunpack.c.l.b16 %v562
        %v1959 = vunpack.c.h.b16 %v562
        %v1960 = vunpack.c.l.b16 %v563
        %v1961 = vunpack.c.h.b16 %v563
        %v1962 = vunpack.c.l.b16 %v564
        %v1963 = vunpack.c.h.b16 %v564
        %v1964 = vunpack.c.l.b16 %v565
        %v1965 = vunpack.c.h.b16 %v565
        %v1966 = vunpack.c.l.b16 %v566
        %v1967 = vunpack.c.h.b16 %v566
        %v1968 = vunpack.c.l.b16 %v567
        %v1969 = vunpack.c.h.b16 %v567
        %v1970 = vunpack.c.l.b16 %v568
        %v1971 = vunpack.c.h.b16 %v568
        %v1972 = vunpack.c.l.b16 %v569
        %v1973 = vunpack.c.h.b16 %v569
        %v1974 = vunpack.c.l.b16 %v570
        %v1975 = vunpack.c.h.b16 %v570
        %v1976 = vunpack.c.l.b16 %v571
        %v1977 = vunpack.c.h.b16 %v571
        %v1978 = vunpack.c.l.b16 %v572
        %v1979 = vunpack.c.h.b16 %v572
        %v1980 = vunpack.c.l.b16 %v573
        %v1981 = vunpack.c.h.b16 %v573
        %v1982 = vunpack.c.l.b16 %v574
        %v1983 = vunpack.c.h.b16 %v574
        %v1984 = vunpack.c.l.b16 %v575
        %v1985 = vunpack.c.h.b16 %v575
        %v1986 = vunpack.c.l.b16 %v576
        %v1987 = vunpack.c.h.b16 %v576
        %v1988 = vunpack.c.l.b16 %v577
        %v1989 = vunpack.c.h.b16 %v577
        %v1990 = vunpack.c.l.b16 %v578
        %v1991 = vunpack.c.h.b16 %v578
        %v1992 = vunpack.c.l.b16 %v579
        %v1993 = vunpack.c.h.b16 %v579
        %v1994 = vunpack.c.l.b16 %v580
        %v1995 = vunpack.c.h.b16 %v580
        %v1996 = vunpack.c.l.b16 %v581
        %v1997 = vunpack.c.h.b16 %v581
        %v1998 = vunpack.c.l.b16 %v582
        %v1999 = vunpack.c.h.b16 %v582
        %v2000 = vunpack.c.l.b16 %v583
        %v2001 = vunpack.c.h.b16 %v583
        %v2002 = vunpack.c.l.b16 %v584
        %v2003 = vunpack.c.h.b16 %v584
        %v2004 = vunpack.c.l.b16 %v585
        %v2005 = vunpack.c.h.b16 %v585
        %v2006 = vunpack.c.l.b16 %v586
        %v2007 = vunpack.c.h.b16 %v586
        %v2008 = vunpack.c.l.b16 %v587
        %v2009 = vunpack.c.h.b16 %v587
        %v2010 = vunpack.c.l.b16 %v588
        %v2011 = vunpack.c.h.b16 %v588
        %v2012 = vunpack.c.l.b16 %v589
        %v2013 = vunpack.c.h.b16 %v589
        %v2014 = vunpack.c.l.b16 %v590
        %v2015 = vunpack.c.h.b16 %v590
        %v2016 = vunpack.c.l.b16 %v591
        %v2017 = vunpack.c.h.b16 %v591
        %v2018 = vunpack.c.l.b16 %v592
        %v2019 = vunpack.c.h.b16 %v592
        %v2020 = vunpack.c.l.b16 %v593
        %v2021 = vunpack.c.h.b16 %v593
        %v2022 = vunpack.c.l.b16 %v594
        %v2023 = vunpack.c.h.b16 %v594
        %v2024 = vunpack.c.l.b16 %v595
        %v2025 = vunpack.c.h.b16 %v595
        %v2026 = vunpack.c.l.b16 %v596
        %v2027 = vunpack.c.h.b16 %v596
        %v2028 = vunpack.c.l.b16 %v597
        %v2029 = vunpack.c.h.b16 %v597
        %v2030 = vunpack.c.l.b16 %v598
        %v2031 = vunpack.c.h.b16 %v598
        %v2032 = vunpack.c.l.b16 %v599
        %v2033 = vunpack.c.h.b16 %v599
        %v2034 = vunpack.c.l.b16 %v600
        %v2035 = vunpack.c.h.b16 %v600
        %v2036 = vunpack.c.l.b16 %v601
        %v2037 = vunpack.c.h.b16 %v601
        %v2038 = vunpack.c.l.b16 %v602
        %v2039 = vunpack.c.h.b16 %v602
        %v2040 = vunpack.c.l.b16 %v603
        %v2041 = vunpack.c.h.b16 %v603
        %v2042 = vunpack.c.l.b16 %v604
        %v2043 = vunpack.c.h.b16 %v604
        %v2044 = vunpack.c.l.b16 %v605
        %v2045 = vunpack.c.h.b16 %v605
        %v2046 = vunpack.c.l.b16 %v606
        %v2047 = vunpack.c.h.b16 %v606
        %v2048 = vunpack.c.l.b16 %v607
        %v2049 = vunpack.c.h.b16 %v607
        %v2050 = vunpack.c.l.b16 %v608
        %v2051 = vunpack.c.h.b16 %v608
        %v2052 = vunpack.c.l.b16 %v609
        %v2053 = vunpack.c.h.b16 %v609
        %v2054 = vunpack.c.l.b16 %v610
        %v2055 = vunpack.c.h.b16 %v610
        %v2056 = vunpack.c.l.b16 %v611
        %v2057 = vunpack.c.h.b16 %v611
        %v2058 = vunpack.c.l.b16 %v612
        %v2059 = vunpack.c.h.b16 %v612
        %v2060 = vunpack.c.l.b16 %v613
        %v2061 = vunpack.c.h.b16 %v613
        %v2062 = vunpack.c.l.b16 %v614
        %v2063 = vunpack.c.h.b16 %v614
        %v2064 = vunpack.c.l.b16 %v615
        %v2065 = vunpack.c.h.b16 %v615
        %v2066 = vunpack.c.l.b16 %v616
        %v2067 = vunpack.c.h.b16 %v616
        %v2068 = vunpack.c.l.b16 %v617
        %v2069 = vunpack.c.h.b16 %v617
        %v2070 = vunpack.c.l.b16 %v618
        %v2071 = vunpack.c.h.b16 %v618
        %v2072 = vunpack.c.l.b16 %v619
        %v2073 = vunpack.c.h.b16 %v619
        %v2074 = vunpack.c.l.b16 %v620
        %v2075 = vunpack.c.h.b16 %v620
        %v2076 = vunpack.c.l.b16 %v621
        %v2077 = vunpack.c.h.b16 %v621
        %v2078 = vunpack.c.l.b16 %v622
        %v2079 = vunpack.c.h.b16 %v622
        %v2080 = vunpack.c.l.b16 %v623
        %v2081 = vunpack.c.h.b16 %v623
        %v2082 = vunpack.c.l.b16 %v624
        %v2083 = vunpack.c.h.b16 %v624
        %v2084 = vunpack.c.l.b16 %v625
        %v2085 = vunpack.c.h.b16 %v625
        %v2086 = vunpack.c.l.b16 %v626
        %v2087 = vunpack.c.h.b16 %v626
        %v2088 = vunpack.c.l.b16 %v627
        %v2089 = vunpack.c.h.b16 %v627
        %v2090 = vunpack.c.l.b16 %v628
        %v2091 = vunpack.c.h.b16 %v628
        %v2092 = vunpack.c.l.b16 %v629
        %v2093 = vunpack.c.h.b16 %v629
        %v2094 = vunpack.c.l.b16 %v630
        %v2095 = vunpack.c.h.b16 %v630
        %v2096 = vunpack.c.l.b16 %v631
        %v2097 = vunpack.c.h.b16 %v631
        %v2098 = vunpack.c.l.b16 %v632
        %v2099 = vunpack.c.h.b16 %v632
        %v2100 = vunpack.c.l.b16 %v633
        %v2101 = vunpack.c.h.b16 %v633
        %v2102 = vunpack.c.l.b16 %v634
        %v2103 = vunpack.c.h.b16 %v634
        %v2104 = vunpack.c.l.b16 %v635
        %v2105 = vunpack.c.h.b16 %v635
        %v2106 = vunpack.c.l.b16 %v636
        %v2107 = vunpack.c.h.b16 %v636
        %v2108 = vunpack.c.l.b16 %v637
        %v2109 = vunpack.c.h.b16 %v637
        %v2110 = vunpack.c.l.b16 %v638
        %v2111 = vunpack.c.h.b16 %v638
        %v2112 = vunpack.c.l.b16 %v639
        %v2113 = vunpack.c.h.b16 %v639
        %v2114 = vunpack.c.l.b16 %v640
        %v2115 = vunpack.c.h.b16 %v640
        %v2116 = vunpack.c.l.b16 %v641
        %v2117 = vunpack.c.h.b16 %v641
        %v2118 = vunpack.c.l.b16 %v642
        %v2119 = vunpack.c.h.b16 %v642
        %v2120 = vunpack.c.l.b16 %v643
        %v2121 = vunpack.c.h.b16 %v643
        %v2122 = vunpack.c.l.b16 %v644
        %v2123 = vunpack.c.h.b16 %v644
        %v2124 = vunpack.c.l.b16 %v645
        %v2125 = vunpack.c.h.b16 %v645
        %v2126 = vunpack.c.l.b16 %v646
        %v2127 = vunpack.c.h.b16 %v646
        %v2128 = vunpack.c.l.b16 %v647
        %v2129 = vunpack.c.h.b16 %v647
        %v2130 = vunpack.c.l.b16 %v648
        %v2131 = vunpack.c.h.b16 %v648
        %v2132 = vunpack.c.l.b16 %v649
        %v2133 = vunpack.c.h.b16 %v649
        %v2134 = vunpack.c.l.b16 %v650
        %v2135 = vunpack.c.h.b16 %v650
        %v2136 = vunpack.c.l.b16 %v651
        %v2137 = vunpack.c.h.b16 %v651
        %v2138 = vunpack.c.l.b16 %v652
        %v2139 = vunpack.c.h.b16 %v652
        %v2140 = vunpack.c.l.b16 %v653
        %v2141 = vunpack.c.h.b16 %v653
        %v2142 = vunpack.c.l.b16 %v654
        %v2143 = vunpack.c.h.b16 %v654
        %v2144 = vunpack.c.l.b16 %v655
        %v2145 = vunpack.c.h.b16 %v655
        %v2146 = vunpack.c.l.b16 %v656
        %v2147 = vunpack.c.h.b16 %v656
        %v2148 = vunpack.c.l.b16 %v657
        %v2149 = vunpack.c.h.b16 %v657
        %v2150 = vunpack.c.l.b16 %v658
        %v2151 = vunpack.c.h.b16 %v658
        %v2152 = vunpack.c.l.b16 %v659
        %v2153 = vunpack.c.h.b16 %v659
        %v2154 = vunpack.c.l.b16 %v660
        %v2155 = vunpack.c.h.b16 %v660
        %v2156 = vunpack.c.l.b16 %v661
        %v2157 = vunpack.c.h.b16 %v661
        %v2158 = vunpack.c.l.b16 %v662
        %v2159 = vunpack.c.h.b16 %v662
        %v2160 = vunpack.c.l.b16 %v663
        %v2161 = vunpack.c.h.b16 %v663
        %v2162 = vunpack.c.l.b16 %v664
        %v2163 = vunpack.c.h.b16 %v664
        %v2164 = vunpack.c.l.b16 %v665
        %v2165 = vunpack.c.h.b16 %v665
        %v2166 = vunpack.c.l.b16 %v666
        %v2167 = vunpack.c.h.b16 %v666
        %v2168 = vunpack.c.l.b16 %v667
        %v2169 = vunpack.c.h.b16 %v667
        %v2170 = vunpack.c.l.b16 %v668
        %v2171 = vunpack.c.h.b16 %v668
        %v2172 = vunpack.c.l.b16 %v669
        %v2173 = vunpack.c.h.b16 %v669
        %v2174 = vunpack.c.l.b16 %v670
        %v2175 = vunpack.c.h.b16 %v670
        %v2176 = vunpack.c.l.b16 %v671
        %v2177 = vunpack.c.h.b16 %v671
        %v2178 = vunpack.c.l.b16 %v672
        %v2179 = vunpack.c.h.b16 %v672
        %v2180 = vunpack.c.l.b16 %v673
        %v2181 = vunpack.c.h.b16 %v673
        %v2182 = vunpack.c.l.b16 %v674
        %v2183 = vunpack.c.h.b16 %v674
        %v2184 = vunpack.c.l.b16 %v675
        %v2185 = vunpack.c.h.b16 %v675
        %v2186 = vunpack.c.l.b16 %v676
        %v2187 = vunpack.c.h.b16 %v676
        %v2188 = vunpack.c.l.b16 %v677
        %v2189 = vunpack.c.h.b16 %v677
        %v2190 = vunpack.c.l.b16 %v678
        %v2191 = vunpack.c.h.b16 %v678
        %v2192 = vunpack.c.l.b16 %v679
        %v2193 = vunpack.c.h.b16 %v679
        %v2194 = vunpack.c.l.b16 %v680
        %v2195 = vunpack.c.h.b16 %v680
        %v2196 = vunpack.c.l.b16 %v681
        %v2197 = vunpack.c.h.b16 %v681
        %v2198 = vunpack.c.l.b16 %v682
        %v2199 = vunpack.c.h.b16 %v682
        %v2200 = vunpack.c.l.b16 %v683
        %v2201 = vunpack.c.h.b16 %v683
        %v2202 = vunpack.c.l.b16 %v684
        %v2203 = vunpack.c.h.b16 %v684
        %v2204 = vunpack.c.l.b16 %v685
        %v2205 = vunpack.c.h.b16 %v685
        %v2206 = vunpack.c.l.b16 %v686
        %v2207 = vunpack.c.h.b16 %v686
        %v2208 = vunpack.c.l.b16 %v687
        %v2209 = vunpack.c.h.b16 %v687
        %v2210 = vunpack.c.l.b16 %v688
        %v2211 = vunpack.c.h.b16 %v688
        %v2212 = vunpack.c.l.b16 %v689
        %v2213 = vunpack.c.h.b16 %v689
        %v2214 = vunpack.c.l.b16 %v690
        %v2215 = vunpack.c.h.b16 %v690
        %v2216 = vunpack.c.l.b16 %v691
        %v2217 = vunpack.c.h.b16 %v691
        %v2218 = vunpack.c.l.b16 %v692
        %v2219 = vunpack.c.h.b16 %v692
        %v2220 = vunpack.c.l.b16 %v693
        %v2221 = vunpack.c.h.b16 %v693
        %v2222 = vunpack.c.l.b16 %v694
        %v2223 = vunpack.c.h.b16 %v694
        %v2224 = vunpack.c.l.b16 %v695
        %v2225 = vunpack.c.h.b16 %v695
        %v2226 = vunpack.c.l.b16 %v696
        %v2227 = vunpack.c.h.b16 %v696
        %v2228 = vunpack.c.l.b16 %v697
        %v2229 = vunpack.c.h.b16 %v697
        %v2230 = vunpack.c.l.b16 %v698
        %v2231 = vunpack.c.h.b16 %v698
        %v2232 = vunpack.c.l.b16 %v699
        %v2233 = vunpack.c.h.b16 %v699
        %v2234 = vunpack.c.l.b16 %v700
        %v2235 = vunpack.c.h.b16 %v700
        %v2236 = vunpack.c.l.b16 %v701
        %v2237 = vunpack.c.h.b16 %v701
        %v2238 = vunpack.c.l.b16 %v702
        %v2239 = vunpack.c.h.b16 %v702
        %v2240 = vunpack.c.l.b16 %v703
        %v2241 = vunpack.c.h.b16 %v703
        %v2242 = vunpack.c.l.b16 %v704
        %v2243 = vunpack.c.h.b16 %v704
        %v2244 = vunpack.c.l.b16 %v705
        %v2245 = vunpack.c.h.b16 %v705
        %v2246 = vunpack.c.l.b16 %v706
        %v2247 = vunpack.c.h.b16 %v706
        %v2248 = vunpack.c.l.b16 %v707
        %v2249 = vunpack.c.h.b16 %v707
        %v2250 = vunpack.c.l.b16 %v708
        %v2251 = vunpack.c.h.b16 %v708
        %v2252 = vunpack.c.l.b16 %v709
        %v2253 = vunpack.c.h.b16 %v709
        %v2254 = vunpack.c.l.b16 %v710
        %v2255 = vunpack.c.h.b16 %v710
        %v2256 = vunpack.c.l.b16 %v711
        %v2257 = vunpack.c.h.b16 %v711
        %v2258 = vunpack.c.l.b16 %v712
        %v2259 = vunpack.c.h.b16 %v712
        %v2260 = vunpack.c.l.b16 %v713
        %v2261 = vunpack.c.h.b16 %v713
        %v2262 = vunpack.c.l.b16 %v714
        %v2263 = vunpack.c.h.b16 %v714
        %v2264 = vunpack.c.l.b16 %v715
        %v2265 = vunpack.c.h.b16 %v715
        %v2266 = vunpack.c.l.b16 %v716
        %v2267 = vunpack.c.h.b16 %v716
        %v2268 = vunpack.c.l.b16 %v717
        %v2269 = vunpack.c.h.b16 %v717
        %v2270 = vunpack.c.l.b16 %v718
        %v2271 = vunpack.c.h.b16 %v718
        %v2272 = vunpack.c.l.b16 %v719
        %v2273 = vunpack.c.h.b16 %v719
        %v2274 = vunpack.c.l.b16 %v720
        %v2275 = vunpack.c.h.b16 %v720
        %v2276 = vunpack.c.l.b16 %v721
        %v2277 = vunpack.c.h.b16 %v721
        %v2278 = vunpack.c.l.b16 %v722
        %v2279 = vunpack.c.h.b16 %v722
        %v2280 = vunpack.c.l.b16 %v723
        %v2281 = vunpack.c.h.b16 %v723
        %v2282 = vunpack.c.l.b16 %v724
        %v2283 = vunpack.c.h.b16 %v724
        %v2284 = vunpack.c.l.b16 %v725
        %v2285 = vunpack.c.h.b16 %v725
        %v2286 = vunpack.c.l.b16 %v726
        %v2287 = vunpack.c.h.b16 %v726
        %v2288 = vunpack.c.l.b16 %v727
        %v2289 = vunpack.c.h.b16 %v727
        %v2290 = vunpack.c.l.b16 %v728
        %v2291 = vunpack.c.h.b16 %v728
        %v2292 = vunpack.c.l.b16 %v729
        %v2293 = vunpack.c.h.b16 %v729
        %v2294 = vunpack.c.l.b16 %v730
        %v2295 = vunpack.c.h.b16 %v730
        %v2296 = vunpack.c.l.b16 %v731
        %v2297 = vunpack.c.h.b16 %v731
        %v2298 = vunpack.c.l.b16 %v732
        %v2299 = vunpack.c.h.b16 %v732
        %v2300 = vunpack.c.l.b16 %v733
        %v2301 = vunpack.c.h.b16 %v733
        %v2302 = vunpack.c.l.b16 %v734
        %v2303 = vunpack.c.h.b16 %v734
        %v2304 = vunpack.c.l.b16 %v735
        %v2305 = vunpack.c.h.b16 %v735
        %v2306 = vunpack.c.l.b16 %v736
        %v2307 = vunpack.c.h.b16 %v736
        %v2308 = vunpack.c.l.b16 %v737
        %v2309 = vunpack.c.h.b16 %v737
        %v2310 = vunpack.c.l.b16 %v738
        %v2311 = vunpack.c.h.b16 %v738
        %v2312 = vunpack.c.l.b16 %v739
        %v2313 = vunpack.c.h.b16 %v739
        %v2314 = vunpack.c.l.b16 %v740
        %v2315 = vunpack.c.h.b16 %v740
        %v2316 = vunpack.c.l.b16 %v741
        %v2317 = vunpack.c.h.b16 %v741
        %v2318 = vpack.c.b16 %v1302, %v1294
        %v2319 = vpack.c.b16 %v1303, %v1295
        %v2320 = vpack.c.b16 %v1304, %v1296
        %v2321 = vpack.c.b16 %v1305, %v1297
        %v2322 = vpack.c.b16 %v1306, %v1298
        %v2323 = vpack.c.b16 %v1307, %v1299
        %v2324 = vpack.c.b16 %v1308, %v1300
        %v2325 = vpack.c.b16 %v1309, %v1301
        %v2326 = vpack.c.b16 %v1318, %v1310
        %v2327 = vpack.c.b16 %v1319, %v1311
        %v2328 = vpack.c.b16 %v1320, %v1312
        %v2329 = vpack.c.b16 %v1321, %v1313
        %v2330 = vpack.c.b16 %v1322, %v1314
        %v2331 = vpack.c.b16 %v1323, %v1315
        %v2332 = vpack.c.b16 %v1324, %v1316
        %v2333 = vpack.c.b16 %v1325, %v1317
        %v2334 = vpack.c.b16 %v1334, %v1326
        %v2335 = vpack.c.b16 %v1335, %v1327
        %v2336 = vpack.c.b16 %v1336, %v1328
        %v2337 = vpack.c.b16 %v1337, %v1329
        %v2338 = vpack.c.b16 %v1338, %v1330
        %v2339 = vpack.c.b16 %v1339, %v1331
        %v2340 = vpack.c.b16 %v1340, %v1332
        %v2341 = vpack.c.b16 %v1341, %v1333
        %v2342 = vpack.c.b16 %v1350, %v1342
        %v2343 = vpack.c.b16 %v1351, %v1343
        %v2344 = vpack.c.b16 %v1352, %v1344
        %v2345 = vpack.c.b16 %v1353, %v1345
        %v2346 = vpack.c.b16 %v1354, %v1346
        %v2347 = vpack.c.b16 %v1355, %v1347
        %v2348 = vpack.c.b16 %v1356, %v1348
        %v2349 = vpack.c.b16 %v1357, %v1349
        %v2350 = vpack.c.b16 %v1366, %v1358
        %v2351 = vpack.c.b16 %v1367, %v1359
        %v2352 = vpack.c.b16 %v1368, %v1360
        %v2353 = vpack.c.b16 %v1369, %v1361
        %v2354 = vpack.c.b16 %v1370, %v1362
        %v2355 = vpack.c.b16 %v1371, %v1363
        %v2356 = vpack.c.b16 %v1372, %v1364
        %v2357 = vpack.c.b16 %v1373, %v1365
        %v2358 = vpack.c.b16 %v1382, %v1374
        %v2359 = vpack.c.b16 %v1383, %v1375
        %v2360 = vpack.c.b16 %v1384, %v1376
        %v2361 = vpack.c.b16 %v1385, %v1377
        %v2362 = vpack.c.b16 %v1386, %v1378
        %v2363 = vpack.c.b16 %v1387, %v1379
        %v2364 = vpack.c.b16 %v1388, %v1380
        %v2365 = vpack.c.b16 %v1389, %v1381
        %v2366 = vpack.c.b16 %v1398, %v1390
        %v2367 = vpack.c.b16 %v1399, %v1391
        %v2368 = vpack.c.b16 %v1400, %v1392
        %v2369 = vpack.c.b16 %v1401, %v1393
        %v2370 = vpack.c.b16 %v1402, %v1394
        %v2371 = vpack.c.b16 %v1403, %v1395
        %v2372 = vpack.c.b16 %v1404, %v1396
        %v2373 = vpack.c.b16 %v1405, %v1397
        %v2374 = vpack.c.b16 %v1414, %v1406
        %v2375 = vpack.c.b16 %v1415, %v1407
        %v2376 = vpack.c.b16 %v1416, %v1408
        %v2377 = vpack.c.b16 %v1417, %v1409
        %v2378 = vpack.c.b16 %v1418, %v1410
        %v2379 = vpack.c.b16 %v1419, %v1411
        %v2380 = vpack.c.b16 %v1420, %v1412
        %v2381 = vpack.c.b16 %v1421, %v1413
        %v2382 = vpack.c.b16 %v1430, %v1422
        %v2383 = vpack.c.b16 %v1431, %v1423
        %v2384 = vpack.c.b16 %v1432, %v1424
        %v2385 = vpack.c.b16 %v1433, %v1425
        %v2386 = vpack.c.b16 %v1434, %v1426
        %v2387 = vpack.c.b16 %v1435, %v1427
        %v2388 = vpack.c.b16 %v1436, %v1428
        %v2389 = vpack.c.b16 %v1437, %v1429
        %v2390 = vpack.c.b16 %v1446, %v1438
        %v2391 = vpack.c.b16 %v1447, %v1439
        %v2392 = vpack.c.b16 %v1448, %v1440
        %v2393 = vpack.c.b16 %v1449, %v1441
        %v2394 = vpack.c.b16 %v1450, %v1442
        %v2395 = vpack.c.b16 %v1451, %v1443
        %v2396 = vpack.c.b16 %v1452, %v1444
        %v2397 = vpack.c.b16 %v1453, %v1445
        %v2398 = vpack.c.b16 %v1462, %v1454
        %v2399 = vpack.c.b16 %v1463, %v1455
        %v2400 = vpack.c.b16 %v1464, %v1456
        %v2401 = vpack.c.b16 %v1465, %v1457
        %v2402 = vpack.c.b16 %v1466, %v1458
        %v2403 = vpack.c.b16 %v1467, %v1459
        %v2404 = vpack.c.b16 %v1468, %v1460
        %v2405 = vpack.c.b16 %v1469, %v1461
        %v2406 = vpack.c.b16 %v1478, %v1470
        %v2407 = vpack.c.b16 %v1479, %v1471
        %v2408 = vpack.c.b16 %v1480, %v1472
        %v2409 = vpack.c.b16 %v1481, %v1473
        %v2410 = vpack.c.b16 %v1482, %v1474
        %v2411 = vpack.c.b16 %v1483, %v1475
        %v2412 = vpack.c.b16 %v1484, %v1476
        %v2413 = vpack.c.b16 %v1485, %v1477
        %v2414 = vpack.c.b16 %v1494, %v1486
        %v2415 = vpack.c.b16 %v1495, %v1487
        %v2416 = vpack.c.b16 %v1496, %v1488
        %v2417 = vpack.c.b16 %v1497, %v1489
        %v2418 = vpack.c.b16 %v1498, %v1490
        %v2419 = vpack.c.b16 %v1499, %v1491
        %v2420 = vpack.c.b16 %v1500, %v1492
        %v2421 = vpack.c.b16 %v1501, %v1493
        %v2422 = vpack.c.b16 %v1510, %v1502
        %v2423 = vpack.c.b16 %v1511, %v1503
        %v2424 = vpack.c.b16 %v1512, %v1504
        %v2425 = vpack.c.b16 %v1513, %v1505
        %v2426 = vpack.c.b16 %v1514, %v1506
        %v2427 = vpack.c.b16 %v1515, %v1507
        %v2428 = vpack.c.b16 %v1516, %v1508
        %v2429 = vpack.c.b16 %v1517, %v1509
        %v2430 = vpack.c.b16 %v1526, %v1518
        %v2431 = vpack.c.b16 %v1527, %v1519
        %v2432 = vpack.c.b16 %v1528, %v1520
        %v2433 = vpack.c.b16 %v1529, %v1521
        %v2434 = vpack.c.b16 %v1530, %v1522
        %v2435 = vpack.c.b16 %v1531, %v1523
        %v2436 = vpack.c.b16 %v1532, %v1524
        %v2437 = vpack.c.b16 %v1533, %v1525
        %v2438 = vpack.c.b16 %v1542, %v1534
        %v2439 = vpack.c.b16 %v1543, %v1535
        %v2440 = vpack.c.b16 %v1544, %v1536
        %v2441 = vpack.c.b16 %v1545, %v1537
        %v2442 = vpack.c.b16 %v1546, %v1538
        %v2443 = vpack.c.b16 %v1547, %v1539
        %v2444 = vpack.c.b16 %v1548, %v1540
        %v2445 = vpack.c.b16 %v1549, %v1541
        %v2446 = vpack.c.b16 %v1558, %v1550
        %v2447 = vpack.c.b16 %v1559, %v1551
        %v2448 = vpack.c.b16 %v1560, %v1552
        %v2449 = vpack.c.b16 %v1561, %v1553
        %v2450 = vpack.c.b16 %v1562, %v1554
        %v2451 = vpack.c.b16 %v1563, %v1555
        %v2452 = vpack.c.b16 %v1564, %v1556
        %v2453 = vpack.c.b16 %v1565, %v1557
        %v2454 = vpack.c.b16 %v1574, %v1566
        %v2455 = vpack.c.b16 %v1575, %v1567
        %v2456 = vpack.c.b16 %v1576, %v1568
        %v2457 = vpack.c.b16 %v1577, %v1569
        %v2458 = vpack.c.b16 %v1578, %v1570
        %v2459 = vpack.c.b16 %v1579, %v1571
        %v2460 = vpack.c.b16 %v1580, %v1572
        %v2461 = vpack.c.b16 %v1581, %v1573
        %v2462 = vpack.c.b16 %v1590, %v1582
        %v2463 = vpack.c.b16 %v1591, %v1583
        %v2464 = vpack.c.b16 %v1592, %v1584
        %v2465 = vpack.c.b16 %v1593, %v1585
        %v2466 = vpack.c.b16 %v1594, %v1586
        %v2467 = vpack.c.b16 %v1595, %v1587
        %v2468 = vpack.c.b16 %v1596, %v1588
        %v2469 = vpack.c.b16 %v1597, %v1589
        %v2470 = vpack.c.b16 %v1606, %v1598
        %v2471 = vpack.c.b16 %v1607, %v1599
        %v2472 = vpack.c.b16 %v1608, %v1600
        %v2473 = vpack.c.b16 %v1609, %v1601
        %v2474 = vpack.c.b16 %v1610, %v1602
        %v2475 = vpack.c.b16 %v1611, %v1603
        %v2476 = vpack.c.b16 %v1612, %v1604
        %v2477 = vpack.c.b16 %v1613, %v1605
        %v2478 = vpack.c.b16 %v1622, %v1614
        %v2479 = vpack.c.b16 %v1623, %v1615
        %v2480 = vpack.c.b16 %v1624, %v1616
        %v2481 = vpack.c.b16 %v1625, %v1617
        %v2482 = vpack.c.b16 %v1626, %v1618
        %v2483 = vpack.c.b16 %v1627, %v1619
        %v2484 = vpack.c.b16 %v1628, %v1620
        %v2485 = vpack.c.b16 %v1629, %v1621
        %v2486 = vpack.c.b16 %v1638, %v1630
        %v2487 = vpack.c.b16 %v1639, %v1631
        %v2488 = vpack.c.b16 %v1640, %v1632
        %v2489 = vpack.c.b16 %v1641, %v1633
        %v2490 = vpack.c.b16 %v1642, %v1634
        %v2491 = vpack.c.b16 %v1643, %v1635
        %v2492 = vpack.c.b16 %v1644, %v1636
        %v2493 = vpack.c.b16 %v1645, %v1637
        %v2494 = vpack.c.b16 %v1654, %v1646
        %v2495 = vpack.c.b16 %v1655, %v1647
        %v2496 = vpack.c.b16 %v1656, %v1648
        %v2497 = vpack.c.b16 %v1657, %v1649
        %v2498 = vpack.c.b16 %v1658, %v1650
        %v2499 = vpack.c.b16 %v1659, %v1651
        %v2500 = vpack.c.b16 %v1660, %v1652
        %v2501 = vpack.c.b16 %v1661, %v1653
        %v2502 = vpack.c.b16 %v1670, %v1662
        %v2503 = vpack.c.b16 %v1671, %v1663
        %v2504 = vpack.c.b16 %v1672, %v1664
        %v2505 = vpack.c.b16 %v1673, %v1665
        %v2506 = vpack.c.b16 %v1674, %v1666
        %v2507 = vpack.c.b16 %v1675, %v1667
        %v2508 = vpack.c.b16 %v1676, %v1668
        %v2509 = vpack.c.b16 %v1677, %v1669
        %v2510 = vpack.c.b16 %v1686, %v1678
        %v2511 = vpack.c.b16 %v1687, %v1679
        %v2512 = vpack.c.b16 %v1688, %v1680
        %v2513 = vpack.c.b16 %v1689, %v1681
        %v2514 = vpack.c.b16 %v1690, %v1682
        %v2515 = vpack.c.b16 %v1691, %v1683
        %v2516 = vpack.c.b16 %v1692, %v1684
        %v2517 = vpack.c.b16 %v1693, %v1685
        %v2518 = vpack.c.b16 %v1702, %v1694
        %v2519 = vpack.c.b16 %v1703, %v1695
        %v2520 = vpack.c.b16 %v1704, %v1696
        %v2521 = vpack.c.b16 %v1705, %v1697
        %v2522 = vpack.c.b16 %v1706, %v1698
        %v2523 = vpack.c.b16 %v1707, %v1699
        %v2524 = vpack.c.b16 %v1708, %v1700
        %v2525 = vpack.c.b16 %v1709, %v1701
        %v2526 = vpack.c.b16 %v1718, %v1710
        %v2527 = vpack.c.b16 %v1719, %v1711
        %v2528 = vpack.c.b16 %v1720, %v1712
        %v2529 = vpack.c.b16 %v1721, %v1713
        %v2530 = vpack.c.b16 %v1722, %v1714
        %v2531 = vpack.c.b16 %v1723, %v1715
        %v2532 = vpack.c.b16 %v1724, %v1716
        %v2533 = vpack.c.b16 %v1725, %v1717
        %v2534 = vpack.c.b16 %v1734, %v1726
        %v2535 = vpack.c.b16 %v1735, %v1727
        %v2536 = vpack.c.b16 %v1736, %v1728
        %v2537 = vpack.c.b16 %v1737, %v1729
        %v2538 = vpack.c.b16 %v1738, %v1730
        %v2539 = vpack.c.b16 %v1739, %v1731
        %v2540 = vpack.c.b16 %v1740, %v1732
        %v2541 = vpack.c.b16 %v1741, %v1733
        %v2542 = vpack.c.b16 %v1750, %v1742
        %v2543 = vpack.c.b16 %v1751, %v1743
        %v2544 = vpack.c.b16 %v1752, %v1744
        %v2545 = vpack.c.b16 %v1753, %v1745
        %v2546 = vpack.c.b16 %v1754, %v1746
        %v2547 = vpack.c.b16 %v1755, %v1747
        %v2548 = vpack.c.b16 %v1756, %v1748
        %v2549 = vpack.c.b16 %v1757, %v1749
        %v2550 = vpack.c.b16 %v1766, %v1758
        %v2551 = vpack.c.b16 %v1767, %v1759
        %v2552 = vpack.c.b16 %v1768, %v1760
        %v2553 = vpack.c.b16 %v1769, %v1761
        %v2554 = vpack.c.b16 %v1770, %v1762
        %v2555 = vpack.c.b16 %v1771, %v1763
        %v2556 = vpack.c.b16 %v1772, %v1764
        %v2557 = vpack.c.b16 %v1773, %v1765
        %v2558 = vpack.c.b16 %v1782, %v1774
        %v2559 = vpack.c.b16 %v1783, %v1775
        %v2560 = vpack.c.b16 %v1784, %v1776
        %v2561 = vpack.c.b16 %v1785, %v1777
        %v2562 = vpack.c.b16 %v1786, %v1778
        %v2563 = vpack.c.b16 %v1787, %v1779
        %v2564 = vpack.c.b16 %v1788, %v1780
        %v2565 = vpack.c.b16 %v1789, %v1781
        %v2566 = vpack.c.b16 %v1798, %v1790
        %v2567 = vpack.c.b16 %v1799, %v1791
        %v2568 = vpack.c.b16 %v1800, %v1792
        %v2569 = vpack.c.b16 %v1801, %v1793
        %v2570 = vpack.c.b16 %v1802, %v1794
        %v2571 = vpack.c.b16 %v1803, %v1795
        %v2572 = vpack.c.b16 %v1804, %v1796
        %v2573 = vpack.c.b16 %v1805, %v1797
        %v2574 = vpack.c.b16 %v1814, %v1806
        %v2575 = vpack.c.b16 %v1815, %v1807
        %v2576 = vpack.c.b16 %v1816, %v1808
        %v2577 = vpack.c.b16 %v1817, %v1809
        %v2578 = vpack.c.b16 %v1818, %v1810
        %v2579 = vpack.c.b16 %v1819, %v1811
        %v2580 = vpack.c.b16 %v1820, %v1812
        %v2581 = vpack.c.b16 %v1821, %v1813
        %v2582 = vpack.c.b16 %v1830, %v1822
        %v2583 = vpack.c.b16 %v1831, %v1823
        %v2584 = vpack.c.b16 %v1832, %v1824
        %v2585 = vpack.c.b16 %v1833, %v1825
        %v2586 = vpack.c.b16 %v1834, %v1826
        %v2587 = vpack.c.b16 %v1835, %v1827
        %v2588 = vpack.c.b16 %v1836, %v1828
        %v2589 = vpack.c.b16 %v1837, %v1829
        %v2590 = vpack.c.b16 %v1846, %v1838
        %v2591 = vpack.c.b16 %v1847, %v1839
        %v2592 = vpack.c.b16 %v1848, %v1840
        %v2593 = vpack.c.b16 %v1849, %v1841
        %v2594 = vpack.c.b16 %v1850, %v1842
        %v2595 = vpack.c.b16 %v1851, %v1843
        %v2596 = vpack.c.b16 %v1852, %v1844
        %v2597 = vpack.c.b16 %v1853, %v1845
        %v2598 = vpack.c.b16 %v1862, %v1854
        %v2599 = vpack.c.b16 %v1863, %v1855
        %v2600 = vpack.c.b16 %v1864, %v1856
        %v2601 = vpack.c.b16 %v1865, %v1857
        %v2602 = vpack.c.b16 %v1866, %v1858
        %v2603 = vpack.c.b16 %v1867, %v1859
        %v2604 = vpack.c.b16 %v1868, %v1860
        %v2605 = vpack.c.b16 %v1869, %v1861
        %v2606 = vpack.c.b16 %v1878, %v1870
        %v2607 = vpack.c.b16 %v1879, %v1871
        %v2608 = vpack.c.b16 %v1880, %v1872
        %v2609 = vpack.c.b16 %v1881, %v1873
        %v2610 = vpack.c.b16 %v1882, %v1874
        %v2611 = vpack.c.b16 %v1883, %v1875
        %v2612 = vpack.c.b16 %v1884, %v1876
        %v2613 = vpack.c.b16 %v1885, %v1877
        %v2614 = vpack.c.b16 %v1894, %v1886
        %v2615 = vpack.c.b16 %v1895, %v1887
        %v2616 = vpack.c.b16 %v1896, %v1888
        %v2617 = vpack.c.b16 %v1897, %v1889
        %v2618 = vpack.c.b16 %v1898, %v1890
        %v2619 = vpack.c.b16 %v1899, %v1891
        %v2620 = vpack.c.b16 %v1900, %v1892
        %v2621 = vpack.c.b16 %v1901, %v1893
        %v2622 = vpack.c.b16 %v1910, %v1902
        %v2623 = vpack.c.b16 %v1911, %v1903
        %v2624 = vpack.c.b16 %v1912, %v1904
        %v2625 = vpack.c.b16 %v1913, %v1905
        %v2626 = vpack.c.b16 %v1914, %v1906
        %v2627 = vpack.c.b16 %v1915, %v1907
        %v2628 = vpack.c.b16 %v1916, %v1908
        %v2629 = vpack.c.b16 %v1917, %v1909
        %v2630 = vpack.c.b16 %v1926, %v1918
        %v2631 = vpack.c.b16 %v1927, %v1919
        %v2632 = vpack.c.b16 %v1928, %v1920
        %v2633 = vpack.c.b16 %v1929, %v1921
        %v2634 = vpack.c.b16 %v1930, %v1922
        %v2635 = vpack.c.b16 %v1931, %v1923
        %v2636 = vpack.c.b16 %v1932, %v1924
        %v2637 = vpack.c.b16 %v1933, %v1925
        %v2638 = vpack.c.b16 %v1942, %v1934
        %v2639 = vpack.c.b16 %v1943, %v1935
        %v2640 = vpack.c.b16 %v1944, %v1936
        %v2641 = vpack.c.b16 %v1945, %v1937
        %v2642 = vpack.c.b16 %v1946, %v1938
        %v2643 = vpack.c.b16 %v1947, %v1939
        %v2644 = vpack.c.b16 %v1948, %v1940
        %v2645 = vpack.c.b16 %v1949, %v1941
        %v2646 = vpack.c.b16 %v1958, %v1950
        %v2647 = vpack.c.b16 %v1959, %v1951
        %v2648 = vpack.c.b16 %v1960, %v1952
        %v2649 = vpack.c.b16 %v1961, %v1953
        %v2650 = vpack.c.b16 %v1962, %v1954
        %v2651 = vpack.c.b16 %v1963, %v1955
        %v2652 = vpack.c.b16 %v1964, %v1956
        %v2653 = vpack.c.b16 %v1965, %v1957
        %v2654 = vpack.c.b16 %v1974, %v1966
        %v2655 = vpack.c.b16 %v1975, %v1967
        %v2656 = vpack.c.b16 %v1976, %v1968
        %v2657 = vpack.c.b16 %v1977, %v1969
        %v2658 = vpack.c.b16 %v1978, %v1970
        %v2659 = vpack.c.b16 %v1979, %v1971
        %v2660 = vpack.c.b16 %v1980, %v1972
        %v2661 = vpack.c.b16 %v1981, %v1973
        %v2662 = vpack.c.b16 %v1990, %v1982
        %v2663 = vpack.c.b16 %v1991, %v1983
        %v2664 = vpack.c.b16 %v1992, %v1984
        %v2665 = vpack.c.b16 %v1993, %v1985
        %v2666 = vpack.c.b16 %v1994, %v1986
        %v2667 = vpack.c.b16 %v1995, %v1987
        %v2668 = vpack.c.b16 %v1996, %v1988
        %v2669 = vpack.c.b16 %v1997, %v1989
        %v2670 = vpack.c.b16 %v2006, %v1998
        %v2671 = vpack.c.b16 %v2007, %v1999
        %v2672 = vpack.c.b16 %v2008, %v2000
        %v2673 = vpack.c.b16 %v2009, %v2001
        %v2674 = vpack.c.b16 %v2010, %v2002
        %v2675 = vpack.c.b16 %v2011, %v2003
        %v2676 = vpack.c.b16 %v2012, %v2004
        %v2677 = vpack.c.b16 %v2013, %v2005
        %v2678 = vpack.c.b16 %v2022, %v2014
        %v2679 = vpack.c.b16 %v2023, %v2015
        %v2680 = vpack.c.b16 %v2024, %v2016
        %v2681 = vpack.c.b16 %v2025, %v2017
        %v2682 = vpack.c.b16 %v2026, %v2018
        %v2683 = vpack.c.b16 %v2027, %v2019
        %v2684 = vpack.c.b16 %v2028, %v2020
        %v2685 = vpack.c.b16 %v2029, %v2021
        %v2686 = vpack.c.b16 %v2038, %v2030
        %v2687 = vpack.c.b16 %v2039, %v2031
        %v2688 = vpack.c.b16 %v2040, %v2032
        %v2689 = vpack.c.b16 %v2041, %v2033
        %v2690 = vpack.c.b16 %v2042, %v2034
        %v2691 = vpack.c.b16 %v2043, %v2035
        %v2692 = vpack.c.b16 %v2044, %v2036
        %v2693 = vpack.c.b16 %v2045, %v2037
        %v2694 = vpack.c.b16 %v2054, %v2046
        %v2695 = vpack.c.b16 %v2055, %v2047
        %v2696 = vpack.c.b16 %v2056, %v2048
        %v2697 = vpack.c.b16 %v2057, %v2049
        %v2698 = vpack.c.b16 %v2058, %v2050
        %v2699 = vpack.c.b16 %v2059, %v2051
        %v2700 = vpack.c.b16 %v2060, %v2052
        %v2701 = vpack.c.b16 %v2061, %v2053
        %v2702 = vpack.c.b16 %v2070, %v2062
        %v2703 = vpack.c.b16 %v2071, %v2063
        %v2704 = vpack.c.b16 %v2072, %v2064
        %v2705 = vpack.c.b16 %v2073, %v2065
        %v2706 = vpack.c.b16 %v2074, %v2066
        %v2707 = vpack.c.b16 %v2075, %v2067
        %v2708 = vpack.c.b16 %v2076, %v2068
        %v2709 = vpack.c.b16 %v2077, %v2069
        %v2710 = vpack.c.b16 %v2086, %v2078
        %v2711 = vpack.c.b16 %v2087, %v2079
        %v2712 = vpack.c.b16 %v2088, %v2080
        %v2713 = vpack.c.b16 %v2089, %v2081
        %v2714 = vpack.c.b16 %v2090, %v2082
        %v2715 = vpack.c.b16 %v2091, %v2083
        %v2716 = vpack.c.b16 %v2092, %v2084
        %v2717 = vpack.c.b16 %v2093, %v2085
        %v2718 = vpack.c.b16 %v2102, %v2094
        %v2719 = vpack.c.b16 %v2103, %v2095
        %v2720 = vpack.c.b16 %v2104, %v2096
        %v2721 = vpack.c.b16 %v2105, %v2097
        %v2722 = vpack.c.b16 %v2106, %v2098
        %v2723 = vpack.c.b16 %v2107, %v2099
        %v2724 = vpack.c.b16 %v2108, %v2100
        %v2725 = vpack.c.b16 %v2109, %v2101
        %v2726 = vpack.c.b16 %v2118, %v2110
        %v2727 = vpack.c.b16 %v2119, %v2111
        %v2728 = vpack.c.b16 %v2120, %v2112
        %v2729 = vpack.c.b16 %v2121, %v2113
        %v2730 = vpack.c.b16 %v2122, %v2114
        %v2731 = vpack.c.b16 %v2123, %v2115
        %v2732 = vpack.c.b16 %v2124, %v2116
        %v2733 = vpack.c.b16 %v2125, %v2117
        %v2734 = vpack.c.b16 %v2134, %v2126
        %v2735 = vpack.c.b16 %v2135, %v2127
        %v2736 = vpack.c.b16 %v2136, %v2128
        %v2737 = vpack.c.b16 %v2137, %v2129
        %v2738 = vpack.c.b16 %v2138, %v2130
        %v2739 = vpack.c.b16 %v2139, %v2131
        %v2740 = vpack.c.b16 %v2140, %v2132
        %v2741 = vpack.c.b16 %v2141, %v2133
        %v2742 = vpack.c.b16 %v2150, %v2142
        %v2743 = vpack.c.b16 %v2151, %v2143
        %v2744 = vpack.c.b16 %v2152, %v2144
        %v2745 = vpack.c.b16 %v2153, %v2145
        %v2746 = vpack.c.b16 %v2154, %v2146
        %v2747 = vpack.c.b16 %v2155, %v2147
        %v2748 = vpack.c.b16 %v2156, %v2148
        %v2749 = vpack.c.b16 %v2157, %v2149
        %v2750 = vpack.c.b16 %v2166, %v2158
        %v2751 = vpack.c.b16 %v2167, %v2159
        %v2752 = vpack.c.b16 %v2168, %v2160
        %v2753 = vpack.c.b16 %v2169, %v2161
        %v2754 = vpack.c.b16 %v2170, %v2162
        %v2755 = vpack.c.b16 %v2171, %v2163
        %v2756 = vpack.c.b16 %v2172, %v2164
        %v2757 = vpack.c.b16 %v2173, %v2165
        %v2758 = vpack.c.b16 %v2182, %v2174
        %v2759 = vpack.c.b16 %v2183, %v2175
        %v2760 = vpack.c.b16 %v2184, %v2176
        %v2761 = vpack.c.b16 %v2185, %v2177
        %v2762 = vpack.c.b16 %v2186, %v2178
        %v2763 = vpack.c.b16 %v2187, %v2179
        %v2764 = vpack.c.b16 %v2188, %v2180
        %v2765 = vpack.c.b16 %v2189, %v2181
        %v2766 = vpack.c.b16 %v2198, %v2190
        %v2767 = vpack.c.b16 %v2199, %v2191
        %v2768 = vpack.c.b16 %v2200, %v2192
        %v2769 = vpack.c.b16 %v2201, %v2193
        %v2770 = vpack.c.b16 %v2202, %v2194
        %v2771 = vpack.c.b16 %v2203, %v2195
        %v2772 = vpack.c.b16 %v2204, %v2196
        %v2773 = vpack.c.b16 %v2205, %v2197
        %v2774 = vpack.c.b16 %v2214, %v2206
        %v2775 = vpack.c.b16 %v2215, %v2207
        %v2776 = vpack.c.b16 %v2216, %v2208
        %v2777 = vpack.c.b16 %v2217, %v2209
        %v2778 = vpack.c.b16 %v2218, %v2210
        %v2779 = vpack.c.b16 %v2219, %v2211
        %v2780 = vpack.c.b16 %v2220, %v2212
        %v2781 = vpack.c.b16 %v2221, %v2213
        %v2782 = vpack.c.b16 %v2230, %v2222
        %v2783 = vpack.c.b16 %v2231, %v2223
        %v2784 = vpack.c.b16 %v2232, %v2224
        %v2785 = vpack.c.b16 %v2233, %v2225
        %v2786 = vpack.c.b16 %v2234, %v2226
        %v2787 = vpack.c.b16 %v2235, %v2227
        %v2788 = vpack.c.b16 %v2236, %v2228
        %v2789 = vpack.c.b16 %v2237, %v2229
        %v2790 = vpack.c.b16 %v2246, %v2238
        %v2791 = vpack.c.b16 %v2247, %v2239
        %v2792 = vpack.c.b16 %v2248, %v2240
        %v2793 = vpack.c.b16 %v2249, %v2241
        %v2794 = vpack.c.b16 %v2250, %v2242
        %v2795 = vpack.c.b16 %v2251, %v2243
        %v2796 = vpack.c.b16 %v2252, %v2244
        %v2797 = vpack.c.b16 %v2253, %v2245
        %v2798 = vpack.c.b16 %v2262, %v2254
        %v2799 = vpack.c.b16 %v2263, %v2255
        %v2800 = vpack.c.b16 %v2264, %v2256
        %v2801 = vpack.c.b16 %v2265, %v2257
        %v2802 = vpack.c.b16 %v2266, %v2258
        %v2803 = vpack.c.b16 %v2267, %v2259
        %v2804 = vpack.c.b16 %v2268, %v2260
        %v2805 = vpack.c.b16 %v2269, %v2261
        %v2806 = vpack.c.b16 %v2278, %v2270
        %v2807 = vpack.c.b16 %v2279, %v2271
        %v2808 = vpack.c.b16 %v2280, %v2272
        %v2809 = vpack.c.b16 %v2281, %v2273
        %v2810 = vpack.c.b16 %v2282, %v2274
        %v2811 = vpack.c.b16 %v2283, %v2275
        %v2812 = vpack.c.b16 %v2284, %v2276
        %v2813 = vpack.c.b16 %v2285, %v2277
        %v2814 = vpack.c.b16 %v2294, %v2286
        %v2815 = vpack.c.b16 %v2295, %v2287
        %v2816 = vpack.c.b16 %v2296, %v2288
        %v2817 = vpack.c.b16 %v2297, %v2289
        %v2818 = vpack.c.b16 %v2298, %v2290
        %v2819 = vpack.c.b16 %v2299, %v2291
        %v2820 = vpack.c.b16 %v2300, %v2292
        %v2821 = vpack.c.b16 %v2301, %v2293
        %v2822 = vpack.c.b16 %v2310, %v2302
        %v2823 = vpack.c.b16 %v2311, %v2303
        %v2824 = vpack.c.b16 %v2312, %v2304
        %v2825 = vpack.c.b16 %v2313, %v2305
        %v2826 = vpack.c.b16 %v2314, %v2306
        %v2827 = vpack.c.b16 %v2315, %v2307
        %v2828 = vpack.c.b16 %v2316, %v2308
        %v2829 = vpack.c.b16 %v2317, %v2309
        %3342 = vmatprep.subr.bf16.mxu0 %v2375
        %3343 = vmatpush1.bf16.msra.mxu0 %v2374
        %3344 = vmatprep.subr.bf16.mxu0 %v2367
        %3345 = vmatpush1.bf16.msra.mxu0 %v2366
        %3346 = vmatprep.subr.bf16.mxu0 %v2359
        %3347 = vmatpush1.bf16.msra.mxu0 %v2358
        %3348 = vmatprep.subr.bf16.mxu0 %v2351
        %3349 = vmatpush1.bf16.msra.mxu0 %v2350
        %3350 = vmatprep.subr.bf16.mxu0 %v2343
        %3351 = vmatpush1.bf16.msra.mxu0 %v2342
        %3352 = vmatprep.subr.bf16.mxu0 %v2335
        %3353 = vmatpush1.bf16.msra.mxu0 %v2334
        %3354 = vmatprep.subr.bf16.mxu0 %v2327
        %3355 = vmatpush1.bf16.msra.mxu0 %v2326
        %3356 = vmatprep.subr.bf16.mxu0 %v2319
        %3357 = vmatpush1.bf16.msra.mxu0 %v2318
        %3358 = vmatprep.subr.bf16.mxu0 %v2439
        %3359 = vmatpush2.bf16.msra.mxu0 %v2438
        %3360 = vmatprep.subr.bf16.mxu0 %v2431
        %3361 = vmatpush2.bf16.msra.mxu0 %v2430
        %3362 = vmatprep.subr.bf16.mxu0 %v2423
        %3363 = vmatpush2.bf16.msra.mxu0 %v2422
        %3364 = vmatprep.subr.bf16.mxu0 %v2415
        %3365 = vmatpush2.bf16.msra.mxu0 %v2414
        %3366 = vmatprep.subr.bf16.mxu0 %v2407
        %3367 = vmatpush2.bf16.msra.mxu0 %v2406
        %3368 = vmatprep.subr.bf16.mxu0 %v2399
        %3369 = vmatpush2.bf16.msra.mxu0 %v2398
        %3370 = vmatprep.subr.bf16.mxu0 %v2391
        %3371 = vmatpush2.bf16.msra.mxu0 %v2390
        %3372 = vmatprep.subr.bf16.mxu0 %v2383
        %3373 = vmatpush2.bf16.msra.mxu0 %v2382
        %3374 = vmatprep.mubr.bf16.mxu0 %v767
        %3375 = vmatmul.mubr.bf16.gmra.mxu0 %v766
        %v3376 = vpop.f32.mrf.mxu0
        %v3377 = vadd.f32 0.0, %v3376
        %v3378 = vpop.f32.mrf.mxu0
        %v3379 = vadd.f32 0.0, %v3378
        %v3380 = vpop.f32.mrf.mxu0
        %v3381 = vadd.f32 0.0, %v3380
        %v3382 = vpop.f32.mrf.mxu0
        %v3383 = vadd.f32 0.0, %v3382
        %3384 = vdwg.mxu0
        %3385 = vmatprep.subr.bf16.mxu0 %v2503
        %3386 = vmatpush1.bf16.msra.mxu0 %v2502
        %3387 = vmatprep.subr.bf16.mxu0 %v2495
        %3388 = vmatpush1.bf16.msra.mxu0 %v2494
        %3389 = vmatprep.subr.bf16.mxu0 %v2487
        %3390 = vmatpush1.bf16.msra.mxu0 %v2486
        %3391 = vmatprep.subr.bf16.mxu0 %v2479
        %3392 = vmatpush1.bf16.msra.mxu0 %v2478
        %3393 = vmatprep.subr.bf16.mxu0 %v2471
        %3394 = vmatpush1.bf16.msra.mxu0 %v2470
        %3395 = vmatprep.subr.bf16.mxu0 %v2463
        %3396 = vmatpush1.bf16.msra.mxu0 %v2462
        %3397 = vmatprep.subr.bf16.mxu0 %v2455
        %3398 = vmatpush1.bf16.msra.mxu0 %v2454
        %3399 = vmatprep.subr.bf16.mxu0 %v2447
        %3400 = vmatpush1.bf16.msra.mxu0 %v2446
        %3401 = vmatprep.subr.bf16.mxu0 %v2567
        %3402 = vmatpush2.bf16.msra.mxu0 %v2566
        %3403 = vmatprep.subr.bf16.mxu0 %v2559
        %3404 = vmatpush2.bf16.msra.mxu0 %v2558
        %3405 = vmatprep.subr.bf16.mxu0 %v2551
        %3406 = vmatpush2.bf16.msra.mxu0 %v2550
        %3407 = vmatprep.subr.bf16.mxu0 %v2543
        %3408 = vmatpush2.bf16.msra.mxu0 %v2542
        %3409 = vmatprep.subr.bf16.mxu0 %v2535
        %3410 = vmatpush2.bf16.msra.mxu0 %v2534
        %3411 = vmatprep.subr.bf16.mxu0 %v2527
        %3412 = vmatpush2.bf16.msra.mxu0 %v2526
        %3413 = vmatprep.subr.bf16.mxu0 %v2519
        %3414 = vmatpush2.bf16.msra.mxu0 %v2518
        %3415 = vmatprep.subr.bf16.mxu0 %v2511
        %3416 = vmatpush2.bf16.msra.mxu0 %v2510
        %3417 = vmatprep.mubr.bf16.mxu0 %v769
        %3418 = vmatmul.mubr.bf16.gmra.mxu0 %v768
        %v3419 = vpop.f32.mrf.mxu0
        %v3420 = vadd.f32 %v3377, %v3419
        %v3421 = vpop.f32.mrf.mxu0
        %v3422 = vadd.f32 %v3379, %v3421
        %v3423 = vpop.f32.mrf.mxu0
        %v3424 = vadd.f32 %v3381, %v3423
        %v3425 = vpop.f32.mrf.mxu0
        %v3426 = vadd.f32 %v3383, %v3425
        %3427 = vdwg.mxu0
        %3428 = vmatprep.subr.bf16.mxu0 %v2631
        %3429 = vmatpush1.bf16.msra.mxu0 %v2630
        %3430 = vmatprep.subr.bf16.mxu0 %v2623
        %3431 = vmatpush1.bf16.msra.mxu0 %v2622
        %3432 = vmatprep.subr.bf16.mxu0 %v2615
        %3433 = vmatpush1.bf16.msra.mxu0 %v2614
        %3434 = vmatprep.subr.bf16.mxu0 %v2607
        %3435 = vmatpush1.bf16.msra.mxu0 %v2606
        %3436 = vmatprep.subr.bf16.mxu0 %v2599
        %3437 = vmatpush1.bf16.msra.mxu0 %v2598
        %3438 = vmatprep.subr.bf16.mxu0 %v2591
        %3439 = vmatpush1.bf16.msra.mxu0 %v2590
        %3440 = vmatprep.subr.bf16.mxu0 %v2583
        %3441 = vmatpush1.bf16.msra.mxu0 %v2582
        %3442 = vmatprep.subr.bf16.mxu0 %v2575
        %3443 = vmatpush1.bf16.msra.mxu0 %v2574
        %3444 = vmatprep.subr.bf16.mxu0 %v2695
        %3445 = vmatpush2.bf16.msra.mxu0 %v2694
        %3446 = vmatprep.subr.bf16.mxu0 %v2687
        %3447 = vmatpush2.bf16.msra.mxu0 %v2686
        %3448 = vmatprep.subr.bf16.mxu0 %v2679
        %3449 = vmatpush2.bf16.msra.mxu0 %v2678
        %3450 = vmatprep.subr.bf16.mxu0 %v2671
        %3451 = vmatpush2.bf16.msra.mxu0 %v2670
        %3452 = vmatprep.subr.bf16.mxu0 %v2663
        %3453 = vmatpush2.bf16.msra.mxu0 %v2662
        %3454 = vmatprep.subr.bf16.mxu0 %v2655
        %3455 = vmatpush2.bf16.msra.mxu0 %v2654
        %3456 = vmatprep.subr.bf16.mxu0 %v2647
        %3457 = vmatpush2.bf16.msra.mxu0 %v2646
        %3458 = vmatprep.subr.bf16.mxu0 %v2639
        %3459 = vmatpush2.bf16.msra.mxu0 %v2638
        %3460 = vmatprep.mubr.bf16.mxu0 %v771
        %3461 = vmatmul.mubr.bf16.gmra.mxu0 %v770
        %v3462 = vpop.f32.mrf.mxu0
        %v3463 = vadd.f32 %v3420, %v3462
        %v3464 = vpop.f32.mrf.mxu0
        %v3465 = vadd.f32 %v3422, %v3464
        %v3466 = vpop.f32.mrf.mxu0
        %v3467 = vadd.f32 %v3424, %v3466
        %v3468 = vpop.f32.mrf.mxu0
        %v3469 = vadd.f32 %v3426, %v3468
        %3470 = vdwg.mxu0
        %3471 = vmatprep.subr.bf16.mxu0 %v2759
        %3472 = vmatpush1.bf16.msra.mxu0 %v2758
        %3473 = vmatprep.subr.bf16.mxu0 %v2751
        %3474 = vmatpush1.bf16.msra.mxu0 %v2750
        %3475 = vmatprep.subr.bf16.mxu0 %v2743
        %3476 = vmatpush1.bf16.msra.mxu0 %v2742
        %3477 = vmatprep.subr.bf16.mxu0 %v2735
        %3478 = vmatpush1.bf16.msra.mxu0 %v2734
        %3479 = vmatprep.subr.bf16.mxu0 %v2727
        %3480 = vmatpush1.bf16.msra.mxu0 %v2726
        %3481 = vmatprep.subr.bf16.mxu0 %v2719
        %3482 = vmatpush1.bf16.msra.mxu0 %v2718
        %3483 = vmatprep.subr.bf16.mxu0 %v2711
        %3484 = vmatpush1.bf16.msra.mxu0 %v2710
        %3485 = vmatprep.subr.bf16.mxu0 %v2703
        %3486 = vmatpush1.bf16.msra.mxu0 %v2702
        %3487 = vmatprep.subr.bf16.mxu0 %v2823
        %3488 = vmatpush2.bf16.msra.mxu0 %v2822
        %3489 = vmatprep.subr.bf16.mxu0 %v2815
        %3490 = vmatpush2.bf16.msra.mxu0 %v2814
        %3491 = vmatprep.subr.bf16.mxu0 %v2807
        %3492 = vmatpush2.bf16.msra.mxu0 %v2806
        %3493 = vmatprep.subr.bf16.mxu0 %v2799
        %3494 = vmatpush2.bf16.msra.mxu0 %v2798
        %3495 = vmatprep.subr.bf16.mxu0 %v2791
        %3496 = vmatpush2.bf16.msra.mxu0 %v2790
        %3497 = vmatprep.subr.bf16.mxu0 %v2783
        %3498 = vmatpush2.bf16.msra.mxu0 %v2782
        %3499 = vmatprep.subr.bf16.mxu0 %v2775
        %3500 = vmatpush2.bf16.msra.mxu0 %v2774
        %3501 = vmatprep.subr.bf16.mxu0 %v2767
        %3502 = vmatpush2.bf16.msra.mxu0 %v2766
        %3503 = vmatprep.mubr.bf16.mxu0 %v773
        %3504 = vmatmul.mubr.bf16.gmra.mxu0 %v772
        %v3505 = vpop.f32.mrf.mxu0
        %v3506 = vadd.f32 %v3463, %v3505
        %v3507 = vpop.f32.mrf.mxu0
        %v3508 = vadd.f32 %v3465, %v3507
        %v3509 = vpop.f32.mrf.mxu0
        %v3510 = vadd.f32 %v3467, %v3509
        %v3511 = vpop.f32.mrf.mxu0
        %v3512 = vadd.f32 %v3469, %v3511
        %3513 = vdwg.mxu0
        %3514 = vmatprep.subr.bf16.mxu0 %v2377
        %3515 = vmatpush1.bf16.msra.mxu0 %v2376
        %3516 = vmatprep.subr.bf16.mxu0 %v2369
        %3517 = vmatpush1.bf16.msra.mxu0 %v2368
        %3518 = vmatprep.subr.bf16.mxu0 %v2361
        %3519 = vmatpush1.bf16.msra.mxu0 %v2360
        %3520 = vmatprep.subr.bf16.mxu0 %v2353
        %3521 = vmatpush1.bf16.msra.mxu0 %v2352
        %3522 = vmatprep.subr.bf16.mxu0 %v2345
        %3523 = vmatpush1.bf16.msra.mxu0 %v2344
        %3524 = vmatprep.subr.bf16.mxu0 %v2337
        %3525 = vmatpush1.bf16.msra.mxu0 %v2336
        %3526 = vmatprep.subr.bf16.mxu0 %v2329
        %3527 = vmatpush1.bf16.msra.mxu0 %v2328
        %3528 = vmatprep.subr.bf16.mxu0 %v2321
        %3529 = vmatpush1.bf16.msra.mxu0 %v2320
        %3530 = vmatprep.subr.bf16.mxu0 %v2441
        %3531 = vmatpush2.bf16.msra.mxu0 %v2440
        %3532 = vmatprep.subr.bf16.mxu0 %v2433
        %3533 = vmatpush2.bf16.msra.mxu0 %v2432
        %3534 = vmatprep.subr.bf16.mxu0 %v2425
        %3535 = vmatpush2.bf16.msra.mxu0 %v2424
        %3536 = vmatprep.subr.bf16.mxu0 %v2417
        %3537 = vmatpush2.bf16.msra.mxu0 %v2416
        %3538 = vmatprep.subr.bf16.mxu0 %v2409
        %3539 = vmatpush2.bf16.msra.mxu0 %v2408
        %3540 = vmatprep.subr.bf16.mxu0 %v2401
        %3541 = vmatpush2.bf16.msra.mxu0 %v2400
        %3542 = vmatprep.subr.bf16.mxu0 %v2393
        %3543 = vmatpush2.bf16.msra.mxu0 %v2392
        %3544 = vmatprep.subr.bf16.mxu0 %v2385
        %3545 = vmatpush2.bf16.msra.mxu0 %v2384
        %3546 = vmatprep.mubr.bf16.mxu0 %v767
        %3547 = vmatmul.mubr.bf16.gmra.mxu0 %v766
        %v3548 = vpop.f32.mrf.mxu0
        %v3549 = vadd.f32 0.0, %v3548
        %v3550 = vpop.f32.mrf.mxu0
        %v3551 = vadd.f32 0.0, %v3550
        %v3552 = vpop.f32.mrf.mxu0
        %v3553 = vadd.f32 0.0, %v3552
        %v3554 = vpop.f32.mrf.mxu0
        %v3555 = vadd.f32 0.0, %v3554
        %3556 = vdwg.mxu0
        %3557 = vmatprep.subr.bf16.mxu0 %v2505
        %3558 = vmatpush1.bf16.msra.mxu0 %v2504
        %3559 = vmatprep.subr.bf16.mxu0 %v2497
        %3560 = vmatpush1.bf16.msra.mxu0 %v2496
        %3561 = vmatprep.subr.bf16.mxu0 %v2489
        %3562 = vmatpush1.bf16.msra.mxu0 %v2488
        %3563 = vmatprep.subr.bf16.mxu0 %v2481
        %3564 = vmatpush1.bf16.msra.mxu0 %v2480
        %3565 = vmatprep.subr.bf16.mxu0 %v2473
        %3566 = vmatpush1.bf16.msra.mxu0 %v2472
        %3567 = vmatprep.subr.bf16.mxu0 %v2465
        %3568 = vmatpush1.bf16.msra.mxu0 %v2464
        %3569 = vmatprep.subr.bf16.mxu0 %v2457
        %3570 = vmatpush1.bf16.msra.mxu0 %v2456
        %3571 = vmatprep.subr.bf16.mxu0 %v2449
        %3572 = vmatpush1.bf16.msra.mxu0 %v2448
        %3573 = vmatprep.subr.bf16.mxu0 %v2569
        %3574 = vmatpush2.bf16.msra.mxu0 %v2568
        %3575 = vmatprep.subr.bf16.mxu0 %v2561
        %3576 = vmatpush2.bf16.msra.mxu0 %v2560
        %3577 = vmatprep.subr.bf16.mxu0 %v2553
        %3578 = vmatpush2.bf16.msra.mxu0 %v2552
        %3579 = vmatprep.subr.bf16.mxu0 %v2545
        %3580 = vmatpush2.bf16.msra.mxu0 %v2544
        %3581 = vmatprep.subr.bf16.mxu0 %v2537
        %3582 = vmatpush2.bf16.msra.mxu0 %v2536
        %3583 = vmatprep.subr.bf16.mxu0 %v2529
        %3584 = vmatpush2.bf16.msra.mxu0 %v2528
        %3585 = vmatprep.subr.bf16.mxu0 %v2521
        %3586 = vmatpush2.bf16.msra.mxu0 %v2520
        %3587 = vmatprep.subr.bf16.mxu0 %v2513
        %3588 = vmatpush2.bf16.msra.mxu0 %v2512
        %3589 = vmatprep.mubr.bf16.mxu0 %v769
        %3590 = vmatmul.mubr.bf16.gmra.mxu0 %v768
        %v3591 = vpop.f32.mrf.mxu0
        %v3592 = vadd.f32 %v3549, %v3591
        %v3593 = vpop.f32.mrf.mxu0
        %v3594 = vadd.f32 %v3551, %v3593
        %v3595 = vpop.f32.mrf.mxu0
        %v3596 = vadd.f32 %v3553, %v3595
        %v3597 = vpop.f32.mrf.mxu0
        %v3598 = vadd.f32 %v3555, %v3597
        %3599 = vdwg.mxu0
        %3600 = vmatprep.subr.bf16.mxu0 %v2633
        %3601 = vmatpush1.bf16.msra.mxu0 %v2632
        %3602 = vmatprep.subr.bf16.mxu0 %v2625
        %3603 = vmatpush1.bf16.msra.mxu0 %v2624
        %3604 = vmatprep.subr.bf16.mxu0 %v2617
        %3605 = vmatpush1.bf16.msra.mxu0 %v2616
        %3606 = vmatprep.subr.bf16.mxu0 %v2609
        %3607 = vmatpush1.bf16.msra.mxu0 %v2608
        %3608 = vmatprep.subr.bf16.mxu0 %v2601
        %3609 = vmatpush1.bf16.msra.mxu0 %v2600
        %3610 = vmatprep.subr.bf16.mxu0 %v2593
        %3611 = vmatpush1.bf16.msra.mxu0 %v2592
        %3612 = vmatprep.subr.bf16.mxu0 %v2585
        %3613 = vmatpush1.bf16.msra.mxu0 %v2584
        %3614 = vmatprep.subr.bf16.mxu0 %v2577
        %3615 = vmatpush1.bf16.msra.mxu0 %v2576
        %3616 = vmatprep.subr.bf16.mxu0 %v2697
        %3617 = vmatpush2.bf16.msra.mxu0 %v2696
        %3618 = vmatprep.subr.bf16.mxu0 %v2689
        %3619 = vmatpush2.bf16.msra.mxu0 %v2688
        %3620 = vmatprep.subr.bf16.mxu0 %v2681
        %3621 = vmatpush2.bf16.msra.mxu0 %v2680
        %3622 = vmatprep.subr.bf16.mxu0 %v2673
        %3623 = vmatpush2.bf16.msra.mxu0 %v2672
        %3624 = vmatprep.subr.bf16.mxu0 %v2665
        %3625 = vmatpush2.bf16.msra.mxu0 %v2664
        %3626 = vmatprep.subr.bf16.mxu0 %v2657
        %3627 = vmatpush2.bf16.msra.mxu0 %v2656
        %3628 = vmatprep.subr.bf16.mxu0 %v2649
        %3629 = vmatpush2.bf16.msra.mxu0 %v2648
        %3630 = vmatprep.subr.bf16.mxu0 %v2641
        %3631 = vmatpush2.bf16.msra.mxu0 %v2640
        %3632 = vmatprep.mubr.bf16.mxu0 %v771
        %3633 = vmatmul.mubr.bf16.gmra.mxu0 %v770
        %v3634 = vpop.f32.mrf.mxu0
        %v3635 = vadd.f32 %v3592, %v3634
        %v3636 = vpop.f32.mrf.mxu0
        %v3637 = vadd.f32 %v3594, %v3636
        %v3638 = vpop.f32.mrf.mxu0
        %v3639 = vadd.f32 %v3596, %v3638
        %v3640 = vpop.f32.mrf.mxu0
        %v3641 = vadd.f32 %v3598, %v3640
        %3642 = vdwg.mxu0
        %3643 = vmatprep.subr.bf16.mxu0 %v2761
        %3644 = vmatpush1.bf16.msra.mxu0 %v2760
        %3645 = vmatprep.subr.bf16.mxu0 %v2753
        %3646 = vmatpush1.bf16.msra.mxu0 %v2752
        %3647 = vmatprep.subr.bf16.mxu0 %v2745
        %3648 = vmatpush1.bf16.msra.mxu0 %v2744
        %3649 = vmatprep.subr.bf16.mxu0 %v2737
        %3650 = vmatpush1.bf16.msra.mxu0 %v2736
        %3651 = vmatprep.subr.bf16.mxu0 %v2729
        %3652 = vmatpush1.bf16.msra.mxu0 %v2728
        %3653 = vmatprep.subr.bf16.mxu0 %v2721
        %3654 = vmatpush1.bf16.msra.mxu0 %v2720
        %3655 = vmatprep.subr.bf16.mxu0 %v2713
        %3656 = vmatpush1.bf16.msra.mxu0 %v2712
        %3657 = vmatprep.subr.bf16.mxu0 %v2705
        %3658 = vmatpush1.bf16.msra.mxu0 %v2704
        %3659 = vmatprep.subr.bf16.mxu0 %v2825
        %3660 = vmatpush2.bf16.msra.mxu0 %v2824
        %3661 = vmatprep.subr.bf16.mxu0 %v2817
        %3662 = vmatpush2.bf16.msra.mxu0 %v2816
        %3663 = vmatprep.subr.bf16.mxu0 %v2809
        %3664 = vmatpush2.bf16.msra.mxu0 %v2808
        %3665 = vmatprep.subr.bf16.mxu0 %v2801
        %3666 = vmatpush2.bf16.msra.mxu0 %v2800
        %3667 = vmatprep.subr.bf16.mxu0 %v2793
        %3668 = vmatpush2.bf16.msra.mxu0 %v2792
        %3669 = vmatprep.subr.bf16.mxu0 %v2785
        %3670 = vmatpush2.bf16.msra.mxu0 %v2784
        %3671 = vmatprep.subr.bf16.mxu0 %v2777
        %3672 = vmatpush2.bf16.msra.mxu0 %v2776
        %3673 = vmatprep.subr.bf16.mxu0 %v2769
        %3674 = vmatpush2.bf16.msra.mxu0 %v2768
        %3675 = vmatprep.mubr.bf16.mxu0 %v773
        %3676 = vmatmul.mubr.bf16.gmra.mxu0 %v772
        %v3677 = vpop.f32.mrf.mxu0
        %v3678 = vadd.f32 %v3635, %v3677
        %v3679 = vpop.f32.mrf.mxu0
        %v3680 = vadd.f32 %v3637, %v3679
        %v3681 = vpop.f32.mrf.mxu0
        %v3682 = vadd.f32 %v3639, %v3681
        %v3683 = vpop.f32.mrf.mxu0
        %v3684 = vadd.f32 %v3641, %v3683
        %3685 = vdwg.mxu0
        %3686 = vmatprep.subr.bf16.mxu0 %v2379
        %3687 = vmatpush1.bf16.msra.mxu0 %v2378
        %3688 = vmatprep.subr.bf16.mxu0 %v2371
        %3689 = vmatpush1.bf16.msra.mxu0 %v2370
        %3690 = vmatprep.subr.bf16.mxu0 %v2363
        %3691 = vmatpush1.bf16.msra.mxu0 %v2362
        %3692 = vmatprep.subr.bf16.mxu0 %v2355
        %3693 = vmatpush1.bf16.msra.mxu0 %v2354
        %3694 = vmatprep.subr.bf16.mxu0 %v2347
        %3695 = vmatpush1.bf16.msra.mxu0 %v2346
        %3696 = vmatprep.subr.bf16.mxu0 %v2339
        %3697 = vmatpush1.bf16.msra.mxu0 %v2338
        %3698 = vmatprep.subr.bf16.mxu0 %v2331
        %3699 = vmatpush1.bf16.msra.mxu0 %v2330
        %3700 = vmatprep.subr.bf16.mxu0 %v2323
        %3701 = vmatpush1.bf16.msra.mxu0 %v2322
        %3702 = vmatprep.subr.bf16.mxu0 %v2443
        %3703 = vmatpush2.bf16.msra.mxu0 %v2442
        %3704 = vmatprep.subr.bf16.mxu0 %v2435
        %3705 = vmatpush2.bf16.msra.mxu0 %v2434
        %3706 = vmatprep.subr.bf16.mxu0 %v2427
        %3707 = vmatpush2.bf16.msra.mxu0 %v2426
        %3708 = vmatprep.subr.bf16.mxu0 %v2419
        %3709 = vmatpush2.bf16.msra.mxu0 %v2418
        %3710 = vmatprep.subr.bf16.mxu0 %v2411
        %3711 = vmatpush2.bf16.msra.mxu0 %v2410
        %3712 = vmatprep.subr.bf16.mxu0 %v2403
        %3713 = vmatpush2.bf16.msra.mxu0 %v2402
        %3714 = vmatprep.subr.bf16.mxu0 %v2395
        %3715 = vmatpush2.bf16.msra.mxu0 %v2394
        %3716 = vmatprep.subr.bf16.mxu0 %v2387
        %3717 = vmatpush2.bf16.msra.mxu0 %v2386
        %3718 = vmatprep.mubr.bf16.mxu0 %v767
        %3719 = vmatmul.mubr.bf16.gmra.mxu0 %v766
        %v3720 = vpop.f32.mrf.mxu0
        %v3721 = vadd.f32 0.0, %v3720
        %v3722 = vpop.f32.mrf.mxu0
        %v3723 = vadd.f32 0.0, %v3722
        %v3724 = vpop.f32.mrf.mxu0
        %v3725 = vadd.f32 0.0, %v3724
        %v3726 = vpop.f32.mrf.mxu0
        %v3727 = vadd.f32 0.0, %v3726
        %3728 = vdwg.mxu0
        %3729 = vmatprep.subr.bf16.mxu0 %v2507
        %3730 = vmatpush1.bf16.msra.mxu0 %v2506
        %3731 = vmatprep.subr.bf16.mxu0 %v2499
        %3732 = vmatpush1.bf16.msra.mxu0 %v2498
        %3733 = vmatprep.subr.bf16.mxu0 %v2491
        %3734 = vmatpush1.bf16.msra.mxu0 %v2490
        %3735 = vmatprep.subr.bf16.mxu0 %v2483
        %3736 = vmatpush1.bf16.msra.mxu0 %v2482
        %3737 = vmatprep.subr.bf16.mxu0 %v2475
        %3738 = vmatpush1.bf16.msra.mxu0 %v2474
        %3739 = vmatprep.subr.bf16.mxu0 %v2467
        %3740 = vmatpush1.bf16.msra.mxu0 %v2466
        %3741 = vmatprep.subr.bf16.mxu0 %v2459
        %3742 = vmatpush1.bf16.msra.mxu0 %v2458
        %3743 = vmatprep.subr.bf16.mxu0 %v2451
        %3744 = vmatpush1.bf16.msra.mxu0 %v2450
        %3745 = vmatprep.subr.bf16.mxu0 %v2571
        %3746 = vmatpush2.bf16.msra.mxu0 %v2570
        %3747 = vmatprep.subr.bf16.mxu0 %v2563
        %3748 = vmatpush2.bf16.msra.mxu0 %v2562
        %3749 = vmatprep.subr.bf16.mxu0 %v2555
        %3750 = vmatpush2.bf16.msra.mxu0 %v2554
        %3751 = vmatprep.subr.bf16.mxu0 %v2547
        %3752 = vmatpush2.bf16.msra.mxu0 %v2546
        %3753 = vmatprep.subr.bf16.mxu0 %v2539
        %3754 = vmatpush2.bf16.msra.mxu0 %v2538
        %3755 = vmatprep.subr.bf16.mxu0 %v2531
        %3756 = vmatpush2.bf16.msra.mxu0 %v2530
        %3757 = vmatprep.subr.bf16.mxu0 %v2523
        %3758 = vmatpush2.bf16.msra.mxu0 %v2522
        %3759 = vmatprep.subr.bf16.mxu0 %v2515
        %3760 = vmatpush2.bf16.msra.mxu0 %v2514
        %3761 = vmatprep.mubr.bf16.mxu0 %v769
        %3762 = vmatmul.mubr.bf16.gmra.mxu0 %v768
        %v3763 = vpop.f32.mrf.mxu0
        %v3764 = vadd.f32 %v3721, %v3763
        %v3765 = vpop.f32.mrf.mxu0
        %v3766 = vadd.f32 %v3723, %v3765
        %v3767 = vpop.f32.mrf.mxu0
        %v3768 = vadd.f32 %v3725, %v3767
        %v3769 = vpop.f32.mrf.mxu0
        %v3770 = vadd.f32 %v3727, %v3769
        %3771 = vdwg.mxu0
        %3772 = vmatprep.subr.bf16.mxu0 %v2635
        %3773 = vmatpush1.bf16.msra.mxu0 %v2634
        %3774 = vmatprep.subr.bf16.mxu0 %v2627
        %3775 = vmatpush1.bf16.msra.mxu0 %v2626
        %3776 = vmatprep.subr.bf16.mxu0 %v2619
        %3777 = vmatpush1.bf16.msra.mxu0 %v2618
        %3778 = vmatprep.subr.bf16.mxu0 %v2611
        %3779 = vmatpush1.bf16.msra.mxu0 %v2610
        %3780 = vmatprep.subr.bf16.mxu0 %v2603
        %3781 = vmatpush1.bf16.msra.mxu0 %v2602
        %3782 = vmatprep.subr.bf16.mxu0 %v2595
        %3783 = vmatpush1.bf16.msra.mxu0 %v2594
        %3784 = vmatprep.subr.bf16.mxu0 %v2587
        %3785 = vmatpush1.bf16.msra.mxu0 %v2586
        %3786 = vmatprep.subr.bf16.mxu0 %v2579
        %3787 = vmatpush1.bf16.msra.mxu0 %v2578
        %3788 = vmatprep.subr.bf16.mxu0 %v2699
        %3789 = vmatpush2.bf16.msra.mxu0 %v2698
        %3790 = vmatprep.subr.bf16.mxu0 %v2691
        %3791 = vmatpush2.bf16.msra.mxu0 %v2690
        %3792 = vmatprep.subr.bf16.mxu0 %v2683
        %3793 = vmatpush2.bf16.msra.mxu0 %v2682
        %3794 = vmatprep.subr.bf16.mxu0 %v2675
        %3795 = vmatpush2.bf16.msra.mxu0 %v2674
        %3796 = vmatprep.subr.bf16.mxu0 %v2667
        %3797 = vmatpush2.bf16.msra.mxu0 %v2666
        %3798 = vmatprep.subr.bf16.mxu0 %v2659
        %3799 = vmatpush2.bf16.msra.mxu0 %v2658
        %3800 = vmatprep.subr.bf16.mxu0 %v2651
        %3801 = vmatpush2.bf16.msra.mxu0 %v2650
        %3802 = vmatprep.subr.bf16.mxu0 %v2643
        %3803 = vmatpush2.bf16.msra.mxu0 %v2642
        %3804 = vmatprep.mubr.bf16.mxu0 %v771
        %3805 = vmatmul.mubr.bf16.gmra.mxu0 %v770
        %v3806 = vpop.f32.mrf.mxu0
        %v3807 = vadd.f32 %v3764, %v3806
        %v3808 = vpop.f32.mrf.mxu0
        %v3809 = vadd.f32 %v3766, %v3808
        %v3810 = vpop.f32.mrf.mxu0
        %v3811 = vadd.f32 %v3768, %v3810
        %v3812 = vpop.f32.mrf.mxu0
        %v3813 = vadd.f32 %v3770, %v3812
        %3814 = vdwg.mxu0
        %3815 = vmatprep.subr.bf16.mxu0 %v2763
        %3816 = vmatpush1.bf16.msra.mxu0 %v2762
        %3817 = vmatprep.subr.bf16.mxu0 %v2755
        %3818 = vmatpush1.bf16.msra.mxu0 %v2754
        %3819 = vmatprep.subr.bf16.mxu0 %v2747
        %3820 = vmatpush1.bf16.msra.mxu0 %v2746
        %3821 = vmatprep.subr.bf16.mxu0 %v2739
        %3822 = vmatpush1.bf16.msra.mxu0 %v2738
        %3823 = vmatprep.subr.bf16.mxu0 %v2731
        %3824 = vmatpush1.bf16.msra.mxu0 %v2730
        %3825 = vmatprep.subr.bf16.mxu0 %v2723
        %3826 = vmatpush1.bf16.msra.mxu0 %v2722
        %3827 = vmatprep.subr.bf16.mxu0 %v2715
        %3828 = vmatpush1.bf16.msra.mxu0 %v2714
        %3829 = vmatprep.subr.bf16.mxu0 %v2707
        %3830 = vmatpush1.bf16.msra.mxu0 %v2706
        %3831 = vmatprep.subr.bf16.mxu0 %v2827
        %3832 = vmatpush2.bf16.msra.mxu0 %v2826
        %3833 = vmatprep.subr.bf16.mxu0 %v2819
        %3834 = vmatpush2.bf16.msra.mxu0 %v2818
        %3835 = vmatprep.subr.bf16.mxu0 %v2811
        %3836 = vmatpush2.bf16.msra.mxu0 %v2810
        %3837 = vmatprep.subr.bf16.mxu0 %v2803
        %3838 = vmatpush2.bf16.msra.mxu0 %v2802
        %3839 = vmatprep.subr.bf16.mxu0 %v2795
        %3840 = vmatpush2.bf16.msra.mxu0 %v2794
        %3841 = vmatprep.subr.bf16.mxu0 %v2787
        %3842 = vmatpush2.bf16.msra.mxu0 %v2786
        %3843 = vmatprep.subr.bf16.mxu0 %v2779
        %3844 = vmatpush2.bf16.msra.mxu0 %v2778
        %3845 = vmatprep.subr.bf16.mxu0 %v2771
        %3846 = vmatpush2.bf16.msra.mxu0 %v2770
        %3847 = vmatprep.mubr.bf16.mxu0 %v773
        %3848 = vmatmul.mubr.bf16.gmra.mxu0 %v772
        %v3849 = vpop.f32.mrf.mxu0
        %v3850 = vadd.f32 %v3807, %v3849
        %v3851 = vpop.f32.mrf.mxu0
        %v3852 = vadd.f32 %v3809, %v3851
        %v3853 = vpop.f32.mrf.mxu0
        %v3854 = vadd.f32 %v3811, %v3853
        %v3855 = vpop.f32.mrf.mxu0
        %v3856 = vadd.f32 %v3813, %v3855
        %3857 = vdwg.mxu0
        %3858 = vmatprep.subr.bf16.mxu0 %v2381
        %3859 = vmatpush1.bf16.msra.mxu0 %v2380
        %3860 = vmatprep.subr.bf16.mxu0 %v2373
        %3861 = vmatpush1.bf16.msra.mxu0 %v2372
        %3862 = vmatprep.subr.bf16.mxu0 %v2365
        %3863 = vmatpush1.bf16.msra.mxu0 %v2364
        %3864 = vmatprep.subr.bf16.mxu0 %v2357
        %3865 = vmatpush1.bf16.msra.mxu0 %v2356
        %3866 = vmatprep.subr.bf16.mxu0 %v2349
        %3867 = vmatpush1.bf16.msra.mxu0 %v2348
        %3868 = vmatprep.subr.bf16.mxu0 %v2341
        %3869 = vmatpush1.bf16.msra.mxu0 %v2340
        %3870 = vmatprep.subr.bf16.mxu0 %v2333
        %3871 = vmatpush1.bf16.msra.mxu0 %v2332
        %3872 = vmatprep.subr.bf16.mxu0 %v2325
        %3873 = vmatpush1.bf16.msra.mxu0 %v2324
        %3874 = vmatprep.subr.bf16.mxu0 %v2445
        %3875 = vmatpush2.bf16.msra.mxu0 %v2444
        %3876 = vmatprep.subr.bf16.mxu0 %v2437
        %3877 = vmatpush2.bf16.msra.mxu0 %v2436
        %3878 = vmatprep.subr.bf16.mxu0 %v2429
        %3879 = vmatpush2.bf16.msra.mxu0 %v2428
        %3880 = vmatprep.subr.bf16.mxu0 %v2421
        %3881 = vmatpush2.bf16.msra.mxu0 %v2420
        %3882 = vmatprep.subr.bf16.mxu0 %v2413
        %3883 = vmatpush2.bf16.msra.mxu0 %v2412
        %3884 = vmatprep.subr.bf16.mxu0 %v2405
        %3885 = vmatpush2.bf16.msra.mxu0 %v2404
        %3886 = vmatprep.subr.bf16.mxu0 %v2397
        %3887 = vmatpush2.bf16.msra.mxu0 %v2396
        %3888 = vmatprep.subr.bf16.mxu0 %v2389
        %3889 = vmatpush2.bf16.msra.mxu0 %v2388
        %3890 = vmatprep.mubr.bf16.mxu0 %v767
        %3891 = vmatmul.mubr.bf16.gmra.mxu0 %v766
        %v3892 = vpop.f32.mrf.mxu0
        %v3893 = vadd.f32 0.0, %v3892
        %v3894 = vpop.f32.mrf.mxu0
        %v3895 = vadd.f32 0.0, %v3894
        %v3896 = vpop.f32.mrf.mxu0
        %v3897 = vadd.f32 0.0, %v3896
        %v3898 = vpop.f32.mrf.mxu0
        %v3899 = vadd.f32 0.0, %v3898
        %3900 = vdwg.mxu0
        %3901 = vmatprep.subr.bf16.mxu0 %v2509
        %3902 = vmatpush1.bf16.msra.mxu0 %v2508
        %3903 = vmatprep.subr.bf16.mxu0 %v2501
        %3904 = vmatpush1.bf16.msra.mxu0 %v2500
        %3905 = vmatprep.subr.bf16.mxu0 %v2493
        %3906 = vmatpush1.bf16.msra.mxu0 %v2492
        %3907 = vmatprep.subr.bf16.mxu0 %v2485
        %3908 = vmatpush1.bf16.msra.mxu0 %v2484
        %3909 = vmatprep.subr.bf16.mxu0 %v2477
        %3910 = vmatpush1.bf16.msra.mxu0 %v2476
        %3911 = vmatprep.subr.bf16.mxu0 %v2469
        %3912 = vmatpush1.bf16.msra.mxu0 %v2468
        %3913 = vmatprep.subr.bf16.mxu0 %v2461
        %3914 = vmatpush1.bf16.msra.mxu0 %v2460
        %3915 = vmatprep.subr.bf16.mxu0 %v2453
        %3916 = vmatpush1.bf16.msra.mxu0 %v2452
        %3917 = vmatprep.subr.bf16.mxu0 %v2573
        %3918 = vmatpush2.bf16.msra.mxu0 %v2572
        %3919 = vmatprep.subr.bf16.mxu0 %v2565
        %3920 = vmatpush2.bf16.msra.mxu0 %v2564
        %3921 = vmatprep.subr.bf16.mxu0 %v2557
        %3922 = vmatpush2.bf16.msra.mxu0 %v2556
        %3923 = vmatprep.subr.bf16.mxu0 %v2549
        %3924 = vmatpush2.bf16.msra.mxu0 %v2548
        %3925 = vmatprep.subr.bf16.mxu0 %v2541
        %3926 = vmatpush2.bf16.msra.mxu0 %v2540
        %3927 = vmatprep.subr.bf16.mxu0 %v2533
        %3928 = vmatpush2.bf16.msra.mxu0 %v2532
        %3929 = vmatprep.subr.bf16.mxu0 %v2525
        %3930 = vmatpush2.bf16.msra.mxu0 %v2524
        %3931 = vmatprep.subr.bf16.mxu0 %v2517
        %3932 = vmatpush2.bf16.msra.mxu0 %v2516
        %3933 = vmatprep.mubr.bf16.mxu0 %v769
        %3934 = vmatmul.mubr.bf16.gmra.mxu0 %v768
        %v3935 = vpop.f32.mrf.mxu0
        %v3936 = vadd.f32 %v3893, %v3935
        %v3937 = vpop.f32.mrf.mxu0
        %v3938 = vadd.f32 %v3895, %v3937
        %v3939 = vpop.f32.mrf.mxu0
        %v3940 = vadd.f32 %v3897, %v3939
        %v3941 = vpop.f32.mrf.mxu0
        %v3942 = vadd.f32 %v3899, %v3941
        %3943 = vdwg.mxu0
        %3944 = vmatprep.subr.bf16.mxu0 %v2637
        %3945 = vmatpush1.bf16.msra.mxu0 %v2636
        %3946 = vmatprep.subr.bf16.mxu0 %v2629
        %3947 = vmatpush1.bf16.msra.mxu0 %v2628
        %3948 = vmatprep.subr.bf16.mxu0 %v2621
        %3949 = vmatpush1.bf16.msra.mxu0 %v2620
        %3950 = vmatprep.subr.bf16.mxu0 %v2613
        %3951 = vmatpush1.bf16.msra.mxu0 %v2612
        %3952 = vmatprep.subr.bf16.mxu0 %v2605
        %3953 = vmatpush1.bf16.msra.mxu0 %v2604
        %3954 = vmatprep.subr.bf16.mxu0 %v2597
        %3955 = vmatpush1.bf16.msra.mxu0 %v2596
        %3956 = vmatprep.subr.bf16.mxu0 %v2589
        %3957 = vmatpush1.bf16.msra.mxu0 %v2588
        %3958 = vmatprep.subr.bf16.mxu0 %v2581
        %3959 = vmatpush1.bf16.msra.mxu0 %v2580
        %3960 = vmatprep.subr.bf16.mxu0 %v2701
        %3961 = vmatpush2.bf16.msra.mxu0 %v2700
        %3962 = vmatprep.subr.bf16.mxu0 %v2693
        %3963 = vmatpush2.bf16.msra.mxu0 %v2692
        %3964 = vmatprep.subr.bf16.mxu0 %v2685
        %3965 = vmatpush2.bf16.msra.mxu0 %v2684
        %3966 = vmatprep.subr.bf16.mxu0 %v2677
        %3967 = vmatpush2.bf16.msra.mxu0 %v2676
        %3968 = vmatprep.subr.bf16.mxu0 %v2669
        %3969 = vmatpush2.bf16.msra.mxu0 %v2668
        %3970 = vmatprep.subr.bf16.mxu0 %v2661
        %3971 = vmatpush2.bf16.msra.mxu0 %v2660
        %3972 = vmatprep.subr.bf16.mxu0 %v2653
        %3973 = vmatpush2.bf16.msra.mxu0 %v2652
        %3974 = vmatprep.subr.bf16.mxu0 %v2645
        %3975 = vmatpush2.bf16.msra.mxu0 %v2644
        %3976 = vmatprep.mubr.bf16.mxu0 %v771
        %3977 = vmatmul.mubr.bf16.gmra.mxu0 %v770
        %v3978 = vpop.f32.mrf.mxu0
        %v3979 = vadd.f32 %v3936, %v3978
        %v3980 = vpop.f32.mrf.mxu0
        %v3981 = vadd.f32 %v3938, %v3980
        %v3982 = vpop.f32.mrf.mxu0
        %v3983 = vadd.f32 %v3940, %v3982
        %v3984 = vpop.f32.mrf.mxu0
        %v3985 = vadd.f32 %v3942, %v3984
        %3986 = vdwg.mxu0
        %3987 = vmatprep.subr.bf16.mxu0 %v2765
        %3988 = vmatpush1.bf16.msra.mxu0 %v2764
        %3989 = vmatprep.subr.bf16.mxu0 %v2757
        %3990 = vmatpush1.bf16.msra.mxu0 %v2756
        %3991 = vmatprep.subr.bf16.mxu0 %v2749
        %3992 = vmatpush1.bf16.msra.mxu0 %v2748
        %3993 = vmatprep.subr.bf16.mxu0 %v2741
        %3994 = vmatpush1.bf16.msra.mxu0 %v2740
        %3995 = vmatprep.subr.bf16.mxu0 %v2733
        %3996 = vmatpush1.bf16.msra.mxu0 %v2732
        %3997 = vmatprep.subr.bf16.mxu0 %v2725
        %3998 = vmatpush1.bf16.msra.mxu0 %v2724
        %3999 = vmatprep.subr.bf16.mxu0 %v2717
        %4000 = vmatpush1.bf16.msra.mxu0 %v2716
        %4001 = vmatprep.subr.bf16.mxu0 %v2709
        %4002 = vmatpush1.bf16.msra.mxu0 %v2708
        %4003 = vmatprep.subr.bf16.mxu0 %v2829
        %4004 = vmatpush2.bf16.msra.mxu0 %v2828
        %4005 = vmatprep.subr.bf16.mxu0 %v2821
        %4006 = vmatpush2.bf16.msra.mxu0 %v2820
        %4007 = vmatprep.subr.bf16.mxu0 %v2813
        %4008 = vmatpush2.bf16.msra.mxu0 %v2812
        %4009 = vmatprep.subr.bf16.mxu0 %v2805
        %4010 = vmatpush2.bf16.msra.mxu0 %v2804
        %4011 = vmatprep.subr.bf16.mxu0 %v2797
        %4012 = vmatpush2.bf16.msra.mxu0 %v2796
        %4013 = vmatprep.subr.bf16.mxu0 %v2789
        %4014 = vmatpush2.bf16.msra.mxu0 %v2788
        %4015 = vmatprep.subr.bf16.mxu0 %v2781
        %4016 = vmatpush2.bf16.msra.mxu0 %v2780
        %4017 = vmatprep.subr.bf16.mxu0 %v2773
        %4018 = vmatpush2.bf16.msra.mxu0 %v2772
        %4019 = vmatprep.mubr.bf16.mxu0 %v773
        %4020 = vmatmul.mubr.bf16.gmra.mxu0 %v772
        %v4021 = vpop.f32.mrf.mxu0
        %v4022 = vadd.f32 %v3979, %v4021
        %v4023 = vpop.f32.mrf.mxu0
        %v4024 = vadd.f32 %v3981, %v4023
        %v4025 = vpop.f32.mrf.mxu0
        %v4026 = vadd.f32 %v3983, %v4025
        %v4027 = vpop.f32.mrf.mxu0
        %v4028 = vadd.f32 %v3985, %v4027
        %4029 = vdwg.mxu0
        %v4030 = vmul.f32 %v3506, %v3506
        %v4031 = vmul.f32 %v3508, %v3508
        %v4032 = vmul.f32 %v3678, %v3678
        %v4033 = vmul.f32 %v3680, %v3680
        %v4034 = vmul.f32 %v3850, %v3850
        %v4035 = vmul.f32 %v3852, %v3852
        %v4036 = vmul.f32 %v4022, %v4022
        %v4037 = vmul.f32 %v4024, %v4024
        %v4038 = vmul.f32 %v3510, %v3510
        %v4039 = vmul.f32 %v3512, %v3512
        %v4040 = vmul.f32 %v3682, %v3682
        %v4041 = vmul.f32 %v3684, %v3684
        %v4042 = vmul.f32 %v3854, %v3854
        %v4043 = vmul.f32 %v3856, %v3856
        %v4044 = vmul.f32 %v4026, %v4026
        %v4045 = vmul.f32 %v4028, %v4028
        %v4046 = vadd.f32 %v4030, %v4034
        %v4047 = vadd.f32 %v4031, %v4035
        %v4048 = vadd.f32 %v4032, %v4036
        %v4049 = vadd.f32 %v4033, %v4037
        %v4050 = vadd.f32 %v4038, %v4042
        %v4051 = vadd.f32 %v4039, %v4043
        %v4052 = vadd.f32 %v4040, %v4044
        %v4053 = vadd.f32 %v4041, %v4045
        %v4054 = vrsqrt.pop %v4046
        %v4055 = vmul.f32 %v4046, %v4054
        %vm4056 = vcmp.eq.f32.partialorder %v4046, inf
        %v4057 = vsel %vm4056, %v4046, %v4055
        %vm4058 = vcmp.eq.f32.partialorder %v4046, 0.0
        %v4059 = vand.u32 %v4046, 2147483648
        %v4060 = vsel %vm4058, %v4059, %v4057
        %v4061 = vrsqrt.pop %v4047
        %v4062 = vmul.f32 %v4047, %v4061
        %vm4063 = vcmp.eq.f32.partialorder %v4047, inf
        %v4064 = vsel %vm4063, %v4047, %v4062
        %vm4065 = vcmp.eq.f32.partialorder %v4047, 0.0
        %v4066 = vand.u32 %v4047, 2147483648
        %v4067 = vsel %vm4065, %v4066, %v4064
        %v4068 = vrsqrt.pop %v4048
        %v4069 = vmul.f32 %v4048, %v4068
        %vm4070 = vcmp.eq.f32.partialorder %v4048, inf
        %v4071 = vsel %vm4070, %v4048, %v4069
        %vm4072 = vcmp.eq.f32.partialorder %v4048, 0.0
        %v4073 = vand.u32 %v4048, 2147483648
        %v4074 = vsel %vm4072, %v4073, %v4071
        %v4075 = vrsqrt.pop %v4049
        %v4076 = vmul.f32 %v4049, %v4075
        %vm4077 = vcmp.eq.f32.partialorder %v4049, inf
        %v4078 = vsel %vm4077, %v4049, %v4076
        %vm4079 = vcmp.eq.f32.partialorder %v4049, 0.0
        %v4080 = vand.u32 %v4049, 2147483648
        %v4081 = vsel %vm4079, %v4080, %v4078
        %v4082 = vrsqrt.pop %v4050
        %v4083 = vmul.f32 %v4050, %v4082
        %vm4084 = vcmp.eq.f32.partialorder %v4050, inf
        %v4085 = vsel %vm4084, %v4050, %v4083
        %vm4086 = vcmp.eq.f32.partialorder %v4050, 0.0
        %v4087 = vand.u32 %v4050, 2147483648
        %v4088 = vsel %vm4086, %v4087, %v4085
        %v4089 = vrsqrt.pop %v4051
        %v4090 = vmul.f32 %v4051, %v4089
        %vm4091 = vcmp.eq.f32.partialorder %v4051, inf
        %v4092 = vsel %vm4091, %v4051, %v4090
        %vm4093 = vcmp.eq.f32.partialorder %v4051, 0.0
        %v4094 = vand.u32 %v4051, 2147483648
        %v4095 = vsel %vm4093, %v4094, %v4092
        %v4096 = vrsqrt.pop %v4052
        %v4097 = vmul.f32 %v4052, %v4096
        %vm4098 = vcmp.eq.f32.partialorder %v4052, inf
        %v4099 = vsel %vm4098, %v4052, %v4097
        %vm4100 = vcmp.eq.f32.partialorder %v4052, 0.0
        %v4101 = vand.u32 %v4052, 2147483648
        %v4102 = vsel %vm4100, %v4101, %v4099
        %v4103 = vrsqrt.pop %v4053
        %v4104 = vmul.f32 %v4053, %v4103
        %vm4105 = vcmp.eq.f32.partialorder %v4053, inf
        %v4106 = vsel %vm4105, %v4053, %v4104
        %vm4107 = vcmp.eq.f32.partialorder %v4053, 0.0
        %v4108 = vand.u32 %v4053, 2147483648
        %v4109 = vsel %vm4107, %v4108, %v4106
        %v4110 = vpack.c.bf16 %v4088, %v4060
        %v4111 = vpack.c.bf16 %v4095, %v4067
        %v4112 = vpack.c.bf16 %v4102, %v4074
        %v4113 = vpack.c.bf16 %v4109, %v4081
        %v4114 = vld [vmem:[#allocation7] sm:$0xf]
        %v4115 = vld [vmem:[#allocation7 + $0x4] sm:$0xf]
        %v4116 = vld [vmem:[#allocation7 + $0x8] sm:$0xf]
        %v4117 = vld [vmem:[#allocation7 + $0xc] sm:$0xf]
        %v4118 = vld [vmem:[#allocation7 + $0x10] sm:$0xf]
        %v4119 = vld [vmem:[#allocation7 + $0x14] sm:$0xf]
        %v4120 = vld [vmem:[#allocation7 + $0x18] sm:$0xf]
        %v4121 = vld [vmem:[#allocation7 + $0x1c] sm:$0xf]
        %v4122 = vld [vmem:[#allocation7 + $0x20] sm:$0xf]
        %v4123 = vld [vmem:[#allocation7 + $0x24] sm:$0xf]
        %v4124 = vld [vmem:[#allocation7 + $0x28] sm:$0xf]
        %v4125 = vld [vmem:[#allocation7 + $0x2c] sm:$0xf]
        %v4126 = vld [vmem:[#allocation7 + $0x30] sm:$0xf]
        %v4127 = vld [vmem:[#allocation7 + $0x34] sm:$0xf]
        %v4128 = vld [vmem:[#allocation7 + $0x38] sm:$0xf]
        %v4129 = vld [vmem:[#allocation7 + $0x3c] sm:$0xf]
        %v4130 = vld [vmem:[#allocation7 + $0x40] sm:$0xf]
        %v4131 = vld [vmem:[#allocation7 + $0x44] sm:$0xf]
        %v4132 = vld [vmem:[#allocation7 + $0x48] sm:$0xf]
        %v4133 = vld [vmem:[#allocation7 + $0x4c] sm:$0xf]
        %v4134 = vld [vmem:[#allocation7 + $0x50] sm:$0xf]
        %v4135 = vld [vmem:[#allocation7 + $0x54] sm:$0xf]
        %v4136 = vld [vmem:[#allocation7 + $0x58] sm:$0xf]
        %v4137 = vld [vmem:[#allocation7 + $0x5c] sm:$0xf]
        %v4138 = vld [vmem:[#allocation7 + $0x60] sm:$0xf]
        %v4139 = vld [vmem:[#allocation7 + $0x64] sm:$0xf]
        %v4140 = vld [vmem:[#allocation7 + $0x68] sm:$0xf]
        %v4141 = vld [vmem:[#allocation7 + $0x6c] sm:$0xf]
        %v4142 = vld [vmem:[#allocation7 + $0x70] sm:$0xf]
        %v4143 = vld [vmem:[#allocation7 + $0x74] sm:$0xf]
        %v4144 = vld [vmem:[#allocation7 + $0x78] sm:$0xf]
        %v4145 = vld [vmem:[#allocation7 + $0x7c] sm:$0xf]
        %v4146 = vld [vmem:[#allocation7 + $0x80] sm:$0xf]
        %v4147 = vld [vmem:[#allocation7 + $0x84] sm:$0xf]
        %v4148 = vld [vmem:[#allocation7 + $0x88] sm:$0xf]
        %v4149 = vld [vmem:[#allocation7 + $0x8c] sm:$0xf]
        %v4150 = vld [vmem:[#allocation7 + $0x90] sm:$0xf]
        %v4151 = vld [vmem:[#allocation7 + $0x94] sm:$0xf]
        %v4152 = vld [vmem:[#allocation7 + $0x98] sm:$0xf]
        %v4153 = vld [vmem:[#allocation7 + $0x9c] sm:$0xf]
        %v4154 = vld [vmem:[#allocation7 + $0xa0] sm:$0xf]
        %v4155 = vld [vmem:[#allocation7 + $0xa4] sm:$0xf]
        %v4156 = vld [vmem:[#allocation7 + $0xa8] sm:$0xf]
        %v4157 = vld [vmem:[#allocation7 + $0xac] sm:$0xf]
        %v4158 = vld [vmem:[#allocation7 + $0xb0] sm:$0xf]
        %v4159 = vld [vmem:[#allocation7 + $0xb4] sm:$0xf]
        %v4160 = vld [vmem:[#allocation7 + $0xb8] sm:$0xf]
        %v4161 = vld [vmem:[#allocation7 + $0xbc] sm:$0xf]
        %v4162 = vld [vmem:[#allocation7 + $0xc0] sm:$0xf]
        %v4163 = vld [vmem:[#allocation7 + $0xc4] sm:$0xf]
        %v4164 = vld [vmem:[#allocation7 + $0xc8] sm:$0xf]
        %v4165 = vld [vmem:[#allocation7 + $0xcc] sm:$0xf]
        %v4166 = vld [vmem:[#allocation7 + $0xd0] sm:$0xf]
        %v4167 = vld [vmem:[#allocation7 + $0xd4] sm:$0xf]
        %v4168 = vld [vmem:[#allocation7 + $0xd8] sm:$0xf]
        %v4169 = vld [vmem:[#allocation7 + $0xdc] sm:$0xf]
        %v4170 = vld [vmem:[#allocation7 + $0xe0] sm:$0xf]
        %v4171 = vld [vmem:[#allocation7 + $0xe4] sm:$0xf]
        %v4172 = vld [vmem:[#allocation7 + $0xe8] sm:$0xf]
        %v4173 = vld [vmem:[#allocation7 + $0xec] sm:$0xf]
        %v4174 = vld [vmem:[#allocation7 + $0xf0] sm:$0xf]
        %v4175 = vld [vmem:[#allocation7 + $0xf4] sm:$0xf]
        %v4176 = vld [vmem:[#allocation7 + $0xf8] sm:$0xf]
        %v4177 = vld [vmem:[#allocation7 + $0xfc] sm:$0xf]
        %v4242 = vunpack.c.l.b16 %v4114
        %v4243 = vunpack.c.l.b16 %v4115
        %v4244 = vunpack.c.l.b16 %v4116
        %v4245 = vunpack.c.l.b16 %v4117
        %v4246 = vunpack.c.l.b16 %v4118
        %v4247 = vunpack.c.l.b16 %v4119
        %v4248 = vunpack.c.l.b16 %v4120
        %v4249 = vunpack.c.l.b16 %v4121
        %v4250 = vunpack.c.l.b16 %v4122
        %v4251 = vunpack.c.l.b16 %v4123
        %v4252 = vunpack.c.l.b16 %v4124
        %v4253 = vunpack.c.l.b16 %v4125
        %v4254 = vunpack.c.l.b16 %v4126
        %v4255 = vunpack.c.l.b16 %v4127
        %v4256 = vunpack.c.l.b16 %v4128
        %v4257 = vunpack.c.l.b16 %v4129
        %v4258 = vunpack.c.l.b16 %v4130
        %v4259 = vunpack.c.l.b16 %v4131
        %v4260 = vunpack.c.l.b16 %v4132
        %v4261 = vunpack.c.l.b16 %v4133
        %v4262 = vunpack.c.l.b16 %v4134
        %v4263 = vunpack.c.l.b16 %v4135
        %v4264 = vunpack.c.l.b16 %v4136
        %v4265 = vunpack.c.l.b16 %v4137
        %v4266 = vunpack.c.l.b16 %v4138
        %v4267 = vunpack.c.l.b16 %v4139
        %v4268 = vunpack.c.l.b16 %v4140
        %v4269 = vunpack.c.l.b16 %v4141
        %v4270 = vunpack.c.l.b16 %v4142
        %v4271 = vunpack.c.l.b16 %v4143
        %v4272 = vunpack.c.l.b16 %v4144
        %v4273 = vunpack.c.l.b16 %v4145
        %v4274 = vunpack.c.l.b16 %v4146
        %v4275 = vunpack.c.l.b16 %v4147
        %v4276 = vunpack.c.l.b16 %v4148
        %v4277 = vunpack.c.l.b16 %v4149
        %v4278 = vunpack.c.l.b16 %v4150
        %v4279 = vunpack.c.l.b16 %v4151
        %v4280 = vunpack.c.l.b16 %v4152
        %v4281 = vunpack.c.l.b16 %v4153
        %v4282 = vunpack.c.l.b16 %v4154
        %v4283 = vunpack.c.l.b16 %v4155
        %v4284 = vunpack.c.l.b16 %v4156
        %v4285 = vunpack.c.l.b16 %v4157
        %v4286 = vunpack.c.l.b16 %v4158
        %v4287 = vunpack.c.l.b16 %v4159
        %v4288 = vunpack.c.l.b16 %v4160
        %v4289 = vunpack.c.l.b16 %v4161
        %v4290 = vunpack.c.l.b16 %v4162
        %v4291 = vunpack.c.l.b16 %v4163
        %v4292 = vunpack.c.l.b16 %v4164
        %v4293 = vunpack.c.l.b16 %v4165
        %v4294 = vunpack.c.l.b16 %v4166
        %v4295 = vunpack.c.l.b16 %v4167
        %v4296 = vunpack.c.l.b16 %v4168
        %v4297 = vunpack.c.l.b16 %v4169
        %v4298 = vunpack.c.l.b16 %v4170
        %v4299 = vunpack.c.l.b16 %v4171
        %v4300 = vunpack.c.l.b16 %v4172
        %v4301 = vunpack.c.l.b16 %v4173
        %v4302 = vunpack.c.l.b16 %v4174
        %v4303 = vunpack.c.l.b16 %v4175
        %v4304 = vunpack.c.l.b16 %v4176
        %v4305 = vunpack.c.l.b16 %v4177
        %v4306 = vpack.c.b16 %v4243, %v4242
        %v4307 = vpack.c.b16 %v4245, %v4244
        %v4308 = vpack.c.b16 %v4247, %v4246
        %v4309 = vpack.c.b16 %v4249, %v4248
        %v4310 = vpack.c.b16 %v4251, %v4250
        %v4311 = vpack.c.b16 %v4253, %v4252
        %v4312 = vpack.c.b16 %v4255, %v4254
        %v4313 = vpack.c.b16 %v4257, %v4256
        %v4314 = vpack.c.b16 %v4259, %v4258
        %v4315 = vpack.c.b16 %v4261, %v4260
        %v4316 = vpack.c.b16 %v4263, %v4262
        %v4317 = vpack.c.b16 %v4265, %v4264
        %v4318 = vpack.c.b16 %v4267, %v4266
        %v4319 = vpack.c.b16 %v4269, %v4268
        %v4320 = vpack.c.b16 %v4271, %v4270
        %v4321 = vpack.c.b16 %v4273, %v4272
        %v4322 = vpack.c.b16 %v4275, %v4274
        %v4323 = vpack.c.b16 %v4277, %v4276
        %v4324 = vpack.c.b16 %v4279, %v4278
        %v4325 = vpack.c.b16 %v4281, %v4280
        %v4326 = vpack.c.b16 %v4283, %v4282
        %v4327 = vpack.c.b16 %v4285, %v4284
        %v4328 = vpack.c.b16 %v4287, %v4286
        %v4329 = vpack.c.b16 %v4289, %v4288
        %v4330 = vpack.c.b16 %v4291, %v4290
        %v4331 = vpack.c.b16 %v4293, %v4292
        %v4332 = vpack.c.b16 %v4295, %v4294
        %v4333 = vpack.c.b16 %v4297, %v4296
        %v4334 = vpack.c.b16 %v4299, %v4298
        %v4335 = vpack.c.b16 %v4301, %v4300
        %v4336 = vpack.c.b16 %v4303, %v4302
        %v4337 = vpack.c.b16 %v4305, %v4304
        %4370 = vmatprep.subr.bf16.mxu0 0
        %4371 = vmatpush1.bf16.msra.mxu0 %v4313
        %4372 = vmatprep.subr.bf16.mxu0 0
        %4373 = vmatpush1.bf16.msra.mxu0 %v4312
        %4374 = vmatprep.subr.bf16.mxu0 0
        %4375 = vmatpush1.bf16.msra.mxu0 %v4311
        %4376 = vmatprep.subr.bf16.mxu0 0
        %4377 = vmatpush1.bf16.msra.mxu0 %v4310
        %4378 = vmatprep.subr.bf16.mxu0 0
        %4379 = vmatpush1.bf16.msra.mxu0 %v4309
        %4380 = vmatprep.subr.bf16.mxu0 0
        %4381 = vmatpush1.bf16.msra.mxu0 %v4308
        %4382 = vmatprep.subr.bf16.mxu0 0
        %4383 = vmatpush1.bf16.msra.mxu0 %v4307
        %4384 = vmatprep.subr.bf16.mxu0 0
        %4385 = vmatpush1.bf16.msra.mxu0 %v4306
        %4386 = vmatprep.subr.bf16.mxu0 0
        %4387 = vmatpush2.bf16.msra.mxu0 %v4321
        %4388 = vmatprep.subr.bf16.mxu0 0
        %4389 = vmatpush2.bf16.msra.mxu0 %v4320
        %4390 = vmatprep.subr.bf16.mxu0 0
        %4391 = vmatpush2.bf16.msra.mxu0 %v4319
        %4392 = vmatprep.subr.bf16.mxu0 0
        %4393 = vmatpush2.bf16.msra.mxu0 %v4318
        %4394 = vmatprep.subr.bf16.mxu0 0
        %4395 = vmatpush2.bf16.msra.mxu0 %v4317
        %4396 = vmatprep.subr.bf16.mxu0 0
        %4397 = vmatpush2.bf16.msra.mxu0 %v4316
        %4398 = vmatprep.subr.bf16.mxu0 0
        %4399 = vmatpush2.bf16.msra.mxu0 %v4315
        %4400 = vmatprep.subr.bf16.mxu0 0
        %4401 = vmatpush2.bf16.msra.mxu0 %v4314
        %4402 = vmatprep.mubr.bf16.mxu0 %v4111
        %4403 = vmatmul.mubr.bf16.gmra.mxu0 %v4110
        %v4404 = vpop.f32.mrf.mxu0
        %v4405 = vadd.f32 0.0, %v4404
        %v4406 = vpop.f32.mrf.mxu0
        %v4407 = vpop.f32.mrf.mxu0
        %v4408 = vadd.f32 0.0, %v4407
        %v4409 = vpop.f32.mrf.mxu0
        %4410 = vdwg.mxu0
        %4411 = vmatprep.subr.bf16.mxu0 0
        %4412 = vmatpush1.bf16.msra.mxu0 %v4329
        %4413 = vmatprep.subr.bf16.mxu0 0
        %4414 = vmatpush1.bf16.msra.mxu0 %v4328
        %4415 = vmatprep.subr.bf16.mxu0 0
        %4416 = vmatpush1.bf16.msra.mxu0 %v4327
        %4417 = vmatprep.subr.bf16.mxu0 0
        %4418 = vmatpush1.bf16.msra.mxu0 %v4326
        %4419 = vmatprep.subr.bf16.mxu0 0
        %4420 = vmatpush1.bf16.msra.mxu0 %v4325
        %4421 = vmatprep.subr.bf16.mxu0 0
        %4422 = vmatpush1.bf16.msra.mxu0 %v4324
        %4423 = vmatprep.subr.bf16.mxu0 0
        %4424 = vmatpush1.bf16.msra.mxu0 %v4323
        %4425 = vmatprep.subr.bf16.mxu0 0
        %4426 = vmatpush1.bf16.msra.mxu0 %v4322
        %4427 = vmatprep.subr.bf16.mxu0 0
        %4428 = vmatpush2.bf16.msra.mxu0 %v4337
        %4429 = vmatprep.subr.bf16.mxu0 0
        %4430 = vmatpush2.bf16.msra.mxu0 %v4336
        %4431 = vmatprep.subr.bf16.mxu0 0
        %4432 = vmatpush2.bf16.msra.mxu0 %v4335
        %4433 = vmatprep.subr.bf16.mxu0 0
        %4434 = vmatpush2.bf16.msra.mxu0 %v4334
        %4435 = vmatprep.subr.bf16.mxu0 0
        %4436 = vmatpush2.bf16.msra.mxu0 %v4333
        %4437 = vmatprep.subr.bf16.mxu0 0
        %4438 = vmatpush2.bf16.msra.mxu0 %v4332
        %4439 = vmatprep.subr.bf16.mxu0 0
        %4440 = vmatpush2.bf16.msra.mxu0 %v4331
        %4441 = vmatprep.subr.bf16.mxu0 0
        %4442 = vmatpush2.bf16.msra.mxu0 %v4330
        %4443 = vmatprep.mubr.bf16.mxu0 %v4113
        %4444 = vmatmul.mubr.bf16.gmra.mxu0 %v4112
        %v4445 = vpop.f32.mrf.mxu0
        %v4446 = vadd.f32 %v4405, %v4445
        %v4447 = vpop.f32.mrf.mxu0
        %v4448 = vpop.f32.mrf.mxu0
        %v4449 = vadd.f32 %v4408, %v4448
        %v4450 = vpop.f32.mrf.mxu0
        %4451 = vdwg.mxu0
        %v4452 = vmax.f32 %v4446, 1e-05
        %v4453 = vmax.f32 %v4449, 1e-05
        %v4454 = vlog2.pop %v4452
        %v4455 = vmul.f32 %v4454, 0.6931472
        %v4456 = vlog2.pop %v4453
        %v4457 = vmul.f32 %v4456, 0.6931472
        %v4458 = vmul.f32 %v4455, 0.4342945
        %v4459 = vmul.f32 %v4457, 0.4342945
        %4460 = vst [vmem:[%s218] sm:$0xff] %v4458
        %4461 = vst [vmem:[%s218 + $0x8] sm:$0xff] %v4459
        %s4462 = sand.u32 %s97, 1
        %s4463 = scalar_lea.sflag [#allocation4], %s4462
        %s4464 = sand.u32 %s97, 1
        %s4465 = smul.addr %s4464, 16
        %s4466 = scalar_lea.vmem [#allocation8], %s4465
        // Predicated region
        $region45: #{tpu_custom_call.1} parent=31 // pred_check
          %p4467 = pneg %p107
        $region46: #{tpu_custom_call.1} parent=31 // pred_check_branch
          %4469 = sbr.rel (%p4467) target = $region48
        $region47: #{tpu_custom_call.1} parent=31 // pred_region
          %s4470 = smul.u32 2, %s21
          %s4472 = ssub.s32 256, 256
          %4473 = vsyncadd %s4463, %s4472
          %s4474 = smul.addr %s4470, 128
          %s4475 = scalar_lea.hbm %s3, %s4474
          %s4476 = sshll.u32 %s4466, 4
          %s4477 = int_to_ptr.vmem [resolvable:$true] %s4476
          %4482 = dma.vmem_to_hbm [thread:$0]  %s4477, 256, %s4475, %s4463, 128, 128, 8
        $region48: #{tpu_custom_call.1} parent=31 // pred_fallthru
          _
      $region32: #{tpu_custom_call.1} parent=5 // pred_fallthru
        _
      %p4483 = scmp.le.s32.totalorder 2, %s16
      // Predicated region
      $region49: #{tpu_custom_call.1} parent=5 // pred_check
        %p4484 = pneg %p4483
      $region50: #{tpu_custom_call.1} parent=5 // pred_check_branch
        %4486 = sbr.rel (%p4484) target = $region52
      $region51: #{tpu_custom_call.1} parent=5 // pred_region
        %s4487 = ssub.s32 %s16, 2
        // Predicated region
        $region53: #{tpu_custom_call.1} parent=51 // pred_check
          %p4488 = pneg %p113
        $region54: #{tpu_custom_call.1} parent=51 // pred_check_branch
          %4490 = sbr.rel (%p4488) target = $region56
        $region55: #{tpu_custom_call.1} parent=51 // pred_region
          %s4491 = sand.u32 %s98, 1
          %s4492 = scalar_lea.sflag [#allocation4], %s4491
          %s4493 = sand.u32 %s98, 1
          %s4494 = smul.addr %s4493, 16
          %s4495 = scalar_lea.vmem [#allocation8], %s4494
          %4496 = dma.done %s4492, 256
        $region56: #{tpu_custom_call.1} parent=51 // pred_fallthru
          _
      $region52: #{tpu_custom_call.1} parent=5 // pred_fallthru
        _
    $region6: #{tpu_custom_call.1} parent=1 // loop_footer
      %s20 = sadd.s32 1, %s16
    $region7: #{tpu_custom_call.1} parent=1 // loop_footer_branch
      %15 = sbr.rel target = $region3
    $region8: #{tpu_custom_call.1} parent=1 // loop_exit
      _
    %4497 = vsyncpa [#allocation3], 1
    %s4498 = scalar_lea.sflag [#allocation3], 1
    %4499 = vsyncpa %s4498, 1
    %4500 = vsyncpa [#allocation6], 1
    %4501 = vsyncpa [#allocation4], 1
    %s4502 = scalar_lea.sflag [#allocation4], 1
    %4503 = vsyncpa %s4502, 1

</llo_original>
